<compile_context>
chip_gen: v6e
topology: v6e:2x2x1
jax: 0.10.0
libtpu: 0.0.40
codegen_flags: <defaults>
</compile_context>

<pallas_src>
import jax
import jax.numpy as jnp
import numpy as np
from jax.experimental import pallas as pl
from jax.experimental.pallas import tpu as pltpu

LN_EPS = 1e-5          # torch.nn.LayerNorm default eps
NEG_SLOPE = 0.05       # nn.LeakyReLU(negative_slope=0.05)
NEG_BIG = -1e30        # only used by the pure-JAX reference


def _layernorm(x, gamma, beta):
    mu = jnp.mean(x, axis=-1, keepdims=True)
    var = jnp.mean((x - mu) * (x - mu), axis=-1, keepdims=True)
    return (x - mu) * jax.lax.rsqrt(var + LN_EPS) * gamma + beta


# ----------------------------- fused Pallas kernel ---------------------------

def _make_fused_kernel(num_layers):
    n_fixed = 14  # number of non-encoder input refs

    def kernel(*refs):
        (adj_ref, x_ref,
         w01, b01, t2_w, t2_b,
         gcn_w, gcn_b, gcn_g, gcn_be,
         gate_w, gate_b, out_w, out_b) = refs[:n_fixed]
        layer_refs = refs[n_fixed:n_fixed + 6 * num_layers]
        score_ref, z_ref = refs[n_fixed + 6 * num_layers:]

        adj = adj_ref[0]                        # (N, N), loaded once, reused everywhere

        # ---- front MLP: (in_linear . trans1) pre-folded -> LeakyReLU -> trans2 ----
        h = jnp.dot(x_ref[0], w01[...], preferred_element_type=jnp.float32) + b01[...]
        h = jnp.where(h > 0, h, NEG_SLOPE * h)
        h = jnp.dot(h, t2_w[...], preferred_element_type=jnp.float32) + t2_b[...]

        # ---- loc_h = LayerNorm(GraphConv(norm='both')(g, h)) - h ----
        # degree normalisation folded in-kernel (no dense adjn in XLA)
        indeg = jnp.maximum(jnp.sum(adj, axis=1, keepdims=True), 1.0)    # (N,1)
        outdeg = jnp.maximum(jnp.sum(adj, axis=0, keepdims=True), 1.0)   # (1,N)
        adjn = jax.lax.rsqrt(indeg) * adj * jax.lax.rsqrt(outdeg)
        agg = jnp.dot(adjn, h, preferred_element_type=jnp.float32)
        gcn = jnp.dot(agg, gcn_w[...], preferred_element_type=jnp.float32) + gcn_b[...]
        loc_h = _layernorm(gcn, gcn_g[...], gcn_be[...]) - h

        # ---- glo_h = GlobalAttentionPooling(gate_nn)(g, h) - h  (single graph) ----
        gate = jnp.dot(h, gate_w[...], preferred_element_type=jnp.float32) + gate_b[...]  # (N,1)
        gate = gate - jnp.max(gate, axis=0, keepdims=True)
        e = jnp.exp(gate)
        a = e / jnp.sum(e, axis=0, keepdims=True)           # exact softmax denominator
        pool = jnp.sum(a * h, axis=0, keepdims=True)                                      # (1,H)
        glo_h = pool - h

        # Z = concat([loc_h, glo_h], 1): build in registers, write the lane-dense
        # (N, 2H) slab exactly once, and keep using the register value (no reload).
        Z = jnp.concatenate([loc_h, glo_h], axis=-1)                                      # (N, 2H)
        z_ref[0] = Z
        henc = Z

        # ---- Encoder: num_layers x (SAGEConv 'pool' + LayerNorm + ReLU) ----
        for l in range(num_layers):
            wp, bp, wsn, bs, g, be = layer_refs[6 * l:6 * l + 6]
            hp = jnp.maximum(
                jnp.dot(henc, wp[...], preferred_element_type=jnp.float32) + bp[...], 0.0)
            # Max over in-neighbours, vectorized.  hp >= 0 (ReLU) and DGL fills
            # zero-in-degree destinations with 0, so max_s adj[d,s]*hp[s,:] (with a
            # floor of 0 from the zero entries) is exactly equivalent to the masked
            # NEG_BIG max + clamp.  (Relies on the fc_pool ReLU — do not remove it.)
            neigh = jnp.max(adj[:, :, None] * hp[None, :, :], axis=1)                     # (N, 2H)
            # fc_self + fc_neigh fused into one stacked matmul: [henc | neigh] @ [[ws],[wn]]
            cat = jnp.concatenate([henc, neigh], axis=-1)                                 # (N, 4H)
            rst = jnp.dot(cat, wsn[...], preferred_element_type=jnp.float32) + bs[...]
            henc = jnp.maximum(_layernorm(rst, g[...], be[...]), 0.0)
            # TODO(synk): training-mode F.dropout (RNG mask) not implemented; model is eval().

        score_ref[0] = (jnp.dot(henc, out_w[...], preferred_element_type=jnp.float32)
                        + out_b[...])

    return kernel


def premodel_forward(params, adj, x):
    """adj: (G, N, N) dense {0,1} adjacency (dst, src).  x: (G, N, in_feat)."""
    G, n, in_feat = x.shape
    hidden = params["gcn_w"].shape[0]
    out_size = params["out_w"].shape[1]
    num_layers = len(params["enc"])

    # Pre-fold in_linear . trans_linear_1 (no nonlinearity in between).
    w01 = jnp.dot(params["in_w"], params["t1_w"])                       # (in_feat, H)
    b01 = jnp.dot(params["in_b"], params["t1_w"]) + params["t1_b"]      # (1, H)

    weights = [w01, b01, params["t2_w"], params["t2_b"],
               params["gcn_w"], params["gcn_b"], params["gcn_g"], params["gcn_be"],
               params["gate_w"], params["gate_b"], params["out_w"], params["out_b"]]
    for lp in params["enc"]:
        wsn = jnp.concatenate([lp["ws"], lp["wn"]], axis=0)             # stacked (4H, 2H)
        weights += [lp["wp"], lp["bp"], wsn, lp["bs"], lp["g"], lp["be"]]

    def graph_spec(shape):
        # per-graph (1, *shape) block, advancing along the graph grid axis
        return pl.BlockSpec((1,) + shape, lambda g, _r=len(shape): (g,) + (0,) * _r)

    def weight_spec(w):
        # constant index_map -> weight stays resident in VMEM across grid steps
        return pl.BlockSpec(w.shape, lambda g, _nz=(0,) * w.ndim: _nz)

    in_specs = ([graph_spec((n, n)), graph_spec((n, in_feat))]
                + [weight_spec(w) for w in weights])
    out_specs = (graph_spec((n, out_size)), graph_spec((n, 2 * hidden)))

    kernel = _make_fused_kernel(num_layers)
    score, z = pl.pallas_call(
        kernel,
        grid=(G,),
        out_shape=(jax.ShapeDtypeStruct((G, n, out_size), jnp.float32),
                   jax.ShapeDtypeStruct((G, n, 2 * hidden), jnp.float32)),
        in_specs=in_specs,
        out_specs=out_specs,
        compiler_params=pltpu.CompilerParams(
            dimension_semantics=("parallel",)),
    )(adj, x, *weights)
    return score, z


# ------------------------- pure-JAX reference check -------------------------

def premodel_reference_single(params, adj, x):
    h = jnp.dot(x, params["in_w"]) + params["in_b"]
    h = jnp.dot(h, params["t1_w"]) + params["t1_b"]
    h = jnp.where(h > 0, h, NEG_SLOPE * h)
    h = jnp.dot(h, params["t2_w"]) + params["t2_b"]

    indeg = jnp.maximum(jnp.sum(adj, axis=1), 1.0)
    outdeg = jnp.maximum(jnp.sum(adj, axis=0), 1.0)
    adjn = (1.0 / jnp.sqrt(indeg))[:, None] * adj * (1.0 / jnp.sqrt(outdeg))[None, :]
    gcn = jnp.dot(jnp.dot(adjn, h), params["gcn_w"]) + params["gcn_b"]
    loc_h = _layernorm(gcn, params["gcn_g"], params["gcn_be"]) - h

    gate = jnp.dot(h, params["gate_w"]) + params["gate_b"]
    a = jax.nn.softmax(gate, axis=0)
    pool = jnp.sum(a * h, axis=0, keepdims=True)
    glo_h = pool - h

    Z = jnp.concatenate([loc_h, glo_h], axis=1)
    henc = Z
    for lp in params["enc"]:
        hp = jax.nn.relu(jnp.dot(henc, lp["wp"]) + lp["bp"])
        masked = jnp.where(adj[:, :, None] > 0, hp[None, :, :], NEG_BIG)
        neigh = jnp.maximum(jnp.max(masked, axis=1), 0.0)
        rst = jnp.dot(henc, lp["ws"]) + lp["bs"] + jnp.dot(neigh, lp["wn"])
        henc = jax.nn.relu(_layernorm(rst, lp["g"], lp["be"]))
    score = jnp.dot(henc, params["out_w"]) + params["out_b"]
    return score, Z


def premodel_reference(params, adj, x):
    scores, zs = [], []
    for g in range(x.shape[0]):
        s, z = premodel_reference_single(params, adj[g], x[g])
        scores.append(s)
        zs.append(z)
    return jnp.stack(scores), jnp.stack(zs)


# ------------------------------ parameter init ------------------------------

def _linear_init(key, fan_in, fan_out):
    kw, kb = jax.random.split(key)
    bound = 1.0 / np.sqrt(fan_in)
    # Stored as (in, out) == torch Linear weight transposed; applied as x @ W + b.
    w = jax.random.uniform(kw, (fan_in, fan_out), jnp.float32, -bound, bound)
    b = jax.random.uniform(kb, (1, fan_out), jnp.float32, -bound, bound)
    return w, b


def init_params(key, in_feat, hidden, num_layers, out_size):
    keys = jax.random.split(key, 8 + num_layers)
    in_w, in_b = _linear_init(keys[0], in_feat, hidden)      # in_linear['tsocial']: Linear(10, H)
    t1_w, t1_b = _linear_init(keys[1], hidden, hidden)       # trans_linear_1: Linear(64, 64)
    t2_w, t2_b = _linear_init(keys[2], hidden, hidden)       # trans_linear_2: Linear(64, 64)
    gcn_w, gcn_b = _linear_init(keys[3], hidden, hidden)     # GraphConv weight/bias
    gcn_g = 1.0 + 0.1 * jax.random.normal(keys[4], (1, hidden), jnp.float32)
    gcn_be = 0.1 * jax.random.normal(keys[5], (1, hidden), jnp.float32)
    gate_w, gate_b = _linear_init(keys[6], hidden, 1)        # gate_nn: Linear(H, 1)
    out_w, out_b = _linear_init(keys[7], 2 * hidden, out_size)
    enc = []
    for i in range(num_layers):
        ks = jax.random.split(keys[8 + i], 5)
        wp, bp = _linear_init(ks[0], 2 * hidden, 2 * hidden)   # SAGEConv fc_pool
        ws, bs = _linear_init(ks[1], 2 * hidden, 2 * hidden)   # SAGEConv fc_self (+bias)
        wn, _ = _linear_init(ks[2], 2 * hidden, 2 * hidden)    # SAGEConv fc_neigh (no bias)
        g = 1.0 + 0.1 * jax.random.normal(ks[3], (1, 2 * hidden), jnp.float32)
        be = 0.1 * jax.random.normal(ks[4], (1, 2 * hidden), jnp.float32)
        enc.append(dict(wp=wp, bp=bp, ws=ws, bs=bs, wn=wn, g=g, be=be))
    return dict(in_w=in_w, in_b=in_b, t1_w=t1_w, t1_b=t1_b, t2_w=t2_w, t2_b=t2_b,
                gcn_w=gcn_w, gcn_b=gcn_b, gcn_g=gcn_g, gcn_be=gcn_be,
                gate_w=gate_w, gate_b=gate_b, out_w=out_w, out_b=out_b, enc=enc)


# ------------------------------------ main -----------------------------------

if __name__ == "__main__":
    G = 2             # graphs per batched call (parallel grid axis)
    N = 16            # number of graph nodes per graph
    HIDDEN = 64       # forced by trans_linear_1/2 = nn.Linear(64, 64)
    IN_FEAT = 10      # g_name = 'tsocial' -> nn.Linear(10, hidden)
    NUM_LAYERS = 2
    OUT_SIZE = 2

    key = jax.random.PRNGKey(0)
    k_adj, k_x, k_p = jax.random.split(key, 3)

    adj = (jax.random.uniform(k_adj, (G, N, N)) < 0.35).astype(jnp.float32)
    eye = jnp.eye(N, dtype=jnp.float32)[None, :, :]
    adj = adj * (1.0 - eye)                                     # no self loops
    x = jax.random.normal(k_x, (G, N, IN_FEAT), dtype=jnp.float32)

    params = init_params(k_p, IN_FEAT, HIDDEN, NUM_LAYERS, OUT_SIZE)

    fwd = jax.jit(premodel_forward)
    score, Z = jax.block_until_ready(fwd(params, adj, x))

    assert score.shape == (G, N, OUT_SIZE) and Z.shape == (G, N, 2 * HIDDEN)
    assert np.all(np.isfinite(np.asarray(score))) and np.all(np.isfinite(np.asarray(Z)))

    score_ref, Z_ref = premodel_reference(params, adj, x)
    np.testing.assert_allclose(np.asarray(Z), np.asarray(Z_ref), rtol=2e-2, atol=2e-2)
    np.testing.assert_allclose(np.asarray(score), np.asarray(score_ref), rtol=2e-2, atol=2e-2)

    print("KERNEL_OK")
</pallas_src>

<mosaic_0001>
module attributes {stable_mosaic.version = 11 : i64} {
  func.func @kernel(%arg0: i32, %arg1: memref<1x16x16xf32, #tpu.memory_space<vmem>>, %arg2: memref<1x16x10xf32, #tpu.memory_space<vmem>>, %arg3: memref<10x64xf32, #tpu.memory_space<vmem>>, %arg4: memref<1x64xf32, #tpu.memory_space<vmem>>, %arg5: memref<64x64xf32, #tpu.memory_space<vmem>>, %arg6: memref<1x64xf32, #tpu.memory_space<vmem>>, %arg7: memref<64x64xf32, #tpu.memory_space<vmem>>, %arg8: memref<1x64xf32, #tpu.memory_space<vmem>>, %arg9: memref<1x64xf32, #tpu.memory_space<vmem>>, %arg10: memref<1x64xf32, #tpu.memory_space<vmem>>, %arg11: memref<64x1xf32, #tpu.memory_space<vmem>>, %arg12: memref<1x1xf32, #tpu.memory_space<vmem>>, %arg13: memref<128x2xf32, #tpu.memory_space<vmem>>, %arg14: memref<1x2xf32, #tpu.memory_space<vmem>>, %arg15: memref<128x128xf32, #tpu.memory_space<vmem>>, %arg16: memref<1x128xf32, #tpu.memory_space<vmem>>, %arg17: memref<256x128xf32, #tpu.memory_space<vmem>>, %arg18: memref<1x128xf32, #tpu.memory_space<vmem>>, %arg19: memref<1x128xf32, #tpu.memory_space<vmem>>, %arg20: memref<1x128xf32, #tpu.memory_space<vmem>>, %arg21: memref<128x128xf32, #tpu.memory_space<vmem>>, %arg22: memref<1x128xf32, #tpu.memory_space<vmem>>, %arg23: memref<256x128xf32, #tpu.memory_space<vmem>>, %arg24: memref<1x128xf32, #tpu.memory_space<vmem>>, %arg25: memref<1x128xf32, #tpu.memory_space<vmem>>, %arg26: memref<1x128xf32, #tpu.memory_space<vmem>>, %arg27: memref<1x16x2xf32, #tpu.memory_space<vmem>>, %arg28: memref<1x16x128xf32, #tpu.memory_space<vmem>>) attributes {dimension_semantics = [#tpu.dimension_semantics<parallel>], iteration_bounds = array<i64: 2>, scalar_prefetch = 0 : i64, scratch_operands = 0 : i64, tpu.core_type = #tpu.core_type<tc>, window_params = [{transform_indices = @transform_0, window_bounds = array<i64: 1, 16, 16>}, {transform_indices = @transform_1, window_bounds = array<i64: 1, 16, 10>}, {pipeline_mode = #tpu.pipeline_mode<synchronous>, transform_indices = @transform_2, window_bounds = array<i64: 10, 64>}, {pipeline_mode = #tpu.pipeline_mode<synchronous>, transform_indices = @transform_3, window_bounds = array<i64: 1, 64>}, {pipeline_mode = #tpu.pipeline_mode<synchronous>, transform_indices = @transform_4, window_bounds = array<i64: 64, 64>}, {pipeline_mode = #tpu.pipeline_mode<synchronous>, transform_indices = @transform_5, window_bounds = array<i64: 1, 64>}, {pipeline_mode = #tpu.pipeline_mode<synchronous>, transform_indices = @transform_6, window_bounds = array<i64: 64, 64>}, {pipeline_mode = #tpu.pipeline_mode<synchronous>, transform_indices = @transform_7, window_bounds = array<i64: 1, 64>}, {pipeline_mode = #tpu.pipeline_mode<synchronous>, transform_indices = @transform_8, window_bounds = array<i64: 1, 64>}, {pipeline_mode = #tpu.pipeline_mode<synchronous>, transform_indices = @transform_9, window_bounds = array<i64: 1, 64>}, {pipeline_mode = #tpu.pipeline_mode<synchronous>, transform_indices = @transform_10, window_bounds = array<i64: 64, 1>}, {pipeline_mode = #tpu.pipeline_mode<synchronous>, transform_indices = @transform_11, window_bounds = array<i64: 1, 1>}, {pipeline_mode = #tpu.pipeline_mode<synchronous>, transform_indices = @transform_12, window_bounds = array<i64: 128, 2>}, {pipeline_mode = #tpu.pipeline_mode<synchronous>, transform_indices = @transform_13, window_bounds = array<i64: 1, 2>}, {pipeline_mode = #tpu.pipeline_mode<synchronous>, transform_indices = @transform_14, window_bounds = array<i64: 128, 128>}, {pipeline_mode = #tpu.pipeline_mode<synchronous>, transform_indices = @transform_15, window_bounds = array<i64: 1, 128>}, {pipeline_mode = #tpu.pipeline_mode<synchronous>, transform_indices = @transform_16, window_bounds = array<i64: 256, 128>}, {pipeline_mode = #tpu.pipeline_mode<synchronous>, transform_indices = @transform_17, window_bounds = array<i64: 1, 128>}, {pipeline_mode = #tpu.pipeline_mode<synchronous>, transform_indices = @transform_18, window_bounds = array<i64: 1, 128>}, {pipeline_mode = #tpu.pipeline_mode<synchronous>, transform_indices = @transform_19, window_bounds = array<i64: 1, 128>}, {pipeline_mode = #tpu.pipeline_mode<synchronous>, transform_indices = @transform_20, window_bounds = array<i64: 128, 128>}, {pipeline_mode = #tpu.pipeline_mode<synchronous>, transform_indices = @transform_21, window_bounds = array<i64: 1, 128>}, {pipeline_mode = #tpu.pipeline_mode<synchronous>, transform_indices = @transform_22, window_bounds = array<i64: 256, 128>}, {pipeline_mode = #tpu.pipeline_mode<synchronous>, transform_indices = @transform_23, window_bounds = array<i64: 1, 128>}, {pipeline_mode = #tpu.pipeline_mode<synchronous>, transform_indices = @transform_24, window_bounds = array<i64: 1, 128>}, {pipeline_mode = #tpu.pipeline_mode<synchronous>, transform_indices = @transform_25, window_bounds = array<i64: 1, 128>}, {transform_indices = @transform_26, window_bounds = array<i64: 1, 16, 2>}, {transform_indices = @transform_27, window_bounds = array<i64: 1, 16, 128>}]} {
    %c0 = arith.constant 0 : index
    %c0_0 = arith.constant 0 : index
    %c0_1 = arith.constant 0 : index
    %0 = vector.load %arg1[%c0, %c0_0, %c0_1] : memref<1x16x16xf32, #tpu.memory_space<vmem>>, vector<1x16x16xf32>
    %1 = vector.shape_cast %0 : vector<1x16x16xf32> to vector<16x16xf32>
    %c0_2 = arith.constant 0 : index
    %c0_3 = arith.constant 0 : index
    %c0_4 = arith.constant 0 : index
    %2 = vector.load %arg2[%c0_2, %c0_3, %c0_4] : memref<1x16x10xf32, #tpu.memory_space<vmem>>, vector<1x16x10xf32>
    %3 = vector.shape_cast %2 : vector<1x16x10xf32> to vector<16x10xf32>
    %c0_5 = arith.constant 0 : index
    %c0_6 = arith.constant 0 : index
    %4 = vector.load %arg3[%c0_5, %c0_6] : memref<10x64xf32, #tpu.memory_space<vmem>>, vector<10x64xf32>
    %cst = arith.constant dense<0.000000e+00> : vector<16x64xf32>
    %5 = tpu.matmul %3, %4, %cst {dimension_numbers = #tpu.dot_dimension_numbers<[1], [0], [0], [1], [0, 0, 1, 1], [], []>} : vector<16x10xf32>, vector<10x64xf32>, vector<16x64xf32> -> vector<16x64xf32>
    %c0_7 = arith.constant 0 : index
    %c0_8 = arith.constant 0 : index
    %6 = vector.load %arg4[%c0_7, %c0_8] : memref<1x64xf32, #tpu.memory_space<vmem>>, vector<1x64xf32>
    %7 = vector.broadcast %6 : vector<1x64xf32> to vector<16x64xf32>
    %8 = arith.addf %5, %7 : vector<16x64xf32>
    %cst_9 = arith.constant 0.000000e+00 : f32
    %9 = vector.broadcast %cst_9 : f32 to vector<16x64xf32>
    %10 = arith.cmpf ogt, %8, %9 : vector<16x64xf32>
    %cst_10 = arith.constant 5.000000e-02 : f32
    %11 = vector.broadcast %cst_10 : f32 to vector<16x64xf32>
    %12 = arith.mulf %11, %8 : vector<16x64xf32>
    %13 = arith.select %10, %8, %12 : vector<16x64xi1>, vector<16x64xf32>
    %c0_11 = arith.constant 0 : index
    %c0_12 = arith.constant 0 : index
    %14 = vector.load %arg5[%c0_11, %c0_12] : memref<64x64xf32, #tpu.memory_space<vmem>>, vector<64x64xf32>
    %cst_13 = arith.constant dense<0.000000e+00> : vector<16x64xf32>
    %15 = tpu.matmul %13, %14, %cst_13 {dimension_numbers = #tpu.dot_dimension_numbers<[1], [0], [0], [1], [0, 0, 1, 1], [], []>} : vector<16x64xf32>, vector<64x64xf32>, vector<16x64xf32> -> vector<16x64xf32>
    %c0_14 = arith.constant 0 : index
    %c0_15 = arith.constant 0 : index
    %16 = vector.load %arg6[%c0_14, %c0_15] : memref<1x64xf32, #tpu.memory_space<vmem>>, vector<1x64xf32>
    %17 = vector.broadcast %16 : vector<1x64xf32> to vector<16x64xf32>
    %18 = arith.addf %15, %17 : vector<16x64xf32>
    %cst_16 = arith.constant dense<0.000000e+00> : vector<16xf32>
    %19 = vector.multi_reduction <add>, %1, %cst_16 [1] : vector<16x16xf32> to vector<16xf32>
    %20 = vector.shape_cast %19 : vector<16xf32> to vector<16x1xf32>
    %cst_17 = arith.constant 1.000000e+00 : f32
    %21 = vector.broadcast %cst_17 : f32 to vector<16x1xf32>
    %22 = arith.maximumf %20, %21 : vector<16x1xf32>
    %cst_18 = arith.constant dense<0.000000e+00> : vector<16xf32>
    %23 = vector.multi_reduction <add>, %1, %cst_18 [0] : vector<16x16xf32> to vector<16xf32>
    %24 = vector.shape_cast %23 : vector<16xf32> to vector<1x16xf32>
    %cst_19 = arith.constant 1.000000e+00 : f32
    %25 = vector.broadcast %cst_19 : f32 to vector<1x16xf32>
    %26 = arith.maximumf %24, %25 : vector<1x16xf32>
    %27 = math.rsqrt %22 : vector<16x1xf32>
    %28 = vector.broadcast %27 : vector<16x1xf32> to vector<16x16xf32>
    %29 = arith.mulf %28, %1 : vector<16x16xf32>
    %30 = math.rsqrt %26 : vector<1x16xf32>
    %31 = vector.broadcast %30 : vector<1x16xf32> to vector<16x16xf32>
    %32 = arith.mulf %29, %31 : vector<16x16xf32>
    %cst_20 = arith.constant dense<0.000000e+00> : vector<16x64xf32>
    %33 = tpu.matmul %32, %18, %cst_20 {dimension_numbers = #tpu.dot_dimension_numbers<[1], [0], [0], [1], [0, 0, 1, 1], [], []>} : vector<16x16xf32>, vector<16x64xf32>, vector<16x64xf32> -> vector<16x64xf32>
    %c0_21 = arith.constant 0 : index
    %c0_22 = arith.constant 0 : index
    %34 = vector.load %arg7[%c0_21, %c0_22] : memref<64x64xf32, #tpu.memory_space<vmem>>, vector<64x64xf32>
    %cst_23 = arith.constant dense<0.000000e+00> : vector<16x64xf32>
    %35 = tpu.matmul %33, %34, %cst_23 {dimension_numbers = #tpu.dot_dimension_numbers<[1], [0], [0], [1], [0, 0, 1, 1], [], []>} : vector<16x64xf32>, vector<64x64xf32>, vector<16x64xf32> -> vector<16x64xf32>
    %c0_24 = arith.constant 0 : index
    %c0_25 = arith.constant 0 : index
    %36 = vector.load %arg8[%c0_24, %c0_25] : memref<1x64xf32, #tpu.memory_space<vmem>>, vector<1x64xf32>
    %37 = vector.broadcast %36 : vector<1x64xf32> to vector<16x64xf32>
    %38 = arith.addf %35, %37 : vector<16x64xf32>
    %c0_26 = arith.constant 0 : index
    %c0_27 = arith.constant 0 : index
    %39 = vector.load %arg9[%c0_26, %c0_27] : memref<1x64xf32, #tpu.memory_space<vmem>>, vector<1x64xf32>
    %c0_28 = arith.constant 0 : index
    %c0_29 = arith.constant 0 : index
    %40 = vector.load %arg10[%c0_28, %c0_29] : memref<1x64xf32, #tpu.memory_space<vmem>>, vector<1x64xf32>
    %cst_30 = arith.constant dense<0.000000e+00> : vector<16xf32>
    %41 = vector.multi_reduction <add>, %38, %cst_30 [1] : vector<16x64xf32> to vector<16xf32>
    %42 = vector.shape_cast %41 : vector<16xf32> to vector<16x1xf32>
    %cst_31 = arith.constant 6.400000e+01 : f32
    %43 = vector.broadcast %cst_31 : f32 to vector<16x1xf32>
    %44 = arith.divf %42, %43 : vector<16x1xf32>
    %45 = vector.broadcast %44 : vector<16x1xf32> to vector<16x64xf32>
    %46 = arith.subf %38, %45 : vector<16x64xf32>
    %47 = vector.broadcast %44 : vector<16x1xf32> to vector<16x64xf32>
    %48 = arith.subf %38, %47 : vector<16x64xf32>
    %49 = arith.mulf %46, %48 : vector<16x64xf32>
    %cst_32 = arith.constant dense<0.000000e+00> : vector<16xf32>
    %50 = vector.multi_reduction <add>, %49, %cst_32 [1] : vector<16x64xf32> to vector<16xf32>
    %51 = vector.shape_cast %50 : vector<16xf32> to vector<16x1xf32>
    %cst_33 = arith.constant 6.400000e+01 : f32
    %52 = vector.broadcast %cst_33 : f32 to vector<16x1xf32>
    %53 = arith.divf %51, %52 : vector<16x1xf32>
    %54 = vector.broadcast %44 : vector<16x1xf32> to vector<16x64xf32>
    %55 = arith.subf %38, %54 : vector<16x64xf32>
    %cst_34 = arith.constant 9.99999974E-6 : f32
    %56 = vector.broadcast %cst_34 : f32 to vector<16x1xf32>
    %57 = arith.addf %53, %56 : vector<16x1xf32>
    %58 = math.rsqrt %57 : vector<16x1xf32>
    %59 = vector.broadcast %58 : vector<16x1xf32> to vector<16x64xf32>
    %60 = arith.mulf %55, %59 : vector<16x64xf32>
    %61 = vector.broadcast %39 : vector<1x64xf32> to vector<16x64xf32>
    %62 = arith.mulf %60, %61 : vector<16x64xf32>
    %63 = vector.broadcast %40 : vector<1x64xf32> to vector<16x64xf32>
    %64 = arith.addf %62, %63 : vector<16x64xf32>
    %65 = arith.subf %64, %18 : vector<16x64xf32>
    %c0_35 = arith.constant 0 : index
    %c0_36 = arith.constant 0 : index
    %66 = vector.load %arg11[%c0_35, %c0_36] : memref<64x1xf32, #tpu.memory_space<vmem>>, vector<64x1xf32>
    %cst_37 = arith.constant dense<0.000000e+00> : vector<16x1xf32>
    %67 = tpu.matmul %18, %66, %cst_37 {dimension_numbers = #tpu.dot_dimension_numbers<[1], [0], [0], [1], [0, 0, 1, 1], [], []>} : vector<16x64xf32>, vector<64x1xf32>, vector<16x1xf32> -> vector<16x1xf32>
    %c0_38 = arith.constant 0 : index
    %c0_39 = arith.constant 0 : index
    %68 = vector.load %arg12[%c0_38, %c0_39] : memref<1x1xf32, #tpu.memory_space<vmem>>, vector<1x1xf32>
    %69 = vector.broadcast %68 : vector<1x1xf32> to vector<16x1xf32>
    %70 = arith.addf %67, %69 : vector<16x1xf32>
    %cst_40 = arith.constant dense<0xFF800000> : vector<1xf32>
    %71 = vector.multi_reduction <maximumf>, %70, %cst_40 [0] : vector<16x1xf32> to vector<1xf32>
    %72 = vector.shape_cast %71 : vector<1xf32> to vector<1x1xf32>
    %73 = vector.broadcast %72 : vector<1x1xf32> to vector<16x1xf32>
    %74 = arith.subf %70, %73 : vector<16x1xf32>
    %75 = math.exp %74 : vector<16x1xf32>
    %cst_41 = arith.constant dense<0.000000e+00> : vector<1xf32>
    %76 = vector.multi_reduction <add>, %75, %cst_41 [0] : vector<16x1xf32> to vector<1xf32>
    %77 = vector.shape_cast %76 : vector<1xf32> to vector<1x1xf32>
    %78 = vector.broadcast %77 : vector<1x1xf32> to vector<16x1xf32>
    %79 = arith.divf %75, %78 : vector<16x1xf32>
    %80 = vector.broadcast %79 : vector<16x1xf32> to vector<16x64xf32>
    %81 = arith.mulf %80, %18 : vector<16x64xf32>
    %cst_42 = arith.constant dense<0.000000e+00> : vector<64xf32>
    %82 = vector.multi_reduction <add>, %81, %cst_42 [0] : vector<16x64xf32> to vector<64xf32>
    %83 = vector.shape_cast %82 : vector<64xf32> to vector<1x64xf32>
    %84 = vector.broadcast %83 : vector<1x64xf32> to vector<16x64xf32>
    %85 = arith.subf %84, %18 : vector<16x64xf32>
    %86 = tpu.concatenate %65, %85 in 1 : vector<16x64xf32>, vector<16x64xf32> -> vector<16x128xf32>
    %c0_43 = arith.constant 0 : index
    %c0_44 = arith.constant 0 : index
    %c0_45 = arith.constant 0 : index
    %87 = vector.load %arg28[%c0_43, %c0_44, %c0_45] : memref<1x16x128xf32, #tpu.memory_space<vmem>>, vector<1x16x128xf32>
    %88 = vector.shape_cast %87 : vector<1x16x128xf32> to vector<16x128xf32>
    %89 = vector.shape_cast %86 : vector<16x128xf32> to vector<1x16x128xf32>
    tpu.vector_store %arg28[%c0_43, %c0_44, %c0_45], %89 {strides = array<i32>} : memref<1x16x128xf32, #tpu.memory_space<vmem>>, vector<1x16x128xf32>,
    %c0_46 = arith.constant 0 : index
    %c0_47 = arith.constant 0 : index
    %90 = vector.load %arg15[%c0_46, %c0_47] : memref<128x128xf32, #tpu.memory_space<vmem>>, vector<128x128xf32>
    %cst_48 = arith.constant dense<0.000000e+00> : vector<16x128xf32>
    %91 = tpu.matmul %86, %90, %cst_48 {dimension_numbers = #tpu.dot_dimension_numbers<[1], [0], [0], [1], [0, 0, 1, 1], [], []>} : vector<16x128xf32>, vector<128x128xf32>, vector<16x128xf32> -> vector<16x128xf32>
    %c0_49 = arith.constant 0 : index
    %c0_50 = arith.constant 0 : index
    %92 = vector.load %arg16[%c0_49, %c0_50] : memref<1x128xf32, #tpu.memory_space<vmem>>, vector<1x128xf32>
    %93 = vector.broadcast %92 : vector<1x128xf32> to vector<16x128xf32>
    %94 = arith.addf %91, %93 : vector<16x128xf32>
    %cst_51 = arith.constant 0.000000e+00 : f32
    %95 = vector.broadcast %cst_51 : f32 to vector<16x128xf32>
    %96 = arith.maximumf %94, %95 : vector<16x128xf32>
    %97 = vector.shape_cast %1 : vector<16x16xf32> to vector<16x16x1xf32>
    %98 = vector.shape_cast %96 : vector<16x128xf32> to vector<1x16x128xf32>
    %99 = vector.broadcast %97 : vector<16x16x1xf32> to vector<16x16x128xf32>
    %100 = vector.broadcast %98 : vector<1x16x128xf32> to vector<16x16x128xf32>
    %101 = arith.mulf %99, %100 : vector<16x16x128xf32>
    %cst_52 = arith.constant dense<0xFF800000> : vector<16x128xf32>
    %102 = vector.multi_reduction <maximumf>, %101, %cst_52 [1] : vector<16x16x128xf32> to vector<16x128xf32>
    %103 = tpu.concatenate %86, %102 in 1 : vector<16x128xf32>, vector<16x128xf32> -> vector<16x256xf32>
    %c0_53 = arith.constant 0 : index
    %c0_54 = arith.constant 0 : index
    %104 = vector.load %arg17[%c0_53, %c0_54] : memref<256x128xf32, #tpu.memory_space<vmem>>, vector<256x128xf32>
    %cst_55 = arith.constant dense<0.000000e+00> : vector<16x128xf32>
    %105 = tpu.matmul %103, %104, %cst_55 {dimension_numbers = #tpu.dot_dimension_numbers<[1], [0], [0], [1], [0, 0, 1, 1], [], []>} : vector<16x256xf32>, vector<256x128xf32>, vector<16x128xf32> -> vector<16x128xf32>
    %c0_56 = arith.constant 0 : index
    %c0_57 = arith.constant 0 : index
    %106 = vector.load %arg18[%c0_56, %c0_57] : memref<1x128xf32, #tpu.memory_space<vmem>>, vector<1x128xf32>
    %107 = vector.broadcast %106 : vector<1x128xf32> to vector<16x128xf32>
    %108 = arith.addf %105, %107 : vector<16x128xf32>
    %c0_58 = arith.constant 0 : index
    %c0_59 = arith.constant 0 : index
    %109 = vector.load %arg19[%c0_58, %c0_59] : memref<1x128xf32, #tpu.memory_space<vmem>>, vector<1x128xf32>
    %c0_60 = arith.constant 0 : index
    %c0_61 = arith.constant 0 : index
    %110 = vector.load %arg20[%c0_60, %c0_61] : memref<1x128xf32, #tpu.memory_space<vmem>>, vector<1x128xf32>
    %cst_62 = arith.constant dense<0.000000e+00> : vector<16xf32>
    %111 = vector.multi_reduction <add>, %108, %cst_62 [1] : vector<16x128xf32> to vector<16xf32>
    %112 = vector.shape_cast %111 : vector<16xf32> to vector<16x1xf32>
    %cst_63 = arith.constant 1.280000e+02 : f32
    %113 = vector.broadcast %cst_63 : f32 to vector<16x1xf32>
    %114 = arith.divf %112, %113 : vector<16x1xf32>
    %115 = vector.broadcast %114 : vector<16x1xf32> to vector<16x128xf32>
    %116 = arith.subf %108, %115 : vector<16x128xf32>
    %117 = vector.broadcast %114 : vector<16x1xf32> to vector<16x128xf32>
    %118 = arith.subf %108, %117 : vector<16x128xf32>
    %119 = arith.mulf %116, %118 : vector<16x128xf32>
    %cst_64 = arith.constant dense<0.000000e+00> : vector<16xf32>
    %120 = vector.multi_reduction <add>, %119, %cst_64 [1] : vector<16x128xf32> to vector<16xf32>
    %121 = vector.shape_cast %120 : vector<16xf32> to vector<16x1xf32>
    %cst_65 = arith.constant 1.280000e+02 : f32
    %122 = vector.broadcast %cst_65 : f32 to vector<16x1xf32>
    %123 = arith.divf %121, %122 : vector<16x1xf32>
    %124 = vector.broadcast %114 : vector<16x1xf32> to vector<16x128xf32>
    %125 = arith.subf %108, %124 : vector<16x128xf32>
    %cst_66 = arith.constant 9.99999974E-6 : f32
    %126 = vector.broadcast %cst_66 : f32 to vector<16x1xf32>
    %127 = arith.addf %123, %126 : vector<16x1xf32>
    %128 = math.rsqrt %127 : vector<16x1xf32>
    %129 = vector.broadcast %128 : vector<16x1xf32> to vector<16x128xf32>
    %130 = arith.mulf %125, %129 : vector<16x128xf32>
    %131 = vector.broadcast %109 : vector<1x128xf32> to vector<16x128xf32>
    %132 = arith.mulf %130, %131 : vector<16x128xf32>
    %133 = vector.broadcast %110 : vector<1x128xf32> to vector<16x128xf32>
    %134 = arith.addf %132, %133 : vector<16x128xf32>
    %cst_67 = arith.constant 0.000000e+00 : f32
    %135 = vector.broadcast %cst_67 : f32 to vector<16x128xf32>
    %136 = arith.maximumf %134, %135 : vector<16x128xf32>
    %c0_68 = arith.constant 0 : index
    %c0_69 = arith.constant 0 : index
    %137 = vector.load %arg21[%c0_68, %c0_69] : memref<128x128xf32, #tpu.memory_space<vmem>>, vector<128x128xf32>
    %cst_70 = arith.constant dense<0.000000e+00> : vector<16x128xf32>
    %138 = tpu.matmul %136, %137, %cst_70 {dimension_numbers = #tpu.dot_dimension_numbers<[1], [0], [0], [1], [0, 0, 1, 1], [], []>} : vector<16x128xf32>, vector<128x128xf32>, vector<16x128xf32> -> vector<16x128xf32>
    %c0_71 = arith.constant 0 : index
    %c0_72 = arith.constant 0 : index
    %139 = vector.load %arg22[%c0_71, %c0_72] : memref<1x128xf32, #tpu.memory_space<vmem>>, vector<1x128xf32>
    %140 = vector.broadcast %139 : vector<1x128xf32> to vector<16x128xf32>
    %141 = arith.addf %138, %140 : vector<16x128xf32>
    %cst_73 = arith.constant 0.000000e+00 : f32
    %142 = vector.broadcast %cst_73 : f32 to vector<16x128xf32>
    %143 = arith.maximumf %141, %142 : vector<16x128xf32>
    %144 = vector.shape_cast %1 : vector<16x16xf32> to vector<16x16x1xf32>
    %145 = vector.shape_cast %143 : vector<16x128xf32> to vector<1x16x128xf32>
    %146 = vector.broadcast %144 : vector<16x16x1xf32> to vector<16x16x128xf32>
    %147 = vector.broadcast %145 : vector<1x16x128xf32> to vector<16x16x128xf32>
    %148 = arith.mulf %146, %147 : vector<16x16x128xf32>
    %cst_74 = arith.constant dense<0xFF800000> : vector<16x128xf32>
    %149 = vector.multi_reduction <maximumf>, %148, %cst_74 [1] : vector<16x16x128xf32> to vector<16x128xf32>
    %150 = tpu.concatenate %136, %149 in 1 : vector<16x128xf32>, vector<16x128xf32> -> vector<16x256xf32>
    %c0_75 = arith.constant 0 : index
    %c0_76 = arith.constant 0 : index
    %151 = vector.load %arg23[%c0_75, %c0_76] : memref<256x128xf32, #tpu.memory_space<vmem>>, vector<256x128xf32>
    %cst_77 = arith.constant dense<0.000000e+00> : vector<16x128xf32>
    %152 = tpu.matmul %150, %151, %cst_77 {dimension_numbers = #tpu.dot_dimension_numbers<[1], [0], [0], [1], [0, 0, 1, 1], [], []>} : vector<16x256xf32>, vector<256x128xf32>, vector<16x128xf32> -> vector<16x128xf32>
    %c0_78 = arith.constant 0 : index
    %c0_79 = arith.constant 0 : index
    %153 = vector.load %arg24[%c0_78, %c0_79] : memref<1x128xf32, #tpu.memory_space<vmem>>, vector<1x128xf32>
    %154 = vector.broadcast %153 : vector<1x128xf32> to vector<16x128xf32>
    %155 = arith.addf %152, %154 : vector<16x128xf32>
    %c0_80 = arith.constant 0 : index
    %c0_81 = arith.constant 0 : index
    %156 = vector.load %arg25[%c0_80, %c0_81] : memref<1x128xf32, #tpu.memory_space<vmem>>, vector<1x128xf32>
    %c0_82 = arith.constant 0 : index
    %c0_83 = arith.constant 0 : index
    %157 = vector.load %arg26[%c0_82, %c0_83] : memref<1x128xf32, #tpu.memory_space<vmem>>, vector<1x128xf32>
    %cst_84 = arith.constant dense<0.000000e+00> : vector<16xf32>
    %158 = vector.multi_reduction <add>, %155, %cst_84 [1] : vector<16x128xf32> to vector<16xf32>
    %159 = vector.shape_cast %158 : vector<16xf32> to vector<16x1xf32>
    %cst_85 = arith.constant 1.280000e+02 : f32
    %160 = vector.broadcast %cst_85 : f32 to vector<16x1xf32>
    %161 = arith.divf %159, %160 : vector<16x1xf32>
    %162 = vector.broadcast %161 : vector<16x1xf32> to vector<16x128xf32>
    %163 = arith.subf %155, %162 : vector<16x128xf32>
    %164 = vector.broadcast %161 : vector<16x1xf32> to vector<16x128xf32>
    %165 = arith.subf %155, %164 : vector<16x128xf32>
    %166 = arith.mulf %163, %165 : vector<16x128xf32>
    %cst_86 = arith.constant dense<0.000000e+00> : vector<16xf32>
    %167 = vector.multi_reduction <add>, %166, %cst_86 [1] : vector<16x128xf32> to vector<16xf32>
    %168 = vector.shape_cast %167 : vector<16xf32> to vector<16x1xf32>
    %cst_87 = arith.constant 1.280000e+02 : f32
    %169 = vector.broadcast %cst_87 : f32 to vector<16x1xf32>
    %170 = arith.divf %168, %169 : vector<16x1xf32>
    %171 = vector.broadcast %161 : vector<16x1xf32> to vector<16x128xf32>
    %172 = arith.subf %155, %171 : vector<16x128xf32>
    %cst_88 = arith.constant 9.99999974E-6 : f32
    %173 = vector.broadcast %cst_88 : f32 to vector<16x1xf32>
    %174 = arith.addf %170, %173 : vector<16x1xf32>
    %175 = math.rsqrt %174 : vector<16x1xf32>
    %176 = vector.broadcast %175 : vector<16x1xf32> to vector<16x128xf32>
    %177 = arith.mulf %172, %176 : vector<16x128xf32>
    %178 = vector.broadcast %156 : vector<1x128xf32> to vector<16x128xf32>
    %179 = arith.mulf %177, %178 : vector<16x128xf32>
    %180 = vector.broadcast %157 : vector<1x128xf32> to vector<16x128xf32>
    %181 = arith.addf %179, %180 : vector<16x128xf32>
    %cst_89 = arith.constant 0.000000e+00 : f32
    %182 = vector.broadcast %cst_89 : f32 to vector<16x128xf32>
    %183 = arith.maximumf %181, %182 : vector<16x128xf32>
    %c0_90 = arith.constant 0 : index
    %c0_91 = arith.constant 0 : index
    %184 = vector.load %arg13[%c0_90, %c0_91] : memref<128x2xf32, #tpu.memory_space<vmem>>, vector<128x2xf32>
    %cst_92 = arith.constant dense<0.000000e+00> : vector<16x2xf32>
    %185 = tpu.matmul %183, %184, %cst_92 {dimension_numbers = #tpu.dot_dimension_numbers<[1], [0], [0], [1], [0, 0, 1, 1], [], []>} : vector<16x128xf32>, vector<128x2xf32>, vector<16x2xf32> -> vector<16x2xf32>
    %c0_93 = arith.constant 0 : index
    %c0_94 = arith.constant 0 : index
    %186 = vector.load %arg14[%c0_93, %c0_94] : memref<1x2xf32, #tpu.memory_space<vmem>>, vector<1x2xf32>
    %187 = vector.broadcast %186 : vector<1x2xf32> to vector<16x2xf32>
    %188 = arith.addf %185, %187 : vector<16x2xf32>
    %c0_95 = arith.constant 0 : index
    %c0_96 = arith.constant 0 : index
    %c0_97 = arith.constant 0 : index
    %189 = vector.load %arg27[%c0_95, %c0_96, %c0_97] : memref<1x16x2xf32, #tpu.memory_space<vmem>>, vector<1x16x2xf32>
    %190 = vector.shape_cast %189 : vector<1x16x2xf32> to vector<16x2xf32>
    %191 = vector.shape_cast %188 : vector<16x2xf32> to vector<1x16x2xf32>
    tpu.vector_store %arg27[%c0_95, %c0_96, %c0_97], %191 {strides = array<i32>} : memref<1x16x2xf32, #tpu.memory_space<vmem>>, vector<1x16x2xf32>,
    return
  }
  func.func @transform_0(%arg0: i32) -> (i32, i32, i32) {
    %c0_i32 = arith.constant 0 : i32
    %c0_i32_0 = arith.constant 0 : i32
    %c0_i32_1 = arith.constant 0 : i32
    return %arg0, %c0_i32, %c0_i32_0 : i32, i32, i32
  }
  func.func @transform_1(%arg0: i32) -> (i32, i32, i32) {
    %c0_i32 = arith.constant 0 : i32
    %c0_i32_0 = arith.constant 0 : i32
    %c0_i32_1 = arith.constant 0 : i32
    return %arg0, %c0_i32, %c0_i32_0 : i32, i32, i32
  }
  func.func @transform_2(%arg0: i32) -> (i32, i32) {
    %c0_i32 = arith.constant 0 : i32
    %c0_i32_0 = arith.constant 0 : i32
    %c0_i32_1 = arith.constant 0 : i32
    return %c0_i32, %c0_i32_0 : i32, i32
  }
  func.func @transform_3(%arg0: i32) -> (i32, i32) {
    %c0_i32 = arith.constant 0 : i32
    %c0_i32_0 = arith.constant 0 : i32
    %c0_i32_1 = arith.constant 0 : i32
    return %c0_i32, %c0_i32_0 : i32, i32
  }
  func.func @transform_4(%arg0: i32) -> (i32, i32) {
    %c0_i32 = arith.constant 0 : i32
    %c0_i32_0 = arith.constant 0 : i32
    %c0_i32_1 = arith.constant 0 : i32
    return %c0_i32, %c0_i32_0 : i32, i32
  }
  func.func @transform_5(%arg0: i32) -> (i32, i32) {
    %c0_i32 = arith.constant 0 : i32
    %c0_i32_0 = arith.constant 0 : i32
    %c0_i32_1 = arith.constant 0 : i32
    return %c0_i32, %c0_i32_0 : i32, i32
  }
  func.func @transform_6(%arg0: i32) -> (i32, i32) {
    %c0_i32 = arith.constant 0 : i32
    %c0_i32_0 = arith.constant 0 : i32
    %c0_i32_1 = arith.constant 0 : i32
    return %c0_i32, %c0_i32_0 : i32, i32
  }
  func.func @transform_7(%arg0: i32) -> (i32, i32) {
    %c0_i32 = arith.constant 0 : i32
    %c0_i32_0 = arith.constant 0 : i32
    %c0_i32_1 = arith.constant 0 : i32
    return %c0_i32, %c0_i32_0 : i32, i32
  }
  func.func @transform_8(%arg0: i32) -> (i32, i32) {
    %c0_i32 = arith.constant 0 : i32
    %c0_i32_0 = arith.constant 0 : i32
    %c0_i32_1 = arith.constant 0 : i32
    return %c0_i32, %c0_i32_0 : i32, i32
  }
  func.func @transform_9(%arg0: i32) -> (i32, i32) {
    %c0_i32 = arith.constant 0 : i32
    %c0_i32_0 = arith.constant 0 : i32
    %c0_i32_1 = arith.constant 0 : i32
    return %c0_i32, %c0_i32_0 : i32, i32
  }
  func.func @transform_10(%arg0: i32) -> (i32, i32) {
    %c0_i32 = arith.constant 0 : i32
    %c0_i32_0 = arith.constant 0 : i32
    %c0_i32_1 = arith.constant 0 : i32
    return %c0_i32, %c0_i32_0 : i32, i32
  }
  func.func @transform_11(%arg0: i32) -> (i32, i32) {
    %c0_i32 = arith.constant 0 : i32
    %c0_i32_0 = arith.constant 0 : i32
    %c0_i32_1 = arith.constant 0 : i32
    return %c0_i32, %c0_i32_0 : i32, i32
  }
  func.func @transform_12(%arg0: i32) -> (i32, i32) {
    %c0_i32 = arith.constant 0 : i32
    %c0_i32_0 = arith.constant 0 : i32
    %c0_i32_1 = arith.constant 0 : i32
    return %c0_i32, %c0_i32_0 : i32, i32
  }
  func.func @transform_13(%arg0: i32) -> (i32, i32) {
    %c0_i32 = arith.constant 0 : i32
    %c0_i32_0 = arith.constant 0 : i32
    %c0_i32_1 = arith.constant 0 : i32
    return %c0_i32, %c0_i32_0 : i32, i32
  }
  func.func @transform_14(%arg0: i32) -> (i32, i32) {
    %c0_i32 = arith.constant 0 : i32
    %c0_i32_0 = arith.constant 0 : i32
    %c0_i32_1 = arith.constant 0 : i32
    return %c0_i32, %c0_i32_0 : i32, i32
  }
  func.func @transform_15(%arg0: i32) -> (i32, i32) {
    %c0_i32 = arith.constant 0 : i32
    %c0_i32_0 = arith.constant 0 : i32
    %c0_i32_1 = arith.constant 0 : i32
    return %c0_i32, %c0_i32_0 : i32, i32
  }
  func.func @transform_16(%arg0: i32) -> (i32, i32) {
    %c0_i32 = arith.constant 0 : i32
    %c0_i32_0 = arith.constant 0 : i32
    %c0_i32_1 = arith.constant 0 : i32
    return %c0_i32, %c0_i32_0 : i32, i32
  }
  func.func @transform_17(%arg0: i32) -> (i32, i32) {
    %c0_i32 = arith.constant 0 : i32
    %c0_i32_0 = arith.constant 0 : i32
    %c0_i32_1 = arith.constant 0 : i32
    return %c0_i32, %c0_i32_0 : i32, i32
  }
  func.func @transform_18(%arg0: i32) -> (i32, i32) {
    %c0_i32 = arith.constant 0 : i32
    %c0_i32_0 = arith.constant 0 : i32
    %c0_i32_1 = arith.constant 0 : i32
    return %c0_i32, %c0_i32_0 : i32, i32
  }
  func.func @transform_19(%arg0: i32) -> (i32, i32) {
    %c0_i32 = arith.constant 0 : i32
    %c0_i32_0 = arith.constant 0 : i32
    %c0_i32_1 = arith.constant 0 : i32
    return %c0_i32, %c0_i32_0 : i32, i32
  }
  func.func @transform_20(%arg0: i32) -> (i32, i32) {
    %c0_i32 = arith.constant 0 : i32
    %c0_i32_0 = arith.constant 0 : i32
    %c0_i32_1 = arith.constant 0 : i32
    return %c0_i32, %c0_i32_0 : i32, i32
  }
  func.func @transform_21(%arg0: i32) -> (i32, i32) {
    %c0_i32 = arith.constant 0 : i32
    %c0_i32_0 = arith.constant 0 : i32
    %c0_i32_1 = arith.constant 0 : i32
    return %c0_i32, %c0_i32_0 : i32, i32
  }
  func.func @transform_22(%arg0: i32) -> (i32, i32) {
    %c0_i32 = arith.constant 0 : i32
    %c0_i32_0 = arith.constant 0 : i32
    %c0_i32_1 = arith.constant 0 : i32
    return %c0_i32, %c0_i32_0 : i32, i32
  }
  func.func @transform_23(%arg0: i32) -> (i32, i32) {
    %c0_i32 = arith.constant 0 : i32
    %c0_i32_0 = arith.constant 0 : i32
    %c0_i32_1 = arith.constant 0 : i32
    return %c0_i32, %c0_i32_0 : i32, i32
  }
  func.func @transform_24(%arg0: i32) -> (i32, i32) {
    %c0_i32 = arith.constant 0 : i32
    %c0_i32_0 = arith.constant 0 : i32
    %c0_i32_1 = arith.constant 0 : i32
    return %c0_i32, %c0_i32_0 : i32, i32
  }
  func.func @transform_25(%arg0: i32) -> (i32, i32) {
    %c0_i32 = arith.constant 0 : i32
    %c0_i32_0 = arith.constant 0 : i32
    %c0_i32_1 = arith.constant 0 : i32
    return %c0_i32, %c0_i32_0 : i32, i32
  }
  func.func @transform_26(%arg0: i32) -> (i32, i32, i32) {
    %c0_i32 = arith.constant 0 : i32
    %c0_i32_0 = arith.constant 0 : i32
    %c0_i32_1 = arith.constant 0 : i32
    return %arg0, %c0_i32, %c0_i32_0 : i32, i32, i32
  }
  func.func @transform_27(%arg0: i32) -> (i32, i32, i32) {
    %c0_i32 = arith.constant 0 : i32
    %c0_i32_0 = arith.constant 0 : i32
    %c0_i32_1 = arith.constant 0 : i32
    return %arg0, %c0_i32, %c0_i32_0 : i32, i32, i32
  }
}

</mosaic_0001>

<llo_original>
// kernel: premodel_forward.1
$region0: #{premodel_forward.1}
  #allocation0 [shape = 'u32[]', space=smem, size = 0x4, offset = 0x4, fixed_abs, tag = 'smem constant byte address 0x4 - core index']
  #allocation1 [shape = 'u32[144,128]{1,0:T(1,128)}', space=vmem, size = 0x12000, scoped, tag = 'internal scratch']
  #allocation2 [shape = 'f32[1,1]{1,0:T(1,128)S(1)}', space=vmem, size = 0x200, scoped, tag = 'scoped memory for premodel_forward.1']
  %s0 = inlined_call_operand.vmem [shape: f32[2,16,16], index: 0, kind: input, shape index: {}]
  %s1 = inlined_call_operand.vmem [shape: f32[2,16,10], index: 1, kind: input, shape index: {}]
  %s2 = inlined_call_operand.vmem [shape: f32[10,64], index: 2, kind: input, shape index: {}]
  %s3 = inlined_call_operand.vmem [shape: f32[1,64], index: 3, kind: input, shape index: {}]
  %s4 = inlined_call_operand.vmem [shape: f32[64,64], index: 4, kind: input, shape index: {}]
  %s5 = inlined_call_operand.vmem [shape: f32[1,64], index: 5, kind: input, shape index: {}]
  %s6 = inlined_call_operand.vmem [shape: f32[64,64], index: 6, kind: input, shape index: {}]
  %s7 = inlined_call_operand.vmem [shape: f32[1,64], index: 7, kind: input, shape index: {}]
  %s8 = inlined_call_operand.vmem [shape: f32[1,64], index: 8, kind: input, shape index: {}]
  %s9 = inlined_call_operand.vmem [shape: f32[1,64], index: 9, kind: input, shape index: {}]
  %s10 = inlined_call_operand.vmem [shape: f32[64,1], index: 10, kind: input, shape index: {}]
  %s11 = inlined_call_operand.<no memory space> [shape: f32[1,1], index: 11, kind: input, shape index: {}]
  %s12 = inlined_call_operand.vmem [shape: f32[128,2], index: 12, kind: input, shape index: {}]
  %s13 = inlined_call_operand.vmem [shape: f32[1,2], index: 13, kind: input, shape index: {}]
  %s14 = inlined_call_operand.vmem [shape: f32[128,128], index: 14, kind: input, shape index: {}]
  %s15 = inlined_call_operand.vmem [shape: f32[1,128], index: 15, kind: input, shape index: {}]
  %s16 = inlined_call_operand.vmem [shape: f32[256,128], index: 16, kind: input, shape index: {}]
  %s17 = inlined_call_operand.vmem [shape: f32[1,128], index: 17, kind: input, shape index: {}]
  %s18 = inlined_call_operand.vmem [shape: f32[1,128], index: 18, kind: input, shape index: {}]
  %s19 = inlined_call_operand.vmem [shape: f32[1,128], index: 19, kind: input, shape index: {}]
  %s20 = inlined_call_operand.vmem [shape: f32[128,128], index: 20, kind: input, shape index: {}]
  %s21 = inlined_call_operand.vmem [shape: f32[1,128], index: 21, kind: input, shape index: {}]
  %s22 = inlined_call_operand.vmem [shape: f32[256,128], index: 22, kind: input, shape index: {}]
  %s23 = inlined_call_operand.vmem [shape: f32[1,128], index: 23, kind: input, shape index: {}]
  %s24 = inlined_call_operand.vmem [shape: f32[1,128], index: 24, kind: input, shape index: {}]
  %s25 = inlined_call_operand.vmem [shape: f32[1,128], index: 25, kind: input, shape index: {}]
  %s26 = inlined_call_operand.vmem [shape: f32[2,16,2], index: 26, kind: output, shape index: {0}]
  %s27 = inlined_call_operand.hbm [shape: f32[2,16,128], index: 27, kind: output, shape index: {1}]
  %28 = xla_tuple %s26, %s27
  %s29 = sld [smem:[#allocation0]]
  $region145: #{premodel_forward.1} parent=0
    _
  %s31 = ssub.s32 1, %s29
  %s32 = scalar_select 0, %s31, %s29
  %v33 = vstv %s11
  %34 = vst [vmem:[#allocation2] sm:$0x1] %v33
  $region1: #{premodel_forward.1} parent=0
    #allocation3 [shape = 'u8[16384]{0}', space=vmem, size = 0x4000, scoped, tag = 'output window, operand 1']
    #allocation4 [shape = 's32[2]{0}', space=sflag, size = 0x8, scoped, tag = 'scoped memory for premodel_forward.1']
    %35 = vsyncpa [#allocation4], 0
    %s36 = scalar_lea.sflag [#allocation4], 1
    %37 = vsyncpa %s36, 0
    loop: start=0, step=1, limit=4
    $region2: #{premodel_forward.1} parent=1 // loop_pre_header
      _
    $region3: #{premodel_forward.1} parent=1 // loop_header
      %s39 = sphi 0, %s43
      %p40 = scmp.ge.s32.totalorder %s39, 4
      %s49 = sphi 0, %s51
      %s52 = sphi 0, %s49
      %s53 = sphi 0, %s52
      %s69 = sphi 0, %s53
      %s75 = sphi 0, %s77
      %s78 = sphi 0, %s75
      %s79 = sphi 0, %s78
      %s95 = sphi 0, %s79
      %s99 = sphi 0, %s99
      %s101 = sphi 0, %s99
      %s102 = sphi 0, %s101
      %s116 = sphi 0, %s102
      %s120 = sphi 0, %s120
      %s122 = sphi 0, %s120
      %s123 = sphi 0, %s122
      %s137 = sphi 0, %s123
      %s141 = sphi 0, %s141
      %s143 = sphi 0, %s141
      %s144 = sphi 0, %s143
      %s158 = sphi 0, %s144
      %s162 = sphi 0, %s162
      %s164 = sphi 0, %s162
      %s165 = sphi 0, %s164
      %s179 = sphi 0, %s165
      %s183 = sphi 0, %s183
      %s185 = sphi 0, %s183
      %s186 = sphi 0, %s185
      %s200 = sphi 0, %s186
      %s204 = sphi 0, %s204
      %s206 = sphi 0, %s204
      %s207 = sphi 0, %s206
      %s221 = sphi 0, %s207
      %s225 = sphi 0, %s225
      %s227 = sphi 0, %s225
      %s228 = sphi 0, %s227
      %s242 = sphi 0, %s228
      %s246 = sphi 0, %s246
      %s248 = sphi 0, %s246
      %s249 = sphi 0, %s248
      %s263 = sphi 0, %s249
      %s267 = sphi 0, %s267
      %s269 = sphi 0, %s267
      %s270 = sphi 0, %s269
      %s284 = sphi 0, %s270
      %s288 = sphi 0, %s288
      %s290 = sphi 0, %s288
      %s291 = sphi 0, %s290
      %s305 = sphi 0, %s291
      %s309 = sphi 0, %s309
      %s311 = sphi 0, %s309
      %s312 = sphi 0, %s311
      %s326 = sphi 0, %s312
      %s330 = sphi 0, %s330
      %s332 = sphi 0, %s330
      %s333 = sphi 0, %s332
      %s347 = sphi 0, %s333
      %s351 = sphi 0, %s351
      %s353 = sphi 0, %s351
      %s354 = sphi 0, %s353
      %s368 = sphi 0, %s354
      %s372 = sphi 0, %s372
      %s374 = sphi 0, %s372
      %s375 = sphi 0, %s374
      %s389 = sphi 0, %s375
      %s393 = sphi 0, %s393
      %s395 = sphi 0, %s393
      %s396 = sphi 0, %s395
      %s410 = sphi 0, %s396
      %s414 = sphi 0, %s414
      %s416 = sphi 0, %s414
      %s417 = sphi 0, %s416
      %s431 = sphi 0, %s417
      %s435 = sphi 0, %s435
      %s437 = sphi 0, %s435
      %s438 = sphi 0, %s437
      %s452 = sphi 0, %s438
      %s456 = sphi 0, %s456
      %s458 = sphi 0, %s456
      %s459 = sphi 0, %s458
      %s473 = sphi 0, %s459
      %s477 = sphi 0, %s477
      %s479 = sphi 0, %s477
      %s480 = sphi 0, %s479
      %s494 = sphi 0, %s480
      %s498 = sphi 0, %s498
      %s500 = sphi 0, %s498
      %s501 = sphi 0, %s500
      %s515 = sphi 0, %s501
      %s519 = sphi 0, %s519
      %s521 = sphi 0, %s519
      %s522 = sphi 0, %s521
      %s536 = sphi 0, %s522
      %s540 = sphi 0, %s540
      %s542 = sphi 0, %s540
      %s543 = sphi 0, %s542
      %s557 = sphi 0, %s543
      %s561 = sphi 0, %s561
      %s563 = sphi 0, %s561
      %s564 = sphi 0, %s563
      %s578 = sphi 0, %s564
      %s582 = sphi 0, %s582
      %s584 = sphi 0, %s582
      %s585 = sphi 0, %s584
      %s599 = sphi 0, %s585
      %s605 = sphi 0, %s607
      %s608 = sphi 0, %s605
      %s609 = sphi 0, %s608
      %s625 = sphi 0, %s609
      %s631 = sphi 0, %s633
      %s634 = sphi 0, %s631
      %s635 = sphi 0, %s634
      %s651 = sphi 0, %s635
    $region4: #{premodel_forward.1} parent=1 // loop_header_branch
      %42 = sbr.rel (%p40) target = $region8
    $region5: #{premodel_forward.1} parent=1 // loop_body
      %s44 = ssub.s32 %s39, 1
      %s45 = ssub.s32 %s39, 2
      %s46 = sadd.s32 %s39, 1
      %s47 = ssub.s32 %s39, %s46
      %p48 = scmp.eq.s32.totalorder %s47, 0
      %s50 = sadd.s32 %s49, 1
      %s51 = scalar_select %p48, %s49, %s50
      %p54 = pneg %p48
      %p55 = scmp.eq.s32.totalorder %s39, 1
      %p56 = por %p54, %p55
      %p57 = scmp.ne.s32.totalorder %s49, %s52
      %p58 = scmp.eq.s32.totalorder %s39, 0
      %p59 = por %p57, %p58
      %p60 = scmp.ne.s32.totalorder %s49, %s52
      %p61 = scmp.eq.s32.totalorder %s44, 1
      %p62 = por %p60, %p61
      %p63 = scmp.ne.s32.totalorder %s52, %s53
      %p64 = scmp.eq.s32.totalorder %s44, 0
      %p65 = por %p63, %p64
      %p66 = scmp.ne.s32.totalorder %s52, %s53
      %p67 = scmp.eq.s32.totalorder %s45, 1
      %p68 = por %p66, %p67
      %p70 = scmp.ne.s32.totalorder %s53, %s69
      %p71 = scmp.eq.s32.totalorder %s45, 0
      %p72 = por %p70, %p71
      %s73 = ssub.s32 %s39, %s46
      %p74 = scmp.eq.s32.totalorder %s73, 0
      %s76 = sadd.s32 %s75, 1
      %s77 = scalar_select %p74, %s75, %s76
      %p80 = pneg %p74
      %p81 = scmp.eq.s32.totalorder %s39, 1
      %p82 = por %p80, %p81
      %p83 = scmp.ne.s32.totalorder %s75, %s78
      %p84 = scmp.eq.s32.totalorder %s39, 0
      %p85 = por %p83, %p84
      %p86 = scmp.ne.s32.totalorder %s75, %s78
      %p87 = scmp.eq.s32.totalorder %s44, 1
      %p88 = por %p86, %p87
      %p89 = scmp.ne.s32.totalorder %s78, %s79
      %p90 = scmp.eq.s32.totalorder %s44, 0
      %p91 = por %p89, %p90
      %p92 = scmp.ne.s32.totalorder %s78, %s79
      %p93 = scmp.eq.s32.totalorder %s45, 1
      %p94 = por %p92, %p93
      %p96 = scmp.ne.s32.totalorder %s79, %s95
      %p97 = scmp.eq.s32.totalorder %s45, 0
      %p98 = por %p96, %p97
      %s100 = sadd.s32 %s99, 1
      %p103 = scmp.eq.s32.totalorder %s39, 1
      %p104 = scmp.ne.s32.totalorder %s99, %s101
      %p105 = scmp.eq.s32.totalorder %s39, 0
      %p106 = por %p104, %p105
      %p107 = scmp.ne.s32.totalorder %s99, %s101
      %p108 = scmp.eq.s32.totalorder %s44, 1
      %p109 = por %p107, %p108
      %p110 = scmp.ne.s32.totalorder %s101, %s102
      %p111 = scmp.eq.s32.totalorder %s44, 0
      %p112 = por %p110, %p111
      %p113 = scmp.ne.s32.totalorder %s101, %s102
      %p114 = scmp.eq.s32.totalorder %s45, 1
      %p115 = por %p113, %p114
      %p117 = scmp.ne.s32.totalorder %s102, %s116
      %p118 = scmp.eq.s32.totalorder %s45, 0
      %p119 = por %p117, %p118
      %s121 = sadd.s32 %s120, 1
      %p124 = scmp.eq.s32.totalorder %s39, 1
      %p125 = scmp.ne.s32.totalorder %s120, %s122
      %p126 = scmp.eq.s32.totalorder %s39, 0
      %p127 = por %p125, %p126
      %p128 = scmp.ne.s32.totalorder %s120, %s122
      %p129 = scmp.eq.s32.totalorder %s44, 1
      %p130 = por %p128, %p129
      %p131 = scmp.ne.s32.totalorder %s122, %s123
      %p132 = scmp.eq.s32.totalorder %s44, 0
      %p133 = por %p131, %p132
      %p134 = scmp.ne.s32.totalorder %s122, %s123
      %p135 = scmp.eq.s32.totalorder %s45, 1
      %p136 = por %p134, %p135
      %p138 = scmp.ne.s32.totalorder %s123, %s137
      %p139 = scmp.eq.s32.totalorder %s45, 0
      %p140 = por %p138, %p139
      %s142 = sadd.s32 %s141, 1
      %p145 = scmp.eq.s32.totalorder %s39, 1
      %p146 = scmp.ne.s32.totalorder %s141, %s143
      %p147 = scmp.eq.s32.totalorder %s39, 0
      %p148 = por %p146, %p147
      %p149 = scmp.ne.s32.totalorder %s141, %s143
      %p150 = scmp.eq.s32.totalorder %s44, 1
      %p151 = por %p149, %p150
      %p152 = scmp.ne.s32.totalorder %s143, %s144
      %p153 = scmp.eq.s32.totalorder %s44, 0
      %p154 = por %p152, %p153
      %p155 = scmp.ne.s32.totalorder %s143, %s144
      %p156 = scmp.eq.s32.totalorder %s45, 1
      %p157 = por %p155, %p156
      %p159 = scmp.ne.s32.totalorder %s144, %s158
      %p160 = scmp.eq.s32.totalorder %s45, 0
      %p161 = por %p159, %p160
      %s163 = sadd.s32 %s162, 1
      %p166 = scmp.eq.s32.totalorder %s39, 1
      %p167 = scmp.ne.s32.totalorder %s162, %s164
      %p168 = scmp.eq.s32.totalorder %s39, 0
      %p169 = por %p167, %p168
      %p170 = scmp.ne.s32.totalorder %s162, %s164
      %p171 = scmp.eq.s32.totalorder %s44, 1
      %p172 = por %p170, %p171
      %p173 = scmp.ne.s32.totalorder %s164, %s165
      %p174 = scmp.eq.s32.totalorder %s44, 0
      %p175 = por %p173, %p174
      %p176 = scmp.ne.s32.totalorder %s164, %s165
      %p177 = scmp.eq.s32.totalorder %s45, 1
      %p178 = por %p176, %p177
      %p180 = scmp.ne.s32.totalorder %s165, %s179
      %p181 = scmp.eq.s32.totalorder %s45, 0
      %p182 = por %p180, %p181
      %s184 = sadd.s32 %s183, 1
      %p187 = scmp.eq.s32.totalorder %s39, 1
      %p188 = scmp.ne.s32.totalorder %s183, %s185
      %p189 = scmp.eq.s32.totalorder %s39, 0
      %p190 = por %p188, %p189
      %p191 = scmp.ne.s32.totalorder %s183, %s185
      %p192 = scmp.eq.s32.totalorder %s44, 1
      %p193 = por %p191, %p192
      %p194 = scmp.ne.s32.totalorder %s185, %s186
      %p195 = scmp.eq.s32.totalorder %s44, 0
      %p196 = por %p194, %p195
      %p197 = scmp.ne.s32.totalorder %s185, %s186
      %p198 = scmp.eq.s32.totalorder %s45, 1
      %p199 = por %p197, %p198
      %p201 = scmp.ne.s32.totalorder %s186, %s200
      %p202 = scmp.eq.s32.totalorder %s45, 0
      %p203 = por %p201, %p202
      %s205 = sadd.s32 %s204, 1
      %p208 = scmp.eq.s32.totalorder %s39, 1
      %p209 = scmp.ne.s32.totalorder %s204, %s206
      %p210 = scmp.eq.s32.totalorder %s39, 0
      %p211 = por %p209, %p210
      %p212 = scmp.ne.s32.totalorder %s204, %s206
      %p213 = scmp.eq.s32.totalorder %s44, 1
      %p214 = por %p212, %p213
      %p215 = scmp.ne.s32.totalorder %s206, %s207
      %p216 = scmp.eq.s32.totalorder %s44, 0
      %p217 = por %p215, %p216
      %p218 = scmp.ne.s32.totalorder %s206, %s207
      %p219 = scmp.eq.s32.totalorder %s45, 1
      %p220 = por %p218, %p219
      %p222 = scmp.ne.s32.totalorder %s207, %s221
      %p223 = scmp.eq.s32.totalorder %s45, 0
      %p224 = por %p222, %p223
      %s226 = sadd.s32 %s225, 1
      %p229 = scmp.eq.s32.totalorder %s39, 1
      %p230 = scmp.ne.s32.totalorder %s225, %s227
      %p231 = scmp.eq.s32.totalorder %s39, 0
      %p232 = por %p230, %p231
      %p233 = scmp.ne.s32.totalorder %s225, %s227
      %p234 = scmp.eq.s32.totalorder %s44, 1
      %p235 = por %p233, %p234
      %p236 = scmp.ne.s32.totalorder %s227, %s228
      %p237 = scmp.eq.s32.totalorder %s44, 0
      %p238 = por %p236, %p237
      %p239 = scmp.ne.s32.totalorder %s227, %s228
      %p240 = scmp.eq.s32.totalorder %s45, 1
      %p241 = por %p239, %p240
      %p243 = scmp.ne.s32.totalorder %s228, %s242
      %p244 = scmp.eq.s32.totalorder %s45, 0
      %p245 = por %p243, %p244
      %s247 = sadd.s32 %s246, 1
      %p250 = scmp.eq.s32.totalorder %s39, 1
      %p251 = scmp.ne.s32.totalorder %s246, %s248
      %p252 = scmp.eq.s32.totalorder %s39, 0
      %p253 = por %p251, %p252
      %p254 = scmp.ne.s32.totalorder %s246, %s248
      %p255 = scmp.eq.s32.totalorder %s44, 1
      %p256 = por %p254, %p255
      %p257 = scmp.ne.s32.totalorder %s248, %s249
      %p258 = scmp.eq.s32.totalorder %s44, 0
      %p259 = por %p257, %p258
      %p260 = scmp.ne.s32.totalorder %s248, %s249
      %p261 = scmp.eq.s32.totalorder %s45, 1
      %p262 = por %p260, %p261
      %p264 = scmp.ne.s32.totalorder %s249, %s263
      %p265 = scmp.eq.s32.totalorder %s45, 0
      %p266 = por %p264, %p265
      %s268 = sadd.s32 %s267, 1
      %p271 = scmp.eq.s32.totalorder %s39, 1
      %p272 = scmp.ne.s32.totalorder %s267, %s269
      %p273 = scmp.eq.s32.totalorder %s39, 0
      %p274 = por %p272, %p273
      %p275 = scmp.ne.s32.totalorder %s267, %s269
      %p276 = scmp.eq.s32.totalorder %s44, 1
      %p277 = por %p275, %p276
      %p278 = scmp.ne.s32.totalorder %s269, %s270
      %p279 = scmp.eq.s32.totalorder %s44, 0
      %p280 = por %p278, %p279
      %p281 = scmp.ne.s32.totalorder %s269, %s270
      %p282 = scmp.eq.s32.totalorder %s45, 1
      %p283 = por %p281, %p282
      %p285 = scmp.ne.s32.totalorder %s270, %s284
      %p286 = scmp.eq.s32.totalorder %s45, 0
      %p287 = por %p285, %p286
      %s289 = sadd.s32 %s288, 1
      %p292 = scmp.eq.s32.totalorder %s39, 1
      %p293 = scmp.ne.s32.totalorder %s288, %s290
      %p294 = scmp.eq.s32.totalorder %s39, 0
      %p295 = por %p293, %p294
      %p296 = scmp.ne.s32.totalorder %s288, %s290
      %p297 = scmp.eq.s32.totalorder %s44, 1
      %p298 = por %p296, %p297
      %p299 = scmp.ne.s32.totalorder %s290, %s291
      %p300 = scmp.eq.s32.totalorder %s44, 0
      %p301 = por %p299, %p300
      %p302 = scmp.ne.s32.totalorder %s290, %s291
      %p303 = scmp.eq.s32.totalorder %s45, 1
      %p304 = por %p302, %p303
      %p306 = scmp.ne.s32.totalorder %s291, %s305
      %p307 = scmp.eq.s32.totalorder %s45, 0
      %p308 = por %p306, %p307
      %s310 = sadd.s32 %s309, 1
      %p313 = scmp.eq.s32.totalorder %s39, 1
      %p314 = scmp.ne.s32.totalorder %s309, %s311
      %p315 = scmp.eq.s32.totalorder %s39, 0
      %p316 = por %p314, %p315
      %p317 = scmp.ne.s32.totalorder %s309, %s311
      %p318 = scmp.eq.s32.totalorder %s44, 1
      %p319 = por %p317, %p318
      %p320 = scmp.ne.s32.totalorder %s311, %s312
      %p321 = scmp.eq.s32.totalorder %s44, 0
      %p322 = por %p320, %p321
      %p323 = scmp.ne.s32.totalorder %s311, %s312
      %p324 = scmp.eq.s32.totalorder %s45, 1
      %p325 = por %p323, %p324
      %p327 = scmp.ne.s32.totalorder %s312, %s326
      %p328 = scmp.eq.s32.totalorder %s45, 0
      %p329 = por %p327, %p328
      %s331 = sadd.s32 %s330, 1
      %p334 = scmp.eq.s32.totalorder %s39, 1
      %p335 = scmp.ne.s32.totalorder %s330, %s332
      %p336 = scmp.eq.s32.totalorder %s39, 0
      %p337 = por %p335, %p336
      %p338 = scmp.ne.s32.totalorder %s330, %s332
      %p339 = scmp.eq.s32.totalorder %s44, 1
      %p340 = por %p338, %p339
      %p341 = scmp.ne.s32.totalorder %s332, %s333
      %p342 = scmp.eq.s32.totalorder %s44, 0
      %p343 = por %p341, %p342
      %p344 = scmp.ne.s32.totalorder %s332, %s333
      %p345 = scmp.eq.s32.totalorder %s45, 1
      %p346 = por %p344, %p345
      %p348 = scmp.ne.s32.totalorder %s333, %s347
      %p349 = scmp.eq.s32.totalorder %s45, 0
      %p350 = por %p348, %p349
      %s352 = sadd.s32 %s351, 1
      %p355 = scmp.eq.s32.totalorder %s39, 1
      %p356 = scmp.ne.s32.totalorder %s351, %s353
      %p357 = scmp.eq.s32.totalorder %s39, 0
      %p358 = por %p356, %p357
      %p359 = scmp.ne.s32.totalorder %s351, %s353
      %p360 = scmp.eq.s32.totalorder %s44, 1
      %p361 = por %p359, %p360
      %p362 = scmp.ne.s32.totalorder %s353, %s354
      %p363 = scmp.eq.s32.totalorder %s44, 0
      %p364 = por %p362, %p363
      %p365 = scmp.ne.s32.totalorder %s353, %s354
      %p366 = scmp.eq.s32.totalorder %s45, 1
      %p367 = por %p365, %p366
      %p369 = scmp.ne.s32.totalorder %s354, %s368
      %p370 = scmp.eq.s32.totalorder %s45, 0
      %p371 = por %p369, %p370
      %s373 = sadd.s32 %s372, 1
      %p376 = scmp.eq.s32.totalorder %s39, 1
      %p377 = scmp.ne.s32.totalorder %s372, %s374
      %p378 = scmp.eq.s32.totalorder %s39, 0
      %p379 = por %p377, %p378
      %p380 = scmp.ne.s32.totalorder %s372, %s374
      %p381 = scmp.eq.s32.totalorder %s44, 1
      %p382 = por %p380, %p381
      %p383 = scmp.ne.s32.totalorder %s374, %s375
      %p384 = scmp.eq.s32.totalorder %s44, 0
      %p385 = por %p383, %p384
      %p386 = scmp.ne.s32.totalorder %s374, %s375
      %p387 = scmp.eq.s32.totalorder %s45, 1
      %p388 = por %p386, %p387
      %p390 = scmp.ne.s32.totalorder %s375, %s389
      %p391 = scmp.eq.s32.totalorder %s45, 0
      %p392 = por %p390, %p391
      %s394 = sadd.s32 %s393, 1
      %p397 = scmp.eq.s32.totalorder %s39, 1
      %p398 = scmp.ne.s32.totalorder %s393, %s395
      %p399 = scmp.eq.s32.totalorder %s39, 0
      %p400 = por %p398, %p399
      %p401 = scmp.ne.s32.totalorder %s393, %s395
      %p402 = scmp.eq.s32.totalorder %s44, 1
      %p403 = por %p401, %p402
      %p404 = scmp.ne.s32.totalorder %s395, %s396
      %p405 = scmp.eq.s32.totalorder %s44, 0
      %p406 = por %p404, %p405
      %p407 = scmp.ne.s32.totalorder %s395, %s396
      %p408 = scmp.eq.s32.totalorder %s45, 1
      %p409 = por %p407, %p408
      %p411 = scmp.ne.s32.totalorder %s396, %s410
      %p412 = scmp.eq.s32.totalorder %s45, 0
      %p413 = por %p411, %p412
      %s415 = sadd.s32 %s414, 1
      %p418 = scmp.eq.s32.totalorder %s39, 1
      %p419 = scmp.ne.s32.totalorder %s414, %s416
      %p420 = scmp.eq.s32.totalorder %s39, 0
      %p421 = por %p419, %p420
      %p422 = scmp.ne.s32.totalorder %s414, %s416
      %p423 = scmp.eq.s32.totalorder %s44, 1
      %p424 = por %p422, %p423
      %p425 = scmp.ne.s32.totalorder %s416, %s417
      %p426 = scmp.eq.s32.totalorder %s44, 0
      %p427 = por %p425, %p426
      %p428 = scmp.ne.s32.totalorder %s416, %s417
      %p429 = scmp.eq.s32.totalorder %s45, 1
      %p430 = por %p428, %p429
      %p432 = scmp.ne.s32.totalorder %s417, %s431
      %p433 = scmp.eq.s32.totalorder %s45, 0
      %p434 = por %p432, %p433
      %s436 = sadd.s32 %s435, 1
      %p439 = scmp.eq.s32.totalorder %s39, 1
      %p440 = scmp.ne.s32.totalorder %s435, %s437
      %p441 = scmp.eq.s32.totalorder %s39, 0
      %p442 = por %p440, %p441
      %p443 = scmp.ne.s32.totalorder %s435, %s437
      %p444 = scmp.eq.s32.totalorder %s44, 1
      %p445 = por %p443, %p444
      %p446 = scmp.ne.s32.totalorder %s437, %s438
      %p447 = scmp.eq.s32.totalorder %s44, 0
      %p448 = por %p446, %p447
      %p449 = scmp.ne.s32.totalorder %s437, %s438
      %p450 = scmp.eq.s32.totalorder %s45, 1
      %p451 = por %p449, %p450
      %p453 = scmp.ne.s32.totalorder %s438, %s452
      %p454 = scmp.eq.s32.totalorder %s45, 0
      %p455 = por %p453, %p454
      %s457 = sadd.s32 %s456, 1
      %p460 = scmp.eq.s32.totalorder %s39, 1
      %p461 = scmp.ne.s32.totalorder %s456, %s458
      %p462 = scmp.eq.s32.totalorder %s39, 0
      %p463 = por %p461, %p462
      %p464 = scmp.ne.s32.totalorder %s456, %s458
      %p465 = scmp.eq.s32.totalorder %s44, 1
      %p466 = por %p464, %p465
      %p467 = scmp.ne.s32.totalorder %s458, %s459
      %p468 = scmp.eq.s32.totalorder %s44, 0
      %p469 = por %p467, %p468
      %p470 = scmp.ne.s32.totalorder %s458, %s459
      %p471 = scmp.eq.s32.totalorder %s45, 1
      %p472 = por %p470, %p471
      %p474 = scmp.ne.s32.totalorder %s459, %s473
      %p475 = scmp.eq.s32.totalorder %s45, 0
      %p476 = por %p474, %p475
      %s478 = sadd.s32 %s477, 1
      %p481 = scmp.eq.s32.totalorder %s39, 1
      %p482 = scmp.ne.s32.totalorder %s477, %s479
      %p483 = scmp.eq.s32.totalorder %s39, 0
      %p484 = por %p482, %p483
      %p485 = scmp.ne.s32.totalorder %s477, %s479
      %p486 = scmp.eq.s32.totalorder %s44, 1
      %p487 = por %p485, %p486
      %p488 = scmp.ne.s32.totalorder %s479, %s480
      %p489 = scmp.eq.s32.totalorder %s44, 0
      %p490 = por %p488, %p489
      %p491 = scmp.ne.s32.totalorder %s479, %s480
      %p492 = scmp.eq.s32.totalorder %s45, 1
      %p493 = por %p491, %p492
      %p495 = scmp.ne.s32.totalorder %s480, %s494
      %p496 = scmp.eq.s32.totalorder %s45, 0
      %p497 = por %p495, %p496
      %s499 = sadd.s32 %s498, 1
      %p502 = scmp.eq.s32.totalorder %s39, 1
      %p503 = scmp.ne.s32.totalorder %s498, %s500
      %p504 = scmp.eq.s32.totalorder %s39, 0
      %p505 = por %p503, %p504
      %p506 = scmp.ne.s32.totalorder %s498, %s500
      %p507 = scmp.eq.s32.totalorder %s44, 1
      %p508 = por %p506, %p507
      %p509 = scmp.ne.s32.totalorder %s500, %s501
      %p510 = scmp.eq.s32.totalorder %s44, 0
      %p511 = por %p509, %p510
      %p512 = scmp.ne.s32.totalorder %s500, %s501
      %p513 = scmp.eq.s32.totalorder %s45, 1
      %p514 = por %p512, %p513
      %p516 = scmp.ne.s32.totalorder %s501, %s515
      %p517 = scmp.eq.s32.totalorder %s45, 0
      %p518 = por %p516, %p517
      %s520 = sadd.s32 %s519, 1
      %p523 = scmp.eq.s32.totalorder %s39, 1
      %p524 = scmp.ne.s32.totalorder %s519, %s521
      %p525 = scmp.eq.s32.totalorder %s39, 0
      %p526 = por %p524, %p525
      %p527 = scmp.ne.s32.totalorder %s519, %s521
      %p528 = scmp.eq.s32.totalorder %s44, 1
      %p529 = por %p527, %p528
      %p530 = scmp.ne.s32.totalorder %s521, %s522
      %p531 = scmp.eq.s32.totalorder %s44, 0
      %p532 = por %p530, %p531
      %p533 = scmp.ne.s32.totalorder %s521, %s522
      %p534 = scmp.eq.s32.totalorder %s45, 1
      %p535 = por %p533, %p534
      %p537 = scmp.ne.s32.totalorder %s522, %s536
      %p538 = scmp.eq.s32.totalorder %s45, 0
      %p539 = por %p537, %p538
      %s541 = sadd.s32 %s540, 1
      %p544 = scmp.eq.s32.totalorder %s39, 1
      %p545 = scmp.ne.s32.totalorder %s540, %s542
      %p546 = scmp.eq.s32.totalorder %s39, 0
      %p547 = por %p545, %p546
      %p548 = scmp.ne.s32.totalorder %s540, %s542
      %p549 = scmp.eq.s32.totalorder %s44, 1
      %p550 = por %p548, %p549
      %p551 = scmp.ne.s32.totalorder %s542, %s543
      %p552 = scmp.eq.s32.totalorder %s44, 0
      %p553 = por %p551, %p552
      %p554 = scmp.ne.s32.totalorder %s542, %s543
      %p555 = scmp.eq.s32.totalorder %s45, 1
      %p556 = por %p554, %p555
      %p558 = scmp.ne.s32.totalorder %s543, %s557
      %p559 = scmp.eq.s32.totalorder %s45, 0
      %p560 = por %p558, %p559
      %s562 = sadd.s32 %s561, 1
      %p565 = scmp.eq.s32.totalorder %s39, 1
      %p566 = scmp.ne.s32.totalorder %s561, %s563
      %p567 = scmp.eq.s32.totalorder %s39, 0
      %p568 = por %p566, %p567
      %p569 = scmp.ne.s32.totalorder %s561, %s563
      %p570 = scmp.eq.s32.totalorder %s44, 1
      %p571 = por %p569, %p570
      %p572 = scmp.ne.s32.totalorder %s563, %s564
      %p573 = scmp.eq.s32.totalorder %s44, 0
      %p574 = por %p572, %p573
      %p575 = scmp.ne.s32.totalorder %s563, %s564
      %p576 = scmp.eq.s32.totalorder %s45, 1
      %p577 = por %p575, %p576
      %p579 = scmp.ne.s32.totalorder %s564, %s578
      %p580 = scmp.eq.s32.totalorder %s45, 0
      %p581 = por %p579, %p580
      %s583 = sadd.s32 %s582, 1
      %p586 = scmp.eq.s32.totalorder %s39, 1
      %p587 = scmp.ne.s32.totalorder %s582, %s584
      %p588 = scmp.eq.s32.totalorder %s39, 0
      %p589 = por %p587, %p588
      %p590 = scmp.ne.s32.totalorder %s582, %s584
      %p591 = scmp.eq.s32.totalorder %s44, 1
      %p592 = por %p590, %p591
      %p593 = scmp.ne.s32.totalorder %s584, %s585
      %p594 = scmp.eq.s32.totalorder %s44, 0
      %p595 = por %p593, %p594
      %p596 = scmp.ne.s32.totalorder %s584, %s585
      %p597 = scmp.eq.s32.totalorder %s45, 1
      %p598 = por %p596, %p597
      %p600 = scmp.ne.s32.totalorder %s585, %s599
      %p601 = scmp.eq.s32.totalorder %s45, 0
      %p602 = por %p600, %p601
      %s603 = ssub.s32 %s39, %s46
      %p604 = scmp.eq.s32.totalorder %s603, 0
      %s606 = sadd.s32 %s605, 1
      %s607 = scalar_select %p604, %s605, %s606
      %p610 = pneg %p604
      %p611 = scmp.eq.s32.totalorder %s39, 1
      %p612 = por %p610, %p611
      %p613 = scmp.ne.s32.totalorder %s605, %s608
      %p614 = scmp.eq.s32.totalorder %s39, 0
      %p615 = por %p613, %p614
      %p616 = scmp.ne.s32.totalorder %s605, %s608
      %p617 = scmp.eq.s32.totalorder %s44, 1
      %p618 = por %p616, %p617
      %p619 = scmp.ne.s32.totalorder %s608, %s609
      %p620 = scmp.eq.s32.totalorder %s44, 0
      %p621 = por %p619, %p620
      %p622 = scmp.ne.s32.totalorder %s608, %s609
      %p623 = scmp.eq.s32.totalorder %s45, 1
      %p624 = por %p622, %p623
      %p626 = scmp.ne.s32.totalorder %s609, %s625
      %p627 = scmp.eq.s32.totalorder %s45, 0
      %p628 = por %p626, %p627
      %s629 = ssub.s32 %s39, %s46
      %p630 = scmp.eq.s32.totalorder %s629, 0
      %s632 = sadd.s32 %s631, 1
      %s633 = scalar_select %p630, %s631, %s632
      %p636 = pneg %p630
      %p637 = scmp.eq.s32.totalorder %s39, 1
      %p638 = por %p636, %p637
      %p639 = scmp.ne.s32.totalorder %s631, %s634
      %p640 = scmp.eq.s32.totalorder %s39, 0
      %p641 = por %p639, %p640
      %p642 = scmp.ne.s32.totalorder %s631, %s634
      %p643 = scmp.eq.s32.totalorder %s44, 1
      %p644 = por %p642, %p643
      %p645 = scmp.ne.s32.totalorder %s634, %s635
      %p646 = scmp.eq.s32.totalorder %s44, 0
      %p647 = por %p645, %p646
      %p648 = scmp.ne.s32.totalorder %s634, %s635
      %p649 = scmp.eq.s32.totalorder %s45, 1
      %p650 = por %p648, %p649
      %p652 = scmp.ne.s32.totalorder %s635, %s651
      %p653 = scmp.eq.s32.totalorder %s45, 0
      %p654 = por %p652, %p653
      %p655 = scmp.le.s32.totalorder 1, %s39
      %p656 = scmp.lt.s32.totalorder %s39, 3
      %p657 = pnand %p655, %p656
      %p658 = pneg %p657
      // Predicated region
      $region9: #{premodel_forward.1} parent=5 // pred_check
        _
      $region10: #{premodel_forward.1} parent=5 // pred_check_branch
        %660 = sbr.rel (%p657) target = $region12
      $region11: #{premodel_forward.1} parent=5 // pred_region
        %s661 = ssub.s32 %s39, 1
        // Predicated region
        $region13: #{premodel_forward.1} parent=11 // pred_check
          %p662 = pneg %p112
        $region14: #{premodel_forward.1} parent=11 // pred_check_branch
          %664 = sbr.rel (%p662) target = $region16
        $region15: #{premodel_forward.1} parent=11 // pred_region
          _
        $region16: #{premodel_forward.1} parent=11 // pred_fallthru
          _
        // Predicated region
        $region17: #{premodel_forward.1} parent=11 // pred_check
          %p665 = pneg %p133
        $region18: #{premodel_forward.1} parent=11 // pred_check_branch
          %667 = sbr.rel (%p665) target = $region20
        $region19: #{premodel_forward.1} parent=11 // pred_region
          _
        $region20: #{premodel_forward.1} parent=11 // pred_fallthru
          _
        // Predicated region
        $region21: #{premodel_forward.1} parent=11 // pred_check
          %p668 = pneg %p154
        $region22: #{premodel_forward.1} parent=11 // pred_check_branch
          %670 = sbr.rel (%p668) target = $region24
        $region23: #{premodel_forward.1} parent=11 // pred_region
          _
        $region24: #{premodel_forward.1} parent=11 // pred_fallthru
          _
        // Predicated region
        $region25: #{premodel_forward.1} parent=11 // pred_check
          %p671 = pneg %p175
        $region26: #{premodel_forward.1} parent=11 // pred_check_branch
          %673 = sbr.rel (%p671) target = $region28
        $region27: #{premodel_forward.1} parent=11 // pred_region
          _
        $region28: #{premodel_forward.1} parent=11 // pred_fallthru
          _
        // Predicated region
        $region29: #{premodel_forward.1} parent=11 // pred_check
          %p674 = pneg %p196
        $region30: #{premodel_forward.1} parent=11 // pred_check_branch
          %676 = sbr.rel (%p674) target = $region32
        $region31: #{premodel_forward.1} parent=11 // pred_region
          _
        $region32: #{premodel_forward.1} parent=11 // pred_fallthru
          _
        // Predicated region
        $region33: #{premodel_forward.1} parent=11 // pred_check
          %p677 = pneg %p217
        $region34: #{premodel_forward.1} parent=11 // pred_check_branch
          %679 = sbr.rel (%p677) target = $region36
        $region35: #{premodel_forward.1} parent=11 // pred_region
          _
        $region36: #{premodel_forward.1} parent=11 // pred_fallthru
          _
        // Predicated region
        $region37: #{premodel_forward.1} parent=11 // pred_check
          %p680 = pneg %p238
        $region38: #{premodel_forward.1} parent=11 // pred_check_branch
          %682 = sbr.rel (%p680) target = $region40
        $region39: #{premodel_forward.1} parent=11 // pred_region
          _
        $region40: #{premodel_forward.1} parent=11 // pred_fallthru
          _
        // Predicated region
        $region41: #{premodel_forward.1} parent=11 // pred_check
          %p683 = pneg %p259
        $region42: #{premodel_forward.1} parent=11 // pred_check_branch
          %685 = sbr.rel (%p683) target = $region44
        $region43: #{premodel_forward.1} parent=11 // pred_region
          _
        $region44: #{premodel_forward.1} parent=11 // pred_fallthru
          _
        // Predicated region
        $region45: #{premodel_forward.1} parent=11 // pred_check
          %p686 = pneg %p280
        $region46: #{premodel_forward.1} parent=11 // pred_check_branch
          %688 = sbr.rel (%p686) target = $region48
        $region47: #{premodel_forward.1} parent=11 // pred_region
          _
        $region48: #{premodel_forward.1} parent=11 // pred_fallthru
          _
        // Predicated region
        $region49: #{premodel_forward.1} parent=11 // pred_check
          %p689 = pneg %p301
        $region50: #{premodel_forward.1} parent=11 // pred_check_branch
          %691 = sbr.rel (%p689) target = $region52
        $region51: #{premodel_forward.1} parent=11 // pred_region
          _
        $region52: #{premodel_forward.1} parent=11 // pred_fallthru
          _
        // Predicated region
        $region53: #{premodel_forward.1} parent=11 // pred_check
          %p692 = pneg %p322
        $region54: #{premodel_forward.1} parent=11 // pred_check_branch
          %694 = sbr.rel (%p692) target = $region56
        $region55: #{premodel_forward.1} parent=11 // pred_region
          _
        $region56: #{premodel_forward.1} parent=11 // pred_fallthru
          _
        // Predicated region
        $region57: #{premodel_forward.1} parent=11 // pred_check
          %p695 = pneg %p343
        $region58: #{premodel_forward.1} parent=11 // pred_check_branch
          %697 = sbr.rel (%p695) target = $region60
        $region59: #{premodel_forward.1} parent=11 // pred_region
          _
        $region60: #{premodel_forward.1} parent=11 // pred_fallthru
          _
        // Predicated region
        $region61: #{premodel_forward.1} parent=11 // pred_check
          %p698 = pneg %p364
        $region62: #{premodel_forward.1} parent=11 // pred_check_branch
          %700 = sbr.rel (%p698) target = $region64
        $region63: #{premodel_forward.1} parent=11 // pred_region
          _
        $region64: #{premodel_forward.1} parent=11 // pred_fallthru
          _
        // Predicated region
        $region65: #{premodel_forward.1} parent=11 // pred_check
          %p701 = pneg %p385
        $region66: #{premodel_forward.1} parent=11 // pred_check_branch
          %703 = sbr.rel (%p701) target = $region68
        $region67: #{premodel_forward.1} parent=11 // pred_region
          _
        $region68: #{premodel_forward.1} parent=11 // pred_fallthru
          _
        // Predicated region
        $region69: #{premodel_forward.1} parent=11 // pred_check
          %p704 = pneg %p406
        $region70: #{premodel_forward.1} parent=11 // pred_check_branch
          %706 = sbr.rel (%p704) target = $region72
        $region71: #{premodel_forward.1} parent=11 // pred_region
          _
        $region72: #{premodel_forward.1} parent=11 // pred_fallthru
          _
        // Predicated region
        $region73: #{premodel_forward.1} parent=11 // pred_check
          %p707 = pneg %p427
        $region74: #{premodel_forward.1} parent=11 // pred_check_branch
          %709 = sbr.rel (%p707) target = $region76
        $region75: #{premodel_forward.1} parent=11 // pred_region
          _
        $region76: #{premodel_forward.1} parent=11 // pred_fallthru
          _
        // Predicated region
        $region77: #{premodel_forward.1} parent=11 // pred_check
          %p710 = pneg %p448
        $region78: #{premodel_forward.1} parent=11 // pred_check_branch
          %712 = sbr.rel (%p710) target = $region80
        $region79: #{premodel_forward.1} parent=11 // pred_region
          _
        $region80: #{premodel_forward.1} parent=11 // pred_fallthru
          _
        // Predicated region
        $region81: #{premodel_forward.1} parent=11 // pred_check
          %p713 = pneg %p469
        $region82: #{premodel_forward.1} parent=11 // pred_check_branch
          %715 = sbr.rel (%p713) target = $region84
        $region83: #{premodel_forward.1} parent=11 // pred_region
          _
        $region84: #{premodel_forward.1} parent=11 // pred_fallthru
          _
        // Predicated region
        $region85: #{premodel_forward.1} parent=11 // pred_check
          %p716 = pneg %p490
        $region86: #{premodel_forward.1} parent=11 // pred_check_branch
          %718 = sbr.rel (%p716) target = $region88
        $region87: #{premodel_forward.1} parent=11 // pred_region
          _
        $region88: #{premodel_forward.1} parent=11 // pred_fallthru
          _
        // Predicated region
        $region89: #{premodel_forward.1} parent=11 // pred_check
          %p719 = pneg %p511
        $region90: #{premodel_forward.1} parent=11 // pred_check_branch
          %721 = sbr.rel (%p719) target = $region92
        $region91: #{premodel_forward.1} parent=11 // pred_region
          _
        $region92: #{premodel_forward.1} parent=11 // pred_fallthru
          _
        // Predicated region
        $region93: #{premodel_forward.1} parent=11 // pred_check
          %p722 = pneg %p532
        $region94: #{premodel_forward.1} parent=11 // pred_check_branch
          %724 = sbr.rel (%p722) target = $region96
        $region95: #{premodel_forward.1} parent=11 // pred_region
          _
        $region96: #{premodel_forward.1} parent=11 // pred_fallthru
          _
        // Predicated region
        $region97: #{premodel_forward.1} parent=11 // pred_check
          %p725 = pneg %p553
        $region98: #{premodel_forward.1} parent=11 // pred_check_branch
          %727 = sbr.rel (%p725) target = $region100
        $region99: #{premodel_forward.1} parent=11 // pred_region
          _
        $region100: #{premodel_forward.1} parent=11 // pred_fallthru
          _
        // Predicated region
        $region101: #{premodel_forward.1} parent=11 // pred_check
          %p728 = pneg %p574
        $region102: #{premodel_forward.1} parent=11 // pred_check_branch
          %730 = sbr.rel (%p728) target = $region104
        $region103: #{premodel_forward.1} parent=11 // pred_region
          _
        $region104: #{premodel_forward.1} parent=11 // pred_fallthru
          _
        // Predicated region
        $region105: #{premodel_forward.1} parent=11 // pred_check
          %p731 = pneg %p595
        $region106: #{premodel_forward.1} parent=11 // pred_check_branch
          %733 = sbr.rel (%p731) target = $region108
        $region107: #{premodel_forward.1} parent=11 // pred_region
          _
        $region108: #{premodel_forward.1} parent=11 // pred_fallthru
          _
      $region12: #{premodel_forward.1} parent=5 // pred_fallthru
        _
      %p734 = scmp.lt.s32.totalorder %s39, 2
      // Predicated region
      $region109: #{premodel_forward.1} parent=5 // pred_check
        %p735 = pneg %p734
      $region110: #{premodel_forward.1} parent=5 // pred_check_branch
        %737 = sbr.rel (%p735) target = $region112
      $region111: #{premodel_forward.1} parent=5 // pred_region
        // Predicated region
        $region113: #{premodel_forward.1} parent=111 // pred_check
          %p738 = pneg %p59
        $region114: #{premodel_forward.1} parent=111 // pred_check_branch
          %740 = sbr.rel (%p738) target = $region116
        $region115: #{premodel_forward.1} parent=111 // pred_region
          %p741 = scmp.lt.s32.totalorder %s39, 1
          %s742 = scalar_select %p741, %s39, 1
          %s743 = smul.addr %s742, 2
          %s744 = smul.addr %s743, 8
          %s745 = scalar_lea.vmem %s0, %s744
        $region116: #{premodel_forward.1} parent=111 // pred_fallthru
          _
        // Predicated region
        $region117: #{premodel_forward.1} parent=111 // pred_check
          %p746 = pneg %p85
        $region118: #{premodel_forward.1} parent=111 // pred_check_branch
          %748 = sbr.rel (%p746) target = $region120
        $region119: #{premodel_forward.1} parent=111 // pred_region
          %p749 = scmp.lt.s32.totalorder %s39, 1
          %s750 = scalar_select %p749, %s39, 1
          %s751 = smul.addr %s750, 2
          %s752 = smul.addr %s751, 8
          %s753 = scalar_lea.vmem %s1, %s752
        $region120: #{premodel_forward.1} parent=111 // pred_fallthru
          _
      $region112: #{premodel_forward.1} parent=5 // pred_fallthru
        _
      %p754 = scmp.le.s32.totalorder 1, %s39
      %p755 = scmp.lt.s32.totalorder %s39, 3
      %p756 = pnand %p754, %p755
      %p757 = pneg %p756
      // Predicated region
      $region121: #{premodel_forward.1} parent=5 // pred_check
        _
      $region122: #{premodel_forward.1} parent=5 // pred_check_branch
        %759 = sbr.rel (%p756) target = $region124
      $region123: #{premodel_forward.1} parent=5 // pred_region
        %s760 = ssub.s32 %s39, 1
        %p761 = scmp.lt.s32.totalorder %s44, 1
        %s762 = scalar_select %p761, %s44, 1
        %s763 = smul.addr %s762, 2
        %s764 = smul.addr %s763, 8
        %s765 = scalar_lea.vmem %s0, %s764
        %p766 = pneg %p65
        %p767 = pneg %p62
        %p768 = scmp.lt.s32.totalorder %s44, 1
        %s769 = scalar_select %p768, %s44, 1
        %s770 = smul.addr %s769, 2
        %s771 = smul.addr %s770, 8
        %s772 = scalar_lea.vmem %s1, %s771
        %p773 = pneg %p91
        %p774 = pneg %p88
        %p775 = pneg %p112
        %p776 = pneg %p109
        %p777 = pneg %p133
        %p778 = pneg %p130
        %p779 = pneg %p154
        %p780 = pneg %p151
        %p781 = pneg %p175
        %p782 = pneg %p172
        %p783 = pneg %p196
        %p784 = pneg %p193
        %p785 = pneg %p217
        %p786 = pneg %p214
        %p787 = pneg %p238
        %p788 = pneg %p235
        %p789 = pneg %p259
        %p790 = pneg %p256
        %p791 = pneg %p280
        %p792 = pneg %p277
        %p793 = pneg %p301
        %p794 = pneg %p298
        %p795 = pneg %p322
        %p796 = pneg %p319
        %p797 = pneg %p343
        %p798 = pneg %p340
        %p799 = pneg %p364
        %p800 = pneg %p361
        %p801 = pneg %p385
        %p802 = pneg %p382
        %p803 = pneg %p406
        %p804 = pneg %p403
        %p805 = pneg %p427
        %p806 = pneg %p424
        %p807 = pneg %p448
        %p808 = pneg %p445
        %p809 = pneg %p469
        %p810 = pneg %p466
        %p811 = pneg %p490
        %p812 = pneg %p487
        %p813 = pneg %p511
        %p814 = pneg %p508
        %p815 = pneg %p532
        %p816 = pneg %p529
        %p817 = pneg %p553
        %p818 = pneg %p550
        %p819 = pneg %p574
        %p820 = pneg %p571
        %p821 = pneg %p595
        %p822 = pneg %p592
        %p823 = pneg %p621
        %p824 = pneg %p618
        %p825 = scmp.lt.s32.totalorder %s44, 1
        %s826 = scalar_select %p825, %s44, 1
        %s827 = smul.addr %s826, 2
        %s828 = smul.addr %s827, 8
        %s829 = scalar_lea.vmem %s26, %s828
        %p830 = pneg %p647
        %p831 = pneg %p644
        %s832 = sand.u32 %s634, 1
        %s833 = scalar_lea.sflag [#allocation4], %s832
        %s834 = sand.u32 %s634, 1
        %s835 = smul.addr %s834, 16
        %s836 = scalar_lea.vmem [#allocation3], %s835
        %p837 = scmp.lt.s32.totalorder %s44, 1
        %s838 = scalar_select %p837, %s44, 1
        %s839 = smul.addr %s838, 2
        %s840 = smul.addr %s839, 8
        %s841 = scalar_lea.vmem %s0, %s840
        %p842 = scmp.lt.s32.totalorder %s44, 1
        %s843 = scalar_select %p842, %s44, 1
        %s844 = smul.addr %s843, 2
        %s845 = smul.addr %s844, 8
        %s846 = scalar_lea.vmem %s1, %s845
        %p847 = scmp.lt.s32.totalorder %s44, 1
        %s848 = scalar_select %p847, %s44, 1
        %s849 = smul.addr %s848, 2
        %s850 = smul.addr %s849, 8
        %s851 = scalar_lea.vmem %s26, %s850
        %v852 = vld [vmem:[%s841] sm:$0xff]
        %v853 = vld [vmem:[%s841 + $0x8] sm:$0xff]
        %v854 = vld [vmem:[%s846] sm:$0xff]
        %v855 = vld [vmem:[%s846 + $0x8] sm:$0xff]
        %v856 = vld [vmem:[%s2] sm:$0xff]
        %v857 = vld [vmem:[%s2 + $0x8] sm:$0x3]
        %v858 = vld [vmem:[%s3] sm:$0x1]
        %v860 = vlaneseq
        %v861 = vshrl.u32 %v860, 7
        %v862 = vsub.s32 0, %v861
        %v863 = vrot.slane %v858, %v862
        %vm865 = vcmask 80896
        %v867 = vsel %vm865, %v854, 0
        %v870 = vsel %vm865, %v855, 0
        %vm872 = vcmask 1041408
        %v874 = vsel %vm872, %v857, 0
        %876 = vmatprep.subr.mxu0 0.0
        %877 = vmatpush1.msra.mxu0 0.0
        %878 = vmatprep.subr.mxu0 0.0
        %879 = vmatpush1.msra.mxu0 0.0
        %880 = vmatprep.subr.mxu0 0.0
        %881 = vmatpush1.msra.mxu0 0.0
        %882 = vmatprep.subr.mxu0 0.0
        %883 = vmatpush1.msra.mxu0 0.0
        %884 = vmatprep.subr.mxu0 0.0
        %885 = vmatpush1.msra.mxu0 0.0
        %886 = vmatprep.subr.mxu0 0.0
        %887 = vmatpush1.msra.mxu0 0.0
        %888 = vmatprep.subr.mxu0 0.0
        %889 = vmatpush1.msra.mxu0 0.0
        %890 = vmatprep.subr.mxu0 0.0
        %891 = vmatpush1.msra.mxu0 0.0
        %892 = vmatprep.subr.mxu0 0.0
        %893 = vmatpush1.msra.mxu0 0.0
        %894 = vmatprep.subr.mxu0 0.0
        %895 = vmatpush1.msra.mxu0 0.0
        %896 = vmatprep.subr.mxu0 0.0
        %897 = vmatpush1.msra.mxu0 0.0
        %898 = vmatprep.subr.mxu0 0.0
        %899 = vmatpush1.msra.mxu0 0.0
        %900 = vmatprep.subr.mxu0 0.0
        %901 = vmatpush1.msra.mxu0 0.0
        %902 = vmatprep.subr.mxu0 0.0
        %903 = vmatpush1.msra.mxu0 0.0
        %904 = vmatprep.subr.mxu0 0.0
        %905 = vmatpush1.msra.mxu0 %v874
        %906 = vmatprep.subr.mxu0 0.0
        %907 = vmatpush1.msra.mxu0 %v856
        %908 = vmatprep.subr.mxu0 0.0
        %909 = vmatpush2.msra.mxu0 0.0
        %910 = vmatprep.subr.mxu0 0.0
        %911 = vmatpush2.msra.mxu0 0.0
        %912 = vmatprep.subr.mxu0 0.0
        %913 = vmatpush2.msra.mxu0 0.0
        %914 = vmatprep.subr.mxu0 0.0
        %915 = vmatpush2.msra.mxu0 0.0
        %916 = vmatprep.subr.mxu0 0.0
        %917 = vmatpush2.msra.mxu0 0.0
        %918 = vmatprep.subr.mxu0 0.0
        %919 = vmatpush2.msra.mxu0 0.0
        %920 = vmatprep.subr.mxu0 0.0
        %921 = vmatpush2.msra.mxu0 0.0
        %922 = vmatprep.subr.mxu0 0.0
        %923 = vmatpush2.msra.mxu0 0.0
        %924 = vmatprep.subr.mxu0 0.0
        %925 = vmatpush2.msra.mxu0 0.0
        %926 = vmatprep.subr.mxu0 0.0
        %927 = vmatpush2.msra.mxu0 0.0
        %928 = vmatprep.subr.mxu0 0.0
        %929 = vmatpush2.msra.mxu0 0.0
        %930 = vmatprep.subr.mxu0 0.0
        %931 = vmatpush2.msra.mxu0 0.0
        %932 = vmatprep.subr.mxu0 0.0
        %933 = vmatpush2.msra.mxu0 0.0
        %934 = vmatprep.subr.mxu0 0.0
        %935 = vmatpush2.msra.mxu0 0.0
        %936 = vmatprep.subr.mxu0 0.0
        %937 = vmatpush2.msra.mxu0 0.0
        %938 = vmatprep.subr.mxu0 0.0
        %939 = vmatpush2.msra.mxu0 0.0
        %940 = vmatprep.mubr.f32.mxu0 0.0
        %941 = vmatmul.mubr.f32.gmra.mxu0 %v867
        %v942 = vpop.f32.mrf.mxu0
        %v943 = vadd.f32 %v863, %v942
        %v944 = vpop.f32.mrf.mxu0
        %945 = vmatprep.mubr.f32.mxu0 0.0
        %946 = vmatmul.mubr.f32.gmra.mxu0 %v870
        %v947 = vpop.f32.mrf.mxu0
        %v948 = vadd.f32 %v863, %v947
        %v949 = vpop.f32.mrf.mxu0
        %950 = vdwg.mxu0
        %vm951 = vcmp.gt.f32.partialorder %v943, 0.0
        %vm952 = vcmp.gt.f32.partialorder %v948, 0.0
        %v953 = vmul.f32 %v943, 0.05
        %v954 = vmul.f32 %v948, 0.05
        %v955 = vsel %vm951, %v943, %v953
        %v956 = vsel %vm952, %v948, %v954
        %v957 = vld [vmem:[%s4] sm:$0xff]
        %v958 = vld [vmem:[%s4 + $0x8] sm:$0xff]
        %v959 = vld [vmem:[%s4 + $0x10] sm:$0xff]
        %v960 = vld [vmem:[%s4 + $0x18] sm:$0xff]
        %v961 = vld [vmem:[%s4 + $0x20] sm:$0xff]
        %v962 = vld [vmem:[%s4 + $0x28] sm:$0xff]
        %v963 = vld [vmem:[%s4 + $0x30] sm:$0xff]
        %v964 = vld [vmem:[%s4 + $0x38] sm:$0xff]
        %v965 = vld [vmem:[%s5] sm:$0x1]
        %v967 = vlaneseq
        %v968 = vshrl.u32 %v967, 7
        %v969 = vsub.s32 0, %v968
        %v970 = vrot.slane %v965, %v969
        %vm972 = vcmask 523264
        %v974 = vsel %vm972, %v955, 0
        %v977 = vsel %vm972, %v956, 0
        %979 = vmatprep.subr.mxu0 0.0
        %980 = vmatpush1.msra.mxu0 0.0
        %981 = vmatprep.subr.mxu0 0.0
        %982 = vmatpush1.msra.mxu0 0.0
        %983 = vmatprep.subr.mxu0 0.0
        %984 = vmatpush1.msra.mxu0 0.0
        %985 = vmatprep.subr.mxu0 0.0
        %986 = vmatpush1.msra.mxu0 0.0
        %987 = vmatprep.subr.mxu0 0.0
        %988 = vmatpush1.msra.mxu0 0.0
        %989 = vmatprep.subr.mxu0 0.0
        %990 = vmatpush1.msra.mxu0 0.0
        %991 = vmatprep.subr.mxu0 0.0
        %992 = vmatpush1.msra.mxu0 0.0
        %993 = vmatprep.subr.mxu0 0.0
        %994 = vmatpush1.msra.mxu0 0.0
        %995 = vmatprep.subr.mxu0 0.0
        %996 = vmatpush1.msra.mxu0 %v964
        %997 = vmatprep.subr.mxu0 0.0
        %998 = vmatpush1.msra.mxu0 %v963
        %999 = vmatprep.subr.mxu0 0.0
        %1000 = vmatpush1.msra.mxu0 %v962
        %1001 = vmatprep.subr.mxu0 0.0
        %1002 = vmatpush1.msra.mxu0 %v961
        %1003 = vmatprep.subr.mxu0 0.0
        %1004 = vmatpush1.msra.mxu0 %v960
        %1005 = vmatprep.subr.mxu0 0.0
        %1006 = vmatpush1.msra.mxu0 %v959
        %1007 = vmatprep.subr.mxu0 0.0
        %1008 = vmatpush1.msra.mxu0 %v958
        %1009 = vmatprep.subr.mxu0 0.0
        %1010 = vmatpush1.msra.mxu0 %v957
        %1011 = vmatprep.subr.mxu0 0.0
        %1012 = vmatpush2.msra.mxu0 0.0
        %1013 = vmatprep.subr.mxu0 0.0
        %1014 = vmatpush2.msra.mxu0 0.0
        %1015 = vmatprep.subr.mxu0 0.0
        %1016 = vmatpush2.msra.mxu0 0.0
        %1017 = vmatprep.subr.mxu0 0.0
        %1018 = vmatpush2.msra.mxu0 0.0
        %1019 = vmatprep.subr.mxu0 0.0
        %1020 = vmatpush2.msra.mxu0 0.0
        %1021 = vmatprep.subr.mxu0 0.0
        %1022 = vmatpush2.msra.mxu0 0.0
        %1023 = vmatprep.subr.mxu0 0.0
        %1024 = vmatpush2.msra.mxu0 0.0
        %1025 = vmatprep.subr.mxu0 0.0
        %1026 = vmatpush2.msra.mxu0 0.0
        %1027 = vmatprep.subr.mxu0 0.0
        %1028 = vmatpush2.msra.mxu0 0.0
        %1029 = vmatprep.subr.mxu0 0.0
        %1030 = vmatpush2.msra.mxu0 0.0
        %1031 = vmatprep.subr.mxu0 0.0
        %1032 = vmatpush2.msra.mxu0 0.0
        %1033 = vmatprep.subr.mxu0 0.0
        %1034 = vmatpush2.msra.mxu0 0.0
        %1035 = vmatprep.subr.mxu0 0.0
        %1036 = vmatpush2.msra.mxu0 0.0
        %1037 = vmatprep.subr.mxu0 0.0
        %1038 = vmatpush2.msra.mxu0 0.0
        %1039 = vmatprep.subr.mxu0 0.0
        %1040 = vmatpush2.msra.mxu0 0.0
        %1041 = vmatprep.subr.mxu0 0.0
        %1042 = vmatpush2.msra.mxu0 0.0
        %1043 = vmatprep.mubr.f32.mxu0 0.0
        %1044 = vmatmul.mubr.f32.gmra.mxu0 %v974
        %v1045 = vpop.f32.mrf.mxu0
        %v1046 = vadd.f32 %v970, %v1045
        %v1047 = vpop.f32.mrf.mxu0
        %1048 = vmatprep.mubr.f32.mxu0 0.0
        %1049 = vmatmul.mubr.f32.gmra.mxu0 %v977
        %v1050 = vpop.f32.mrf.mxu0
        %v1051 = vadd.f32 %v970, %v1050
        %v1052 = vpop.f32.mrf.mxu0
        %1053 = vdwg.mxu0
        %vm1054 = vcmask 130048
        %v1055 = vsel %vm1054, %v852, 0.0
        %1056 = vadd.xlane.f32.xlu0 %v1055
        %v1057 = vpop.xlane.xlu0 %1056
        %v1058 = vsel %vm1054, %v853, 0.0
        %1059 = vadd.xlane.f32.xlu0 %v1058
        %v1060 = vpop.xlane.xlu0 %1059
        %v1061 = vmax.f32 %v1057, 1.0
        %v1062 = vmax.f32 %v1060, 1.0
        %v1063 = vadd.f32 %v1055, %v1058
        %v1064 = vrot.slane %v1063, 4
        %v1065 = vadd.f32 %v1063, %v1064
        %v1066 = vrot.slane %v1065, 2
        %v1067 = vadd.f32 %v1065, %v1066
        %v1068 = vrot.slane %v1067, 1
        %v1069 = vadd.f32 %v1067, %v1068
        %v1070 = vmax.f32 %v1069, 1.0
        %v1071 = vrsqrt.pop %v1061
        %v1072 = vrsqrt.pop %v1062
        %v1073 = vmul.f32 %v1071, %v852
        %v1074 = vmul.f32 %v1072, %v853
        %v1075 = vrsqrt.pop %v1070
        %v1076 = vmul.f32 %v1073, %v1075
        %v1077 = vmul.f32 %v1074, %v1075
        %v1079 = vsel %vm1054, %v1076, 0
        %v1082 = vsel %vm1054, %v1077, 0
        %1084 = vmatprep.subr.mxu0 0.0
        %1085 = vmatpush1.msra.mxu0 0.0
        %1086 = vmatprep.subr.mxu0 0.0
        %1087 = vmatpush1.msra.mxu0 0.0
        %1088 = vmatprep.subr.mxu0 0.0
        %1089 = vmatpush1.msra.mxu0 0.0
        %1090 = vmatprep.subr.mxu0 0.0
        %1091 = vmatpush1.msra.mxu0 0.0
        %1092 = vmatprep.subr.mxu0 0.0
        %1093 = vmatpush1.msra.mxu0 0.0
        %1094 = vmatprep.subr.mxu0 0.0
        %1095 = vmatpush1.msra.mxu0 0.0
        %1096 = vmatprep.subr.mxu0 0.0
        %1097 = vmatpush1.msra.mxu0 0.0
        %1098 = vmatprep.subr.mxu0 0.0
        %1099 = vmatpush1.msra.mxu0 0.0
        %1100 = vmatprep.subr.mxu0 0.0
        %1101 = vmatpush1.msra.mxu0 0.0
        %1102 = vmatprep.subr.mxu0 0.0
        %1103 = vmatpush1.msra.mxu0 0.0
        %1104 = vmatprep.subr.mxu0 0.0
        %1105 = vmatpush1.msra.mxu0 0.0
        %1106 = vmatprep.subr.mxu0 0.0
        %1107 = vmatpush1.msra.mxu0 0.0
        %1108 = vmatprep.subr.mxu0 0.0
        %1109 = vmatpush1.msra.mxu0 0.0
        %1110 = vmatprep.subr.mxu0 0.0
        %1111 = vmatpush1.msra.mxu0 0.0
        %1112 = vmatprep.subr.mxu0 0.0
        %1113 = vmatpush1.msra.mxu0 %v1051
        %1114 = vmatprep.subr.mxu0 0.0
        %1115 = vmatpush1.msra.mxu0 %v1046
        %1116 = vmatprep.subr.mxu0 0.0
        %1117 = vmatpush2.msra.mxu0 0.0
        %1118 = vmatprep.subr.mxu0 0.0
        %1119 = vmatpush2.msra.mxu0 0.0
        %1120 = vmatprep.subr.mxu0 0.0
        %1121 = vmatpush2.msra.mxu0 0.0
        %1122 = vmatprep.subr.mxu0 0.0
        %1123 = vmatpush2.msra.mxu0 0.0
        %1124 = vmatprep.subr.mxu0 0.0
        %1125 = vmatpush2.msra.mxu0 0.0
        %1126 = vmatprep.subr.mxu0 0.0
        %1127 = vmatpush2.msra.mxu0 0.0
        %1128 = vmatprep.subr.mxu0 0.0
        %1129 = vmatpush2.msra.mxu0 0.0
        %1130 = vmatprep.subr.mxu0 0.0
        %1131 = vmatpush2.msra.mxu0 0.0
        %1132 = vmatprep.subr.mxu0 0.0
        %1133 = vmatpush2.msra.mxu0 0.0
        %1134 = vmatprep.subr.mxu0 0.0
        %1135 = vmatpush2.msra.mxu0 0.0
        %1136 = vmatprep.subr.mxu0 0.0
        %1137 = vmatpush2.msra.mxu0 0.0
        %1138 = vmatprep.subr.mxu0 0.0
        %1139 = vmatpush2.msra.mxu0 0.0
        %1140 = vmatprep.subr.mxu0 0.0
        %1141 = vmatpush2.msra.mxu0 0.0
        %1142 = vmatprep.subr.mxu0 0.0
        %1143 = vmatpush2.msra.mxu0 0.0
        %1144 = vmatprep.subr.mxu0 0.0
        %1145 = vmatpush2.msra.mxu0 0.0
        %1146 = vmatprep.subr.mxu0 0.0
        %1147 = vmatpush2.msra.mxu0 0.0
        %1148 = vmatprep.mubr.f32.mxu0 0.0
        %1149 = vmatmul.mubr.f32.gmra.mxu0 %v1079
        %v1150 = vpop.f32.mrf.mxu0
        %v1151 = vadd.f32 0.0, %v1150
        %v1152 = vpop.f32.mrf.mxu0
        %1153 = vmatprep.mubr.f32.mxu0 0.0
        %1154 = vmatmul.mubr.f32.gmra.mxu0 %v1082
        %v1155 = vpop.f32.mrf.mxu0
        %v1156 = vadd.f32 0.0, %v1155
        %v1157 = vpop.f32.mrf.mxu0
        %1158 = vdwg.mxu0
        %v1159 = vld [vmem:[%s6] sm:$0xff]
        %v1160 = vld [vmem:[%s6 + $0x8] sm:$0xff]
        %v1161 = vld [vmem:[%s6 + $0x10] sm:$0xff]
        %v1162 = vld [vmem:[%s6 + $0x18] sm:$0xff]
        %v1163 = vld [vmem:[%s6 + $0x20] sm:$0xff]
        %v1164 = vld [vmem:[%s6 + $0x28] sm:$0xff]
        %v1165 = vld [vmem:[%s6 + $0x30] sm:$0xff]
        %v1166 = vld [vmem:[%s6 + $0x38] sm:$0xff]
        %v1167 = vld [vmem:[%s7] sm:$0x1]
        %v1169 = vlaneseq
        %v1170 = vshrl.u32 %v1169, 7
        %v1171 = vsub.s32 0, %v1170
        %v1172 = vrot.slane %v1167, %v1171
        %v1175 = vsel %vm972, %v1151, 0
        %v1178 = vsel %vm972, %v1156, 0
        %1180 = vmatprep.subr.mxu0 0.0
        %1181 = vmatpush1.msra.mxu0 0.0
        %1182 = vmatprep.subr.mxu0 0.0
        %1183 = vmatpush1.msra.mxu0 0.0
        %1184 = vmatprep.subr.mxu0 0.0
        %1185 = vmatpush1.msra.mxu0 0.0
        %1186 = vmatprep.subr.mxu0 0.0
        %1187 = vmatpush1.msra.mxu0 0.0
        %1188 = vmatprep.subr.mxu0 0.0
        %1189 = vmatpush1.msra.mxu0 0.0
        %1190 = vmatprep.subr.mxu0 0.0
        %1191 = vmatpush1.msra.mxu0 0.0
        %1192 = vmatprep.subr.mxu0 0.0
        %1193 = vmatpush1.msra.mxu0 0.0
        %1194 = vmatprep.subr.mxu0 0.0
        %1195 = vmatpush1.msra.mxu0 0.0
        %1196 = vmatprep.subr.mxu0 0.0
        %1197 = vmatpush1.msra.mxu0 %v1166
        %1198 = vmatprep.subr.mxu0 0.0
        %1199 = vmatpush1.msra.mxu0 %v1165
        %1200 = vmatprep.subr.mxu0 0.0
        %1201 = vmatpush1.msra.mxu0 %v1164
        %1202 = vmatprep.subr.mxu0 0.0
        %1203 = vmatpush1.msra.mxu0 %v1163
        %1204 = vmatprep.subr.mxu0 0.0
        %1205 = vmatpush1.msra.mxu0 %v1162
        %1206 = vmatprep.subr.mxu0 0.0
        %1207 = vmatpush1.msra.mxu0 %v1161
        %1208 = vmatprep.subr.mxu0 0.0
        %1209 = vmatpush1.msra.mxu0 %v1160
        %1210 = vmatprep.subr.mxu0 0.0
        %1211 = vmatpush1.msra.mxu0 %v1159
        %1212 = vmatprep.subr.mxu0 0.0
        %1213 = vmatpush2.msra.mxu0 0.0
        %1214 = vmatprep.subr.mxu0 0.0
        %1215 = vmatpush2.msra.mxu0 0.0
        %1216 = vmatprep.subr.mxu0 0.0
        %1217 = vmatpush2.msra.mxu0 0.0
        %1218 = vmatprep.subr.mxu0 0.0
        %1219 = vmatpush2.msra.mxu0 0.0
        %1220 = vmatprep.subr.mxu0 0.0
        %1221 = vmatpush2.msra.mxu0 0.0
        %1222 = vmatprep.subr.mxu0 0.0
        %1223 = vmatpush2.msra.mxu0 0.0
        %1224 = vmatprep.subr.mxu0 0.0
        %1225 = vmatpush2.msra.mxu0 0.0
        %1226 = vmatprep.subr.mxu0 0.0
        %1227 = vmatpush2.msra.mxu0 0.0
        %1228 = vmatprep.subr.mxu0 0.0
        %1229 = vmatpush2.msra.mxu0 0.0
        %1230 = vmatprep.subr.mxu0 0.0
        %1231 = vmatpush2.msra.mxu0 0.0
        %1232 = vmatprep.subr.mxu0 0.0
        %1233 = vmatpush2.msra.mxu0 0.0
        %1234 = vmatprep.subr.mxu0 0.0
        %1235 = vmatpush2.msra.mxu0 0.0
        %1236 = vmatprep.subr.mxu0 0.0
        %1237 = vmatpush2.msra.mxu0 0.0
        %1238 = vmatprep.subr.mxu0 0.0
        %1239 = vmatpush2.msra.mxu0 0.0
        %1240 = vmatprep.subr.mxu0 0.0
        %1241 = vmatpush2.msra.mxu0 0.0
        %1242 = vmatprep.subr.mxu0 0.0
        %1243 = vmatpush2.msra.mxu0 0.0
        %1244 = vmatprep.mubr.f32.mxu0 0.0
        %1245 = vmatmul.mubr.f32.gmra.mxu0 %v1175
        %v1246 = vpop.f32.mrf.mxu0
        %v1247 = vadd.f32 %v1172, %v1246
        %v1248 = vpop.f32.mrf.mxu0
        %1249 = vmatprep.mubr.f32.mxu0 0.0
        %1250 = vmatmul.mubr.f32.gmra.mxu0 %v1178
        %v1251 = vpop.f32.mrf.mxu0
        %v1252 = vadd.f32 %v1172, %v1251
        %v1253 = vpop.f32.mrf.mxu0
        %1254 = vdwg.mxu0
        %v1255 = vld [vmem:[%s8] sm:$0x1]
        %v1256 = vld [vmem:[%s9] sm:$0x1]
        %v1257 = vsel %vm972, %v1247, 0.0
        %1258 = vadd.xlane.f32.xlu0 %v1257
        %v1259 = vpop.xlane.xlu0 %1258
        %v1260 = vsel %vm972, %v1252, 0.0
        %1261 = vadd.xlane.f32.xlu0 %v1260
        %v1262 = vpop.xlane.xlu0 %1261
        %v1263 = vrcp.pop 64.0
        %v1264 = vmul.f32 %v1259, %v1263
        %v1265 = vmul.f32 %v1262, %v1263
        %v1266 = vsub.f32 %v1247, %v1264
        %v1267 = vsub.f32 %v1252, %v1265
        %v1268 = vmul.f32 %v1266, %v1266
        %v1269 = vmul.f32 %v1267, %v1267
        %v1270 = vsel %vm972, %v1268, 0.0
        %1271 = vadd.xlane.f32.xlu0 %v1270
        %v1272 = vpop.xlane.xlu0 %1271
        %v1273 = vsel %vm972, %v1269, 0.0
        %1274 = vadd.xlane.f32.xlu0 %v1273
        %v1275 = vpop.xlane.xlu0 %1274
        %v1276 = vmul.f32 %v1272, %v1263
        %v1277 = vmul.f32 %v1275, %v1263
        %v1278 = vadd.f32 %v1276, 1e-05
        %v1279 = vadd.f32 %v1277, 1e-05
        %v1280 = vrsqrt.pop %v1278
        %v1281 = vrsqrt.pop %v1279
        %v1282 = vmul.f32 %v1266, %v1280
        %v1283 = vmul.f32 %v1267, %v1281
        %v1285 = vlaneseq
        %v1286 = vshrl.u32 %v1285, 7
        %v1287 = vsub.s32 0, %v1286
        %v1288 = vrot.slane %v1255, %v1287
        %v1290 = vmul.f32 %v1282, %v1288
        %v1291 = vmul.f32 %v1283, %v1288
        %v1293 = vlaneseq
        %v1294 = vshrl.u32 %v1293, 7
        %v1295 = vsub.s32 0, %v1294
        %v1296 = vrot.slane %v1256, %v1295
        %v1298 = vadd.f32 %v1290, %v1296
        %v1299 = vadd.f32 %v1291, %v1296
        %v1300 = vsub.f32 %v1298, %v1046
        %v1301 = vsub.f32 %v1299, %v1051
        %v1302 = vld [vmem:[%s10] sm:$0xff]
        %v1303 = vld [vmem:[%s10 + $0x8] sm:$0xff]
        %v1304 = vld [vmem:[%s10 + $0x10] sm:$0xff]
        %v1305 = vld [vmem:[%s10 + $0x18] sm:$0xff]
        %v1306 = vld [vmem:[%s10 + $0x20] sm:$0xff]
        %v1307 = vld [vmem:[%s10 + $0x28] sm:$0xff]
        %v1308 = vld [vmem:[%s10 + $0x30] sm:$0xff]
        %v1309 = vld [vmem:[%s10 + $0x38] sm:$0xff]
        %v1310 = vld [vmem:[#allocation2] sm:$0x1]
        %v1312 = vlaneseq
        %v1313 = vshrl.u32 %v1312, 7
        %v1314 = vsub.s32 0, %v1313
        %v1315 = vrot.slane %v1310, %v1314
        %v1318 = vsel %vm972, %v1046, 0
        %v1321 = vsel %vm972, %v1051, 0
        %1323 = vmatprep.subr.mxu0 0.0
        %1324 = vmatpush1.msra.mxu0 0.0
        %1325 = vmatprep.subr.mxu0 0.0
        %1326 = vmatpush1.msra.mxu0 0.0
        %1327 = vmatprep.subr.mxu0 0.0
        %1328 = vmatpush1.msra.mxu0 0.0
        %1329 = vmatprep.subr.mxu0 0.0
        %1330 = vmatpush1.msra.mxu0 0.0
        %1331 = vmatprep.subr.mxu0 0.0
        %1332 = vmatpush1.msra.mxu0 0.0
        %1333 = vmatprep.subr.mxu0 0.0
        %1334 = vmatpush1.msra.mxu0 0.0
        %1335 = vmatprep.subr.mxu0 0.0
        %1336 = vmatpush1.msra.mxu0 0.0
        %1337 = vmatprep.subr.mxu0 0.0
        %1338 = vmatpush1.msra.mxu0 0.0
        %1339 = vmatprep.subr.mxu0 0.0
        %1340 = vmatpush1.msra.mxu0 %v1309
        %1341 = vmatprep.subr.mxu0 0.0
        %1342 = vmatpush1.msra.mxu0 %v1308
        %1343 = vmatprep.subr.mxu0 0.0
        %1344 = vmatpush1.msra.mxu0 %v1307
        %1345 = vmatprep.subr.mxu0 0.0
        %1346 = vmatpush1.msra.mxu0 %v1306
        %1347 = vmatprep.subr.mxu0 0.0
        %1348 = vmatpush1.msra.mxu0 %v1305
        %1349 = vmatprep.subr.mxu0 0.0
        %1350 = vmatpush1.msra.mxu0 %v1304
        %1351 = vmatprep.subr.mxu0 0.0
        %1352 = vmatpush1.msra.mxu0 %v1303
        %1353 = vmatprep.subr.mxu0 0.0
        %1354 = vmatpush1.msra.mxu0 %v1302
        %1355 = vmatprep.subr.mxu0 0.0
        %1356 = vmatpush2.msra.mxu0 0.0
        %1357 = vmatprep.subr.mxu0 0.0
        %1358 = vmatpush2.msra.mxu0 0.0
        %1359 = vmatprep.subr.mxu0 0.0
        %1360 = vmatpush2.msra.mxu0 0.0
        %1361 = vmatprep.subr.mxu0 0.0
        %1362 = vmatpush2.msra.mxu0 0.0
        %1363 = vmatprep.subr.mxu0 0.0
        %1364 = vmatpush2.msra.mxu0 0.0
        %1365 = vmatprep.subr.mxu0 0.0
        %1366 = vmatpush2.msra.mxu0 0.0
        %1367 = vmatprep.subr.mxu0 0.0
        %1368 = vmatpush2.msra.mxu0 0.0
        %1369 = vmatprep.subr.mxu0 0.0
        %1370 = vmatpush2.msra.mxu0 0.0
        %1371 = vmatprep.subr.mxu0 0.0
        %1372 = vmatpush2.msra.mxu0 0.0
        %1373 = vmatprep.subr.mxu0 0.0
        %1374 = vmatpush2.msra.mxu0 0.0
        %1375 = vmatprep.subr.mxu0 0.0
        %1376 = vmatpush2.msra.mxu0 0.0
        %1377 = vmatprep.subr.mxu0 0.0
        %1378 = vmatpush2.msra.mxu0 0.0
        %1379 = vmatprep.subr.mxu0 0.0
        %1380 = vmatpush2.msra.mxu0 0.0
        %1381 = vmatprep.subr.mxu0 0.0
        %1382 = vmatpush2.msra.mxu0 0.0
        %1383 = vmatprep.subr.mxu0 0.0
        %1384 = vmatpush2.msra.mxu0 0.0
        %1385 = vmatprep.subr.mxu0 0.0
        %1386 = vmatpush2.msra.mxu0 0.0
        %1387 = vmatprep.mubr.f32.mxu0 0.0
        %1388 = vmatmul.mubr.f32.gmra.mxu0 %v1318
        %v1389 = vpop.f32.mrf.mxu0
        %v1390 = vadd.f32 %v1315, %v1389
        %v1391 = vpop.f32.mrf.mxu0
        %1392 = vmatprep.mubr.f32.mxu0 0.0
        %1393 = vmatmul.mubr.f32.gmra.mxu0 %v1321
        %v1394 = vpop.f32.mrf.mxu0
        %v1395 = vadd.f32 %v1315, %v1394
        %v1396 = vpop.f32.mrf.mxu0
        %1397 = vdwg.mxu0
        %vm1398 = vcmask 7168
        %v1399 = vsel %vm1398, %v1390, -inf
        %v1400 = vsel %vm1398, %v1395, -inf
        %v1401 = vmax.f32 %v1399, %v1400
        %v1402 = vrot.slane %v1401, 4
        %v1403 = vmax.f32 %v1401, %v1402
        %v1404 = vrot.slane %v1403, 2
        %v1405 = vmax.f32 %v1403, %v1404
        %v1406 = vrot.slane %v1405, 1
        %v1407 = vmax.f32 %v1405, %v1406
        %v1408 = vsub.f32 %v1390, %v1407
        %v1409 = vsub.f32 %v1395, %v1407
        %v1410 = vmul.f32 %v1408, 1.442695
        %v1411 = vpow.pop %v1410
        %v1412 = vmul.f32 %v1409, 1.442695
        %v1413 = vpow.pop %v1412
        %v1414 = vsel %vm1398, %v1411, 0.0
        %v1415 = vsel %vm1398, %v1413, 0.0
        %v1416 = vadd.f32 %v1414, %v1415
        %v1417 = vrot.slane %v1416, 4
        %v1418 = vadd.f32 %v1416, %v1417
        %v1419 = vrot.slane %v1418, 2
        %v1420 = vadd.f32 %v1418, %v1419
        %v1421 = vrot.slane %v1420, 1
        %v1422 = vadd.f32 %v1420, %v1421
        %v1423 = vrcp.pop %v1422
        %v1424 = vmul.f32 %v1411, %v1423
        %v1425 = vmul.f32 %v1413, %v1423
        %1427 = vset.pattern.permute.xlu0 0
        %1428 = vperm.xlu0 %1427, %v1424
        %v1429 = vpop.permute.xlu0 %1428
        %1432 = vset.pattern.permute.xlu0 0
        %1433 = vperm.xlu0 %1432, %v1425
        %v1434 = vpop.permute.xlu0 %1433
        %v1436 = vmul.f32 %v1429, %v1046
        %v1437 = vmul.f32 %v1434, %v1051
        %v1438 = vsel %vm972, %v1436, 0.0
        %v1439 = vsel %vm972, %v1437, 0.0
        %v1440 = vadd.f32 %v1438, %v1439
        %v1441 = vrot.slane %v1440, 4
        %v1442 = vadd.f32 %v1440, %v1441
        %v1443 = vrot.slane %v1442, 2
        %v1444 = vadd.f32 %v1442, %v1443
        %v1445 = vrot.slane %v1444, 1
        %v1446 = vadd.f32 %v1444, %v1445
        %v1447 = vsub.f32 %v1446, %v1046
        %v1448 = vsub.f32 %v1446, %v1051
        %1451 = vrot.lane.b32.xlu0 %v1447, 64
        %v1452 = vpop.permute.xlu0 %1451
        %1453 = vrot.lane.b32.xlu0 %v1448, 64
        %v1454 = vpop.permute.xlu0 %1453
        %v1457 = vsel %vm972, %v1300, %v1452
        %v1458 = vsel %vm972, %v1301, %v1454
        %1459 = vst [vmem:[%s836] sm:$0xff] %v1457
        %1460 = vst [vmem:[%s836 + $0x8] sm:$0xff] %v1458
        %v1461 = vld [vmem:[%s14] sm:$0xff]
        %v1462 = vld [vmem:[%s14 + $0x8] sm:$0xff]
        %v1463 = vld [vmem:[%s14 + $0x10] sm:$0xff]
        %v1464 = vld [vmem:[%s14 + $0x18] sm:$0xff]
        %v1465 = vld [vmem:[%s14 + $0x20] sm:$0xff]
        %v1466 = vld [vmem:[%s14 + $0x28] sm:$0xff]
        %v1467 = vld [vmem:[%s14 + $0x30] sm:$0xff]
        %v1468 = vld [vmem:[%s14 + $0x38] sm:$0xff]
        %v1469 = vld [vmem:[%s14 + $0x40] sm:$0xff]
        %v1470 = vld [vmem:[%s14 + $0x48] sm:$0xff]
        %v1471 = vld [vmem:[%s14 + $0x50] sm:$0xff]
        %v1472 = vld [vmem:[%s14 + $0x58] sm:$0xff]
        %v1473 = vld [vmem:[%s14 + $0x60] sm:$0xff]
        %v1474 = vld [vmem:[%s14 + $0x68] sm:$0xff]
        %v1475 = vld [vmem:[%s14 + $0x70] sm:$0xff]
        %v1476 = vld [vmem:[%s14 + $0x78] sm:$0xff]
        %v1477 = vld [vmem:[%s15] sm:$0x1]
        %v1479 = vlaneseq
        %v1480 = vshrl.u32 %v1479, 7
        %v1481 = vsub.s32 0, %v1480
        %v1482 = vrot.slane %v1477, %v1481
        %1484 = vmatprep.subr.mxu0 0.0
        %1485 = vmatpush1.msra.mxu0 %v1476
        %1486 = vmatprep.subr.mxu0 0.0
        %1487 = vmatpush1.msra.mxu0 %v1475
        %1488 = vmatprep.subr.mxu0 0.0
        %1489 = vmatpush1.msra.mxu0 %v1474
        %1490 = vmatprep.subr.mxu0 0.0
        %1491 = vmatpush1.msra.mxu0 %v1473
        %1492 = vmatprep.subr.mxu0 0.0
        %1493 = vmatpush1.msra.mxu0 %v1472
        %1494 = vmatprep.subr.mxu0 0.0
        %1495 = vmatpush1.msra.mxu0 %v1471
        %1496 = vmatprep.subr.mxu0 0.0
        %1497 = vmatpush1.msra.mxu0 %v1470
        %1498 = vmatprep.subr.mxu0 0.0
        %1499 = vmatpush1.msra.mxu0 %v1469
        %1500 = vmatprep.subr.mxu0 0.0
        %1501 = vmatpush1.msra.mxu0 %v1468
        %1502 = vmatprep.subr.mxu0 0.0
        %1503 = vmatpush1.msra.mxu0 %v1467
        %1504 = vmatprep.subr.mxu0 0.0
        %1505 = vmatpush1.msra.mxu0 %v1466
        %1506 = vmatprep.subr.mxu0 0.0
        %1507 = vmatpush1.msra.mxu0 %v1465
        %1508 = vmatprep.subr.mxu0 0.0
        %1509 = vmatpush1.msra.mxu0 %v1464
        %1510 = vmatprep.subr.mxu0 0.0
        %1511 = vmatpush1.msra.mxu0 %v1463
        %1512 = vmatprep.subr.mxu0 0.0
        %1513 = vmatpush1.msra.mxu0 %v1462
        %1514 = vmatprep.subr.mxu0 0.0
        %1515 = vmatpush1.msra.mxu0 %v1461
        %1516 = vmatprep.subr.mxu0 0.0
        %1517 = vmatpush2.msra.mxu0 0.0
        %1518 = vmatprep.subr.mxu0 0.0
        %1519 = vmatpush2.msra.mxu0 0.0
        %1520 = vmatprep.subr.mxu0 0.0
        %1521 = vmatpush2.msra.mxu0 0.0
        %1522 = vmatprep.subr.mxu0 0.0
        %1523 = vmatpush2.msra.mxu0 0.0
        %1524 = vmatprep.subr.mxu0 0.0
        %1525 = vmatpush2.msra.mxu0 0.0
        %1526 = vmatprep.subr.mxu0 0.0
        %1527 = vmatpush2.msra.mxu0 0.0
        %1528 = vmatprep.subr.mxu0 0.0
        %1529 = vmatpush2.msra.mxu0 0.0
        %1530 = vmatprep.subr.mxu0 0.0
        %1531 = vmatpush2.msra.mxu0 0.0
        %1532 = vmatprep.subr.mxu0 0.0
        %1533 = vmatpush2.msra.mxu0 0.0
        %1534 = vmatprep.subr.mxu0 0.0
        %1535 = vmatpush2.msra.mxu0 0.0
        %1536 = vmatprep.subr.mxu0 0.0
        %1537 = vmatpush2.msra.mxu0 0.0
        %1538 = vmatprep.subr.mxu0 0.0
        %1539 = vmatpush2.msra.mxu0 0.0
        %1540 = vmatprep.subr.mxu0 0.0
        %1541 = vmatpush2.msra.mxu0 0.0
        %1542 = vmatprep.subr.mxu0 0.0
        %1543 = vmatpush2.msra.mxu0 0.0
        %1544 = vmatprep.subr.mxu0 0.0
        %1545 = vmatpush2.msra.mxu0 0.0
        %1546 = vmatprep.subr.mxu0 0.0
        %1547 = vmatpush2.msra.mxu0 0.0
        %1548 = vmatprep.mubr.f32.mxu0 0.0
        %1549 = vmatmul.mubr.f32.gmra.mxu0 %v1457
        %v1550 = vpop.f32.mrf.mxu0
        %v1551 = vadd.f32 %v1482, %v1550
        %v1552 = vpop.f32.mrf.mxu0
        %1553 = vmatprep.mubr.f32.mxu0 0.0
        %1554 = vmatmul.mubr.f32.gmra.mxu0 %v1458
        %v1555 = vpop.f32.mrf.mxu0
        %v1556 = vadd.f32 %v1482, %v1555
        %v1557 = vpop.f32.mrf.mxu0
        %1558 = vdwg.mxu0
        %v1559 = vmax.f32 %v1551, 0.0
        %v1560 = vmax.f32 %v1556, 0.0
        %v1561 = vlaneseq
        %v1562 = vshrl.u32 %v1561, 7
        %v1563 = vsub.s32 0, %v1562
        %v1564 = vrot.slane %v852, %v1563
        %1566 = vbcast.lane.b32.xlu0 %v1564, 256
        %v1567 = vpop.permute.xlu0 %1566
        %s1569 = sor.u32 256, 8
        %1570 = vbcast.lane.b32.xlu0 %v1564, %s1569
        %v1571 = vpop.permute.xlu0 %1570
        %v1572 = vlaneseq
        %v1573 = vshrl.u32 %v1572, 7
        %v1574 = vsub.s32 1, %v1573
        %v1575 = vrot.slane %v852, %v1574
        %1577 = vbcast.lane.b32.xlu0 %v1575, 256
        %v1578 = vpop.permute.xlu0 %1577
        %s1580 = sor.u32 256, 8
        %1581 = vbcast.lane.b32.xlu0 %v1575, %s1580
        %v1582 = vpop.permute.xlu0 %1581
        %v1583 = vlaneseq
        %v1584 = vshrl.u32 %v1583, 7
        %v1585 = vsub.s32 2, %v1584
        %v1586 = vrot.slane %v852, %v1585
        %1588 = vbcast.lane.b32.xlu0 %v1586, 256
        %v1589 = vpop.permute.xlu0 %1588
        %s1591 = sor.u32 256, 8
        %1592 = vbcast.lane.b32.xlu0 %v1586, %s1591
        %v1593 = vpop.permute.xlu0 %1592
        %v1594 = vlaneseq
        %v1595 = vshrl.u32 %v1594, 7
        %v1596 = vsub.s32 3, %v1595
        %v1597 = vrot.slane %v852, %v1596
        %1599 = vbcast.lane.b32.xlu0 %v1597, 256
        %v1600 = vpop.permute.xlu0 %1599
        %s1602 = sor.u32 256, 8
        %1603 = vbcast.lane.b32.xlu0 %v1597, %s1602
        %v1604 = vpop.permute.xlu0 %1603
        %v1605 = vlaneseq
        %v1606 = vshrl.u32 %v1605, 7
        %v1607 = vsub.s32 4, %v1606
        %v1608 = vrot.slane %v852, %v1607
        %1610 = vbcast.lane.b32.xlu0 %v1608, 256
        %v1611 = vpop.permute.xlu0 %1610
        %s1613 = sor.u32 256, 8
        %1614 = vbcast.lane.b32.xlu0 %v1608, %s1613
        %v1615 = vpop.permute.xlu0 %1614
        %v1616 = vlaneseq
        %v1617 = vshrl.u32 %v1616, 7
        %v1618 = vsub.s32 5, %v1617
        %v1619 = vrot.slane %v852, %v1618
        %1621 = vbcast.lane.b32.xlu0 %v1619, 256
        %v1622 = vpop.permute.xlu0 %1621
        %s1624 = sor.u32 256, 8
        %1625 = vbcast.lane.b32.xlu0 %v1619, %s1624
        %v1626 = vpop.permute.xlu0 %1625
        %v1627 = vlaneseq
        %v1628 = vshrl.u32 %v1627, 7
        %v1629 = vsub.s32 6, %v1628
        %v1630 = vrot.slane %v852, %v1629
        %1632 = vbcast.lane.b32.xlu0 %v1630, 256
        %v1633 = vpop.permute.xlu0 %1632
        %s1635 = sor.u32 256, 8
        %1636 = vbcast.lane.b32.xlu0 %v1630, %s1635
        %v1637 = vpop.permute.xlu0 %1636
        %v1638 = vlaneseq
        %v1639 = vshrl.u32 %v1638, 7
        %v1640 = vsub.s32 7, %v1639
        %v1641 = vrot.slane %v852, %v1640
        %1643 = vbcast.lane.b32.xlu0 %v1641, 256
        %v1644 = vpop.permute.xlu0 %1643
        %s1646 = sor.u32 256, 8
        %1647 = vbcast.lane.b32.xlu0 %v1641, %s1646
        %v1648 = vpop.permute.xlu0 %1647
        %v1649 = vlaneseq
        %v1650 = vshrl.u32 %v1649, 7
        %v1651 = vsub.s32 0, %v1650
        %v1652 = vrot.slane %v853, %v1651
        %1654 = vbcast.lane.b32.xlu0 %v1652, 256
        %v1655 = vpop.permute.xlu0 %1654
        %s1657 = sor.u32 256, 8
        %1658 = vbcast.lane.b32.xlu0 %v1652, %s1657
        %v1659 = vpop.permute.xlu0 %1658
        %v1660 = vlaneseq
        %v1661 = vshrl.u32 %v1660, 7
        %v1662 = vsub.s32 1, %v1661
        %v1663 = vrot.slane %v853, %v1662
        %1665 = vbcast.lane.b32.xlu0 %v1663, 256
        %v1666 = vpop.permute.xlu0 %1665
        %s1668 = sor.u32 256, 8
        %1669 = vbcast.lane.b32.xlu0 %v1663, %s1668
        %v1670 = vpop.permute.xlu0 %1669
        %v1671 = vlaneseq
        %v1672 = vshrl.u32 %v1671, 7
        %v1673 = vsub.s32 2, %v1672
        %v1674 = vrot.slane %v853, %v1673
        %1676 = vbcast.lane.b32.xlu0 %v1674, 256
        %v1677 = vpop.permute.xlu0 %1676
        %s1679 = sor.u32 256, 8
        %1680 = vbcast.lane.b32.xlu0 %v1674, %s1679
        %v1681 = vpop.permute.xlu0 %1680
        %v1682 = vlaneseq
        %v1683 = vshrl.u32 %v1682, 7
        %v1684 = vsub.s32 3, %v1683
        %v1685 = vrot.slane %v853, %v1684
        %1687 = vbcast.lane.b32.xlu0 %v1685, 256
        %v1688 = vpop.permute.xlu0 %1687
        %s1690 = sor.u32 256, 8
        %1691 = vbcast.lane.b32.xlu0 %v1685, %s1690
        %v1692 = vpop.permute.xlu0 %1691
        %v1693 = vlaneseq
        %v1694 = vshrl.u32 %v1693, 7
        %v1695 = vsub.s32 4, %v1694
        %v1696 = vrot.slane %v853, %v1695
        %1698 = vbcast.lane.b32.xlu0 %v1696, 256
        %v1699 = vpop.permute.xlu0 %1698
        %s1701 = sor.u32 256, 8
        %1702 = vbcast.lane.b32.xlu0 %v1696, %s1701
        %v1703 = vpop.permute.xlu0 %1702
        %v1704 = vlaneseq
        %v1705 = vshrl.u32 %v1704, 7
        %v1706 = vsub.s32 5, %v1705
        %v1707 = vrot.slane %v853, %v1706
        %1709 = vbcast.lane.b32.xlu0 %v1707, 256
        %v1710 = vpop.permute.xlu0 %1709
        %s1712 = sor.u32 256, 8
        %1713 = vbcast.lane.b32.xlu0 %v1707, %s1712
        %v1714 = vpop.permute.xlu0 %1713
        %v1715 = vlaneseq
        %v1716 = vshrl.u32 %v1715, 7
        %v1717 = vsub.s32 6, %v1716
        %v1718 = vrot.slane %v853, %v1717
        %1720 = vbcast.lane.b32.xlu0 %v1718, 256
        %v1721 = vpop.permute.xlu0 %1720
        %s1723 = sor.u32 256, 8
        %1724 = vbcast.lane.b32.xlu0 %v1718, %s1723
        %v1725 = vpop.permute.xlu0 %1724
        %v1726 = vlaneseq
        %v1727 = vshrl.u32 %v1726, 7
        %v1728 = vsub.s32 7, %v1727
        %v1729 = vrot.slane %v853, %v1728
        %1731 = vbcast.lane.b32.xlu0 %v1729, 256
        %v1732 = vpop.permute.xlu0 %1731
        %s1734 = sor.u32 256, 8
        %1735 = vbcast.lane.b32.xlu0 %v1729, %s1734
        %v1736 = vpop.permute.xlu0 %1735
        %v1737 = vmul.f32 %v1567, %v1559
        %v1738 = vmul.f32 %v1571, %v1560
        %v1739 = vmul.f32 %v1578, %v1559
        %v1740 = vmul.f32 %v1582, %v1560
        %v1741 = vmul.f32 %v1589, %v1559
        %v1742 = vmul.f32 %v1593, %v1560
        %v1743 = vmul.f32 %v1600, %v1559
        %v1744 = vmul.f32 %v1604, %v1560
        %v1745 = vmul.f32 %v1611, %v1559
        %v1746 = vmul.f32 %v1615, %v1560
        %v1747 = vmul.f32 %v1622, %v1559
        %v1748 = vmul.f32 %v1626, %v1560
        %v1749 = vmul.f32 %v1633, %v1559
        %v1750 = vmul.f32 %v1637, %v1560
        %v1751 = vmul.f32 %v1644, %v1559
        %v1752 = vmul.f32 %v1648, %v1560
        %v1753 = vmul.f32 %v1655, %v1559
        %v1754 = vmul.f32 %v1659, %v1560
        %v1755 = vmul.f32 %v1666, %v1559
        %v1756 = vmul.f32 %v1670, %v1560
        %v1757 = vmul.f32 %v1677, %v1559
        %v1758 = vmul.f32 %v1681, %v1560
        %v1759 = vmul.f32 %v1688, %v1559
        %v1760 = vmul.f32 %v1692, %v1560
        %v1761 = vmul.f32 %v1699, %v1559
        %v1762 = vmul.f32 %v1703, %v1560
        %v1763 = vmul.f32 %v1710, %v1559
        %v1764 = vmul.f32 %v1714, %v1560
        %v1765 = vmul.f32 %v1721, %v1559
        %v1766 = vmul.f32 %v1725, %v1560
        %v1767 = vmul.f32 %v1732, %v1559
        %v1768 = vmul.f32 %v1736, %v1560
        %v1769 = vmax.f32 %v1737, %v1738
        %v1770 = vrot.slane %v1769, 4
        %v1771 = vmax.f32 %v1769, %v1770
        %v1772 = vrot.slane %v1771, 2
        %v1773 = vmax.f32 %v1771, %v1772
        %v1774 = vrot.slane %v1773, 1
        %v1775 = vmax.f32 %v1773, %v1774
        %v1776 = vmax.f32 %v1739, %v1740
        %v1777 = vrot.slane %v1776, 4
        %v1778 = vmax.f32 %v1776, %v1777
        %v1779 = vrot.slane %v1778, 2
        %v1780 = vmax.f32 %v1778, %v1779
        %v1781 = vrot.slane %v1780, 1
        %v1782 = vmax.f32 %v1780, %v1781
        %v1783 = vmax.f32 %v1741, %v1742
        %v1784 = vrot.slane %v1783, 4
        %v1785 = vmax.f32 %v1783, %v1784
        %v1786 = vrot.slane %v1785, 2
        %v1787 = vmax.f32 %v1785, %v1786
        %v1788 = vrot.slane %v1787, 1
        %v1789 = vmax.f32 %v1787, %v1788
        %v1790 = vmax.f32 %v1743, %v1744
        %v1791 = vrot.slane %v1790, 4
        %v1792 = vmax.f32 %v1790, %v1791
        %v1793 = vrot.slane %v1792, 2
        %v1794 = vmax.f32 %v1792, %v1793
        %v1795 = vrot.slane %v1794, 1
        %v1796 = vmax.f32 %v1794, %v1795
        %v1797 = vmax.f32 %v1745, %v1746
        %v1798 = vrot.slane %v1797, 4
        %v1799 = vmax.f32 %v1797, %v1798
        %v1800 = vrot.slane %v1799, 2
        %v1801 = vmax.f32 %v1799, %v1800
        %v1802 = vrot.slane %v1801, 1
        %v1803 = vmax.f32 %v1801, %v1802
        %v1804 = vmax.f32 %v1747, %v1748
        %v1805 = vrot.slane %v1804, 4
        %v1806 = vmax.f32 %v1804, %v1805
        %v1807 = vrot.slane %v1806, 2
        %v1808 = vmax.f32 %v1806, %v1807
        %v1809 = vrot.slane %v1808, 1
        %v1810 = vmax.f32 %v1808, %v1809
        %v1811 = vmax.f32 %v1749, %v1750
        %v1812 = vrot.slane %v1811, 4
        %v1813 = vmax.f32 %v1811, %v1812
        %v1814 = vrot.slane %v1813, 2
        %v1815 = vmax.f32 %v1813, %v1814
        %v1816 = vrot.slane %v1815, 1
        %v1817 = vmax.f32 %v1815, %v1816
        %v1818 = vmax.f32 %v1751, %v1752
        %v1819 = vrot.slane %v1818, 4
        %v1820 = vmax.f32 %v1818, %v1819
        %v1821 = vrot.slane %v1820, 2
        %v1822 = vmax.f32 %v1820, %v1821
        %v1823 = vrot.slane %v1822, 1
        %v1824 = vmax.f32 %v1822, %v1823
        %v1825 = vmax.f32 %v1753, %v1754
        %v1826 = vrot.slane %v1825, 4
        %v1827 = vmax.f32 %v1825, %v1826
        %v1828 = vrot.slane %v1827, 2
        %v1829 = vmax.f32 %v1827, %v1828
        %v1830 = vrot.slane %v1829, 1
        %v1831 = vmax.f32 %v1829, %v1830
        %v1832 = vmax.f32 %v1755, %v1756
        %v1833 = vrot.slane %v1832, 4
        %v1834 = vmax.f32 %v1832, %v1833
        %v1835 = vrot.slane %v1834, 2
        %v1836 = vmax.f32 %v1834, %v1835
        %v1837 = vrot.slane %v1836, 1
        %v1838 = vmax.f32 %v1836, %v1837
        %v1839 = vmax.f32 %v1757, %v1758
        %v1840 = vrot.slane %v1839, 4
        %v1841 = vmax.f32 %v1839, %v1840
        %v1842 = vrot.slane %v1841, 2
        %v1843 = vmax.f32 %v1841, %v1842
        %v1844 = vrot.slane %v1843, 1
        %v1845 = vmax.f32 %v1843, %v1844
        %v1846 = vmax.f32 %v1759, %v1760
        %v1847 = vrot.slane %v1846, 4
        %v1848 = vmax.f32 %v1846, %v1847
        %v1849 = vrot.slane %v1848, 2
        %v1850 = vmax.f32 %v1848, %v1849
        %v1851 = vrot.slane %v1850, 1
        %v1852 = vmax.f32 %v1850, %v1851
        %v1853 = vmax.f32 %v1761, %v1762
        %v1854 = vrot.slane %v1853, 4
        %v1855 = vmax.f32 %v1853, %v1854
        %v1856 = vrot.slane %v1855, 2
        %v1857 = vmax.f32 %v1855, %v1856
        %v1858 = vrot.slane %v1857, 1
        %v1859 = vmax.f32 %v1857, %v1858
        %v1860 = vmax.f32 %v1763, %v1764
        %v1861 = vrot.slane %v1860, 4
        %v1862 = vmax.f32 %v1860, %v1861
        %v1863 = vrot.slane %v1862, 2
        %v1864 = vmax.f32 %v1862, %v1863
        %v1865 = vrot.slane %v1864, 1
        %v1866 = vmax.f32 %v1864, %v1865
        %v1867 = vmax.f32 %v1765, %v1766
        %v1868 = vrot.slane %v1867, 4
        %v1869 = vmax.f32 %v1867, %v1868
        %v1870 = vrot.slane %v1869, 2
        %v1871 = vmax.f32 %v1869, %v1870
        %v1872 = vrot.slane %v1871, 1
        %v1873 = vmax.f32 %v1871, %v1872
        %v1874 = vmax.f32 %v1767, %v1768
        %v1875 = vrot.slane %v1874, 4
        %v1876 = vmax.f32 %v1874, %v1875
        %v1877 = vrot.slane %v1876, 2
        %v1878 = vmax.f32 %v1876, %v1877
        %v1879 = vrot.slane %v1878, 1
        %v1880 = vmax.f32 %v1878, %v1879
        %vm1897 = vcmask 1041409
        %v1898 = vsel %vm1897, %v1782, %v1775
        %vm1899 = vcmask 1042434
        %v1900 = vsel %vm1899, %v1789, %v1898
        %vm1901 = vcmask 1043459
        %v1902 = vsel %vm1901, %v1796, %v1900
        %vm1903 = vcmask 1044484
        %v1904 = vsel %vm1903, %v1803, %v1902
        %vm1905 = vcmask 1045509
        %v1906 = vsel %vm1905, %v1810, %v1904
        %vm1907 = vcmask 1046534
        %v1908 = vsel %vm1907, %v1817, %v1906
        %vm1909 = vcmask 1047559
        %v1910 = vsel %vm1909, %v1824, %v1908
        %v1911 = vsel %vm1897, %v1838, %v1831
        %v1912 = vsel %vm1899, %v1845, %v1911
        %v1913 = vsel %vm1901, %v1852, %v1912
        %v1914 = vsel %vm1903, %v1859, %v1913
        %v1915 = vsel %vm1905, %v1866, %v1914
        %v1916 = vsel %vm1907, %v1873, %v1915
        %v1917 = vsel %vm1909, %v1880, %v1916
        %v1920 = vld [vmem:[%s16] sm:$0xff]
        %v1921 = vld [vmem:[%s16 + $0x8] sm:$0xff]
        %v1922 = vld [vmem:[%s16 + $0x10] sm:$0xff]
        %v1923 = vld [vmem:[%s16 + $0x18] sm:$0xff]
        %v1924 = vld [vmem:[%s16 + $0x20] sm:$0xff]
        %v1925 = vld [vmem:[%s16 + $0x28] sm:$0xff]
        %v1926 = vld [vmem:[%s16 + $0x30] sm:$0xff]
        %v1927 = vld [vmem:[%s16 + $0x38] sm:$0xff]
        %v1928 = vld [vmem:[%s16 + $0x40] sm:$0xff]
        %v1929 = vld [vmem:[%s16 + $0x48] sm:$0xff]
        %v1930 = vld [vmem:[%s16 + $0x50] sm:$0xff]
        %v1931 = vld [vmem:[%s16 + $0x58] sm:$0xff]
        %v1932 = vld [vmem:[%s16 + $0x60] sm:$0xff]
        %v1933 = vld [vmem:[%s16 + $0x68] sm:$0xff]
        %v1934 = vld [vmem:[%s16 + $0x70] sm:$0xff]
        %v1935 = vld [vmem:[%s16 + $0x78] sm:$0xff]
        %v1936 = vld [vmem:[%s16 + $0x80] sm:$0xff]
        %v1937 = vld [vmem:[%s16 + $0x88] sm:$0xff]
        %v1938 = vld [vmem:[%s16 + $0x90] sm:$0xff]
        %v1939 = vld [vmem:[%s16 + $0x98] sm:$0xff]
        %v1940 = vld [vmem:[%s16 + $0xa0] sm:$0xff]
        %v1941 = vld [vmem:[%s16 + $0xa8] sm:$0xff]
        %v1942 = vld [vmem:[%s16 + $0xb0] sm:$0xff]
        %v1943 = vld [vmem:[%s16 + $0xb8] sm:$0xff]
        %v1944 = vld [vmem:[%s16 + $0xc0] sm:$0xff]
        %v1945 = vld [vmem:[%s16 + $0xc8] sm:$0xff]
        %v1946 = vld [vmem:[%s16 + $0xd0] sm:$0xff]
        %v1947 = vld [vmem:[%s16 + $0xd8] sm:$0xff]
        %v1948 = vld [vmem:[%s16 + $0xe0] sm:$0xff]
        %v1949 = vld [vmem:[%s16 + $0xe8] sm:$0xff]
        %v1950 = vld [vmem:[%s16 + $0xf0] sm:$0xff]
        %v1951 = vld [vmem:[%s16 + $0xf8] sm:$0xff]
        %v1952 = vld [vmem:[%s17] sm:$0x1]
        %v1954 = vlaneseq
        %v1955 = vshrl.u32 %v1954, 7
        %v1956 = vsub.s32 0, %v1955
        %v1957 = vrot.slane %v1952, %v1956
        %1959 = vmatprep.subr.mxu0 0.0
        %1960 = vmatpush1.msra.mxu0 %v1935
        %1961 = vmatprep.subr.mxu0 0.0
        %1962 = vmatpush1.msra.mxu0 %v1934
        %1963 = vmatprep.subr.mxu0 0.0
        %1964 = vmatpush1.msra.mxu0 %v1933
        %1965 = vmatprep.subr.mxu0 0.0
        %1966 = vmatpush1.msra.mxu0 %v1932
        %1967 = vmatprep.subr.mxu0 0.0
        %1968 = vmatpush1.msra.mxu0 %v1931
        %1969 = vmatprep.subr.mxu0 0.0
        %1970 = vmatpush1.msra.mxu0 %v1930
        %1971 = vmatprep.subr.mxu0 0.0
        %1972 = vmatpush1.msra.mxu0 %v1929
        %1973 = vmatprep.subr.mxu0 0.0
        %1974 = vmatpush1.msra.mxu0 %v1928
        %1975 = vmatprep.subr.mxu0 0.0
        %1976 = vmatpush1.msra.mxu0 %v1927
        %1977 = vmatprep.subr.mxu0 0.0
        %1978 = vmatpush1.msra.mxu0 %v1926
        %1979 = vmatprep.subr.mxu0 0.0
        %1980 = vmatpush1.msra.mxu0 %v1925
        %1981 = vmatprep.subr.mxu0 0.0
        %1982 = vmatpush1.msra.mxu0 %v1924
        %1983 = vmatprep.subr.mxu0 0.0
        %1984 = vmatpush1.msra.mxu0 %v1923
        %1985 = vmatprep.subr.mxu0 0.0
        %1986 = vmatpush1.msra.mxu0 %v1922
        %1987 = vmatprep.subr.mxu0 0.0
        %1988 = vmatpush1.msra.mxu0 %v1921
        %1989 = vmatprep.subr.mxu0 0.0
        %1990 = vmatpush1.msra.mxu0 %v1920
        %1991 = vmatprep.subr.mxu0 0.0
        %1992 = vmatpush2.msra.mxu0 %v1951
        %1993 = vmatprep.subr.mxu0 0.0
        %1994 = vmatpush2.msra.mxu0 %v1950
        %1995 = vmatprep.subr.mxu0 0.0
        %1996 = vmatpush2.msra.mxu0 %v1949
        %1997 = vmatprep.subr.mxu0 0.0
        %1998 = vmatpush2.msra.mxu0 %v1948
        %1999 = vmatprep.subr.mxu0 0.0
        %2000 = vmatpush2.msra.mxu0 %v1947
        %2001 = vmatprep.subr.mxu0 0.0
        %2002 = vmatpush2.msra.mxu0 %v1946
        %2003 = vmatprep.subr.mxu0 0.0
        %2004 = vmatpush2.msra.mxu0 %v1945
        %2005 = vmatprep.subr.mxu0 0.0
        %2006 = vmatpush2.msra.mxu0 %v1944
        %2007 = vmatprep.subr.mxu0 0.0
        %2008 = vmatpush2.msra.mxu0 %v1943
        %2009 = vmatprep.subr.mxu0 0.0
        %2010 = vmatpush2.msra.mxu0 %v1942
        %2011 = vmatprep.subr.mxu0 0.0
        %2012 = vmatpush2.msra.mxu0 %v1941
        %2013 = vmatprep.subr.mxu0 0.0
        %2014 = vmatpush2.msra.mxu0 %v1940
        %2015 = vmatprep.subr.mxu0 0.0
        %2016 = vmatpush2.msra.mxu0 %v1939
        %2017 = vmatprep.subr.mxu0 0.0
        %2018 = vmatpush2.msra.mxu0 %v1938
        %2019 = vmatprep.subr.mxu0 0.0
        %2020 = vmatpush2.msra.mxu0 %v1937
        %2021 = vmatprep.subr.mxu0 0.0
        %2022 = vmatpush2.msra.mxu0 %v1936
        %2023 = vmatprep.mubr.f32.mxu0 %v1910
        %2024 = vmatmul.mubr.f32.gmra.mxu0 %v1457
        %v2025 = vpop.f32.mrf.mxu0
        %v2026 = vadd.f32 %v1957, %v2025
        %v2027 = vpop.f32.mrf.mxu0
        %2028 = vmatprep.mubr.f32.mxu0 %v1917
        %2029 = vmatmul.mubr.f32.gmra.mxu0 %v1458
        %v2030 = vpop.f32.mrf.mxu0
        %v2031 = vadd.f32 %v1957, %v2030
        %v2032 = vpop.f32.mrf.mxu0
        %2033 = vdwg.mxu0
        %v2034 = vld [vmem:[%s18] sm:$0x1]
        %v2035 = vld [vmem:[%s19] sm:$0x1]
        %2036 = vadd.xlane.f32.xlu0 %v2026
        %v2037 = vpop.xlane.xlu0 %2036
        %2038 = vadd.xlane.f32.xlu0 %v2031
        %v2039 = vpop.xlane.xlu0 %2038
        %v2040 = vrcp.pop 128.0
        %v2041 = vmul.f32 %v2037, %v2040
        %v2042 = vmul.f32 %v2039, %v2040
        %v2043 = vsub.f32 %v2026, %v2041
        %v2044 = vsub.f32 %v2031, %v2042
        %v2045 = vmul.f32 %v2043, %v2043
        %v2046 = vmul.f32 %v2044, %v2044
        %2047 = vadd.xlane.f32.xlu0 %v2045
        %v2048 = vpop.xlane.xlu0 %2047
        %2049 = vadd.xlane.f32.xlu0 %v2046
        %v2050 = vpop.xlane.xlu0 %2049
        %v2051 = vmul.f32 %v2048, %v2040
        %v2052 = vmul.f32 %v2050, %v2040
        %v2053 = vadd.f32 %v2051, 1e-05
        %v2054 = vadd.f32 %v2052, 1e-05
        %v2055 = vrsqrt.pop %v2053
        %v2056 = vrsqrt.pop %v2054
        %v2057 = vmul.f32 %v2043, %v2055
        %v2058 = vmul.f32 %v2044, %v2056
        %v2060 = vlaneseq
        %v2061 = vshrl.u32 %v2060, 7
        %v2062 = vsub.s32 0, %v2061
        %v2063 = vrot.slane %v2034, %v2062
        %v2065 = vmul.f32 %v2057, %v2063
        %v2066 = vmul.f32 %v2058, %v2063
        %v2068 = vlaneseq
        %v2069 = vshrl.u32 %v2068, 7
        %v2070 = vsub.s32 0, %v2069
        %v2071 = vrot.slane %v2035, %v2070
        %v2073 = vadd.f32 %v2065, %v2071
        %v2074 = vadd.f32 %v2066, %v2071
        %v2075 = vmax.f32 %v2073, 0.0
        %v2076 = vmax.f32 %v2074, 0.0
        %v2077 = vld [vmem:[%s20] sm:$0xff]
        %v2078 = vld [vmem:[%s20 + $0x8] sm:$0xff]
        %v2079 = vld [vmem:[%s20 + $0x10] sm:$0xff]
        %v2080 = vld [vmem:[%s20 + $0x18] sm:$0xff]
        %v2081 = vld [vmem:[%s20 + $0x20] sm:$0xff]
        %v2082 = vld [vmem:[%s20 + $0x28] sm:$0xff]
        %v2083 = vld [vmem:[%s20 + $0x30] sm:$0xff]
        %v2084 = vld [vmem:[%s20 + $0x38] sm:$0xff]
        %v2085 = vld [vmem:[%s20 + $0x40] sm:$0xff]
        %v2086 = vld [vmem:[%s20 + $0x48] sm:$0xff]
        %v2087 = vld [vmem:[%s20 + $0x50] sm:$0xff]
        %v2088 = vld [vmem:[%s20 + $0x58] sm:$0xff]
        %v2089 = vld [vmem:[%s20 + $0x60] sm:$0xff]
        %v2090 = vld [vmem:[%s20 + $0x68] sm:$0xff]
        %v2091 = vld [vmem:[%s20 + $0x70] sm:$0xff]
        %v2092 = vld [vmem:[%s20 + $0x78] sm:$0xff]
        %v2093 = vld [vmem:[%s21] sm:$0x1]
        %v2095 = vlaneseq
        %v2096 = vshrl.u32 %v2095, 7
        %v2097 = vsub.s32 0, %v2096
        %v2098 = vrot.slane %v2093, %v2097
        %2100 = vmatprep.subr.mxu0 0.0
        %2101 = vmatpush1.msra.mxu0 %v2092
        %2102 = vmatprep.subr.mxu0 0.0
        %2103 = vmatpush1.msra.mxu0 %v2091
        %2104 = vmatprep.subr.mxu0 0.0
        %2105 = vmatpush1.msra.mxu0 %v2090
        %2106 = vmatprep.subr.mxu0 0.0
        %2107 = vmatpush1.msra.mxu0 %v2089
        %2108 = vmatprep.subr.mxu0 0.0
        %2109 = vmatpush1.msra.mxu0 %v2088
        %2110 = vmatprep.subr.mxu0 0.0
        %2111 = vmatpush1.msra.mxu0 %v2087
        %2112 = vmatprep.subr.mxu0 0.0
        %2113 = vmatpush1.msra.mxu0 %v2086
        %2114 = vmatprep.subr.mxu0 0.0
        %2115 = vmatpush1.msra.mxu0 %v2085
        %2116 = vmatprep.subr.mxu0 0.0
        %2117 = vmatpush1.msra.mxu0 %v2084
        %2118 = vmatprep.subr.mxu0 0.0
        %2119 = vmatpush1.msra.mxu0 %v2083
        %2120 = vmatprep.subr.mxu0 0.0
        %2121 = vmatpush1.msra.mxu0 %v2082
        %2122 = vmatprep.subr.mxu0 0.0
        %2123 = vmatpush1.msra.mxu0 %v2081
        %2124 = vmatprep.subr.mxu0 0.0
        %2125 = vmatpush1.msra.mxu0 %v2080
        %2126 = vmatprep.subr.mxu0 0.0
        %2127 = vmatpush1.msra.mxu0 %v2079
        %2128 = vmatprep.subr.mxu0 0.0
        %2129 = vmatpush1.msra.mxu0 %v2078
        %2130 = vmatprep.subr.mxu0 0.0
        %2131 = vmatpush1.msra.mxu0 %v2077
        %2132 = vmatprep.subr.mxu0 0.0
        %2133 = vmatpush2.msra.mxu0 0.0
        %2134 = vmatprep.subr.mxu0 0.0
        %2135 = vmatpush2.msra.mxu0 0.0
        %2136 = vmatprep.subr.mxu0 0.0
        %2137 = vmatpush2.msra.mxu0 0.0
        %2138 = vmatprep.subr.mxu0 0.0
        %2139 = vmatpush2.msra.mxu0 0.0
        %2140 = vmatprep.subr.mxu0 0.0
        %2141 = vmatpush2.msra.mxu0 0.0
        %2142 = vmatprep.subr.mxu0 0.0
        %2143 = vmatpush2.msra.mxu0 0.0
        %2144 = vmatprep.subr.mxu0 0.0
        %2145 = vmatpush2.msra.mxu0 0.0
        %2146 = vmatprep.subr.mxu0 0.0
        %2147 = vmatpush2.msra.mxu0 0.0
        %2148 = vmatprep.subr.mxu0 0.0
        %2149 = vmatpush2.msra.mxu0 0.0
        %2150 = vmatprep.subr.mxu0 0.0
        %2151 = vmatpush2.msra.mxu0 0.0
        %2152 = vmatprep.subr.mxu0 0.0
        %2153 = vmatpush2.msra.mxu0 0.0
        %2154 = vmatprep.subr.mxu0 0.0
        %2155 = vmatpush2.msra.mxu0 0.0
        %2156 = vmatprep.subr.mxu0 0.0
        %2157 = vmatpush2.msra.mxu0 0.0
        %2158 = vmatprep.subr.mxu0 0.0
        %2159 = vmatpush2.msra.mxu0 0.0
        %2160 = vmatprep.subr.mxu0 0.0
        %2161 = vmatpush2.msra.mxu0 0.0
        %2162 = vmatprep.subr.mxu0 0.0
        %2163 = vmatpush2.msra.mxu0 0.0
        %2164 = vmatprep.mubr.f32.mxu0 0.0
        %2165 = vmatmul.mubr.f32.gmra.mxu0 %v2075
        %v2166 = vpop.f32.mrf.mxu0
        %v2167 = vadd.f32 %v2098, %v2166
        %v2168 = vpop.f32.mrf.mxu0
        %2169 = vmatprep.mubr.f32.mxu0 0.0
        %2170 = vmatmul.mubr.f32.gmra.mxu0 %v2076
        %v2171 = vpop.f32.mrf.mxu0
        %v2172 = vadd.f32 %v2098, %v2171
        %v2173 = vpop.f32.mrf.mxu0
        %2174 = vdwg.mxu0
        %v2175 = vmax.f32 %v2167, 0.0
        %v2176 = vmax.f32 %v2172, 0.0
        %v2177 = vmul.f32 %v1567, %v2175
        %v2178 = vmul.f32 %v1571, %v2176
        %v2179 = vmul.f32 %v1578, %v2175
        %v2180 = vmul.f32 %v1582, %v2176
        %v2181 = vmul.f32 %v1589, %v2175
        %v2182 = vmul.f32 %v1593, %v2176
        %v2183 = vmul.f32 %v1600, %v2175
        %v2184 = vmul.f32 %v1604, %v2176
        %v2185 = vmul.f32 %v1611, %v2175
        %v2186 = vmul.f32 %v1615, %v2176
        %v2187 = vmul.f32 %v1622, %v2175
        %v2188 = vmul.f32 %v1626, %v2176
        %v2189 = vmul.f32 %v1633, %v2175
        %v2190 = vmul.f32 %v1637, %v2176
        %v2191 = vmul.f32 %v1644, %v2175
        %v2192 = vmul.f32 %v1648, %v2176
        %v2193 = vmul.f32 %v1655, %v2175
        %v2194 = vmul.f32 %v1659, %v2176
        %v2195 = vmul.f32 %v1666, %v2175
        %v2196 = vmul.f32 %v1670, %v2176
        %v2197 = vmul.f32 %v1677, %v2175
        %v2198 = vmul.f32 %v1681, %v2176
        %v2199 = vmul.f32 %v1688, %v2175
        %v2200 = vmul.f32 %v1692, %v2176
        %v2201 = vmul.f32 %v1699, %v2175
        %v2202 = vmul.f32 %v1703, %v2176
        %v2203 = vmul.f32 %v1710, %v2175
        %v2204 = vmul.f32 %v1714, %v2176
        %v2205 = vmul.f32 %v1721, %v2175
        %v2206 = vmul.f32 %v1725, %v2176
        %v2207 = vmul.f32 %v1732, %v2175
        %v2208 = vmul.f32 %v1736, %v2176
        %v2209 = vmax.f32 %v2177, %v2178
        %v2210 = vrot.slane %v2209, 4
        %v2211 = vmax.f32 %v2209, %v2210
        %v2212 = vrot.slane %v2211, 2
        %v2213 = vmax.f32 %v2211, %v2212
        %v2214 = vrot.slane %v2213, 1
        %v2215 = vmax.f32 %v2213, %v2214
        %v2216 = vmax.f32 %v2179, %v2180
        %v2217 = vrot.slane %v2216, 4
        %v2218 = vmax.f32 %v2216, %v2217
        %v2219 = vrot.slane %v2218, 2
        %v2220 = vmax.f32 %v2218, %v2219
        %v2221 = vrot.slane %v2220, 1
        %v2222 = vmax.f32 %v2220, %v2221
        %v2223 = vmax.f32 %v2181, %v2182
        %v2224 = vrot.slane %v2223, 4
        %v2225 = vmax.f32 %v2223, %v2224
        %v2226 = vrot.slane %v2225, 2
        %v2227 = vmax.f32 %v2225, %v2226
        %v2228 = vrot.slane %v2227, 1
        %v2229 = vmax.f32 %v2227, %v2228
        %v2230 = vmax.f32 %v2183, %v2184
        %v2231 = vrot.slane %v2230, 4
        %v2232 = vmax.f32 %v2230, %v2231
        %v2233 = vrot.slane %v2232, 2
        %v2234 = vmax.f32 %v2232, %v2233
        %v2235 = vrot.slane %v2234, 1
        %v2236 = vmax.f32 %v2234, %v2235
        %v2237 = vmax.f32 %v2185, %v2186
        %v2238 = vrot.slane %v2237, 4
        %v2239 = vmax.f32 %v2237, %v2238
        %v2240 = vrot.slane %v2239, 2
        %v2241 = vmax.f32 %v2239, %v2240
        %v2242 = vrot.slane %v2241, 1
        %v2243 = vmax.f32 %v2241, %v2242
        %v2244 = vmax.f32 %v2187, %v2188
        %v2245 = vrot.slane %v2244, 4
        %v2246 = vmax.f32 %v2244, %v2245
        %v2247 = vrot.slane %v2246, 2
        %v2248 = vmax.f32 %v2246, %v2247
        %v2249 = vrot.slane %v2248, 1
        %v2250 = vmax.f32 %v2248, %v2249
        %v2251 = vmax.f32 %v2189, %v2190
        %v2252 = vrot.slane %v2251, 4
        %v2253 = vmax.f32 %v2251, %v2252
        %v2254 = vrot.slane %v2253, 2
        %v2255 = vmax.f32 %v2253, %v2254
        %v2256 = vrot.slane %v2255, 1
        %v2257 = vmax.f32 %v2255, %v2256
        %v2258 = vmax.f32 %v2191, %v2192
        %v2259 = vrot.slane %v2258, 4
        %v2260 = vmax.f32 %v2258, %v2259
        %v2261 = vrot.slane %v2260, 2
        %v2262 = vmax.f32 %v2260, %v2261
        %v2263 = vrot.slane %v2262, 1
        %v2264 = vmax.f32 %v2262, %v2263
        %v2265 = vmax.f32 %v2193, %v2194
        %v2266 = vrot.slane %v2265, 4
        %v2267 = vmax.f32 %v2265, %v2266
        %v2268 = vrot.slane %v2267, 2
        %v2269 = vmax.f32 %v2267, %v2268
        %v2270 = vrot.slane %v2269, 1
        %v2271 = vmax.f32 %v2269, %v2270
        %v2272 = vmax.f32 %v2195, %v2196
        %v2273 = vrot.slane %v2272, 4
        %v2274 = vmax.f32 %v2272, %v2273
        %v2275 = vrot.slane %v2274, 2
        %v2276 = vmax.f32 %v2274, %v2275
        %v2277 = vrot.slane %v2276, 1
        %v2278 = vmax.f32 %v2276, %v2277
        %v2279 = vmax.f32 %v2197, %v2198
        %v2280 = vrot.slane %v2279, 4
        %v2281 = vmax.f32 %v2279, %v2280
        %v2282 = vrot.slane %v2281, 2
        %v2283 = vmax.f32 %v2281, %v2282
        %v2284 = vrot.slane %v2283, 1
        %v2285 = vmax.f32 %v2283, %v2284
        %v2286 = vmax.f32 %v2199, %v2200
        %v2287 = vrot.slane %v2286, 4
        %v2288 = vmax.f32 %v2286, %v2287
        %v2289 = vrot.slane %v2288, 2
        %v2290 = vmax.f32 %v2288, %v2289
        %v2291 = vrot.slane %v2290, 1
        %v2292 = vmax.f32 %v2290, %v2291
        %v2293 = vmax.f32 %v2201, %v2202
        %v2294 = vrot.slane %v2293, 4
        %v2295 = vmax.f32 %v2293, %v2294
        %v2296 = vrot.slane %v2295, 2
        %v2297 = vmax.f32 %v2295, %v2296
        %v2298 = vrot.slane %v2297, 1
        %v2299 = vmax.f32 %v2297, %v2298
        %v2300 = vmax.f32 %v2203, %v2204
        %v2301 = vrot.slane %v2300, 4
        %v2302 = vmax.f32 %v2300, %v2301
        %v2303 = vrot.slane %v2302, 2
        %v2304 = vmax.f32 %v2302, %v2303
        %v2305 = vrot.slane %v2304, 1
        %v2306 = vmax.f32 %v2304, %v2305
        %v2307 = vmax.f32 %v2205, %v2206
        %v2308 = vrot.slane %v2307, 4
        %v2309 = vmax.f32 %v2307, %v2308
        %v2310 = vrot.slane %v2309, 2
        %v2311 = vmax.f32 %v2309, %v2310
        %v2312 = vrot.slane %v2311, 1
        %v2313 = vmax.f32 %v2311, %v2312
        %v2314 = vmax.f32 %v2207, %v2208
        %v2315 = vrot.slane %v2314, 4
        %v2316 = vmax.f32 %v2314, %v2315
        %v2317 = vrot.slane %v2316, 2
        %v2318 = vmax.f32 %v2316, %v2317
        %v2319 = vrot.slane %v2318, 1
        %v2320 = vmax.f32 %v2318, %v2319
        %v2337 = vsel %vm1897, %v2222, %v2215
        %v2338 = vsel %vm1899, %v2229, %v2337
        %v2339 = vsel %vm1901, %v2236, %v2338
        %v2340 = vsel %vm1903, %v2243, %v2339
        %v2341 = vsel %vm1905, %v2250, %v2340
        %v2342 = vsel %vm1907, %v2257, %v2341
        %v2343 = vsel %vm1909, %v2264, %v2342
        %v2344 = vsel %vm1897, %v2278, %v2271
        %v2345 = vsel %vm1899, %v2285, %v2344
        %v2346 = vsel %vm1901, %v2292, %v2345
        %v2347 = vsel %vm1903, %v2299, %v2346
        %v2348 = vsel %vm1905, %v2306, %v2347
        %v2349 = vsel %vm1907, %v2313, %v2348
        %v2350 = vsel %vm1909, %v2320, %v2349
        %v2353 = vld [vmem:[%s22] sm:$0xff]
        %v2354 = vld [vmem:[%s22 + $0x8] sm:$0xff]
        %v2355 = vld [vmem:[%s22 + $0x10] sm:$0xff]
        %v2356 = vld [vmem:[%s22 + $0x18] sm:$0xff]
        %v2357 = vld [vmem:[%s22 + $0x20] sm:$0xff]
        %v2358 = vld [vmem:[%s22 + $0x28] sm:$0xff]
        %v2359 = vld [vmem:[%s22 + $0x30] sm:$0xff]
        %v2360 = vld [vmem:[%s22 + $0x38] sm:$0xff]
        %v2361 = vld [vmem:[%s22 + $0x40] sm:$0xff]
        %v2362 = vld [vmem:[%s22 + $0x48] sm:$0xff]
        %v2363 = vld [vmem:[%s22 + $0x50] sm:$0xff]
        %v2364 = vld [vmem:[%s22 + $0x58] sm:$0xff]
        %v2365 = vld [vmem:[%s22 + $0x60] sm:$0xff]
        %v2366 = vld [vmem:[%s22 + $0x68] sm:$0xff]
        %v2367 = vld [vmem:[%s22 + $0x70] sm:$0xff]
        %v2368 = vld [vmem:[%s22 + $0x78] sm:$0xff]
        %v2369 = vld [vmem:[%s22 + $0x80] sm:$0xff]
        %v2370 = vld [vmem:[%s22 + $0x88] sm:$0xff]
        %v2371 = vld [vmem:[%s22 + $0x90] sm:$0xff]
        %v2372 = vld [vmem:[%s22 + $0x98] sm:$0xff]
        %v2373 = vld [vmem:[%s22 + $0xa0] sm:$0xff]
        %v2374 = vld [vmem:[%s22 + $0xa8] sm:$0xff]
        %v2375 = vld [vmem:[%s22 + $0xb0] sm:$0xff]
        %v2376 = vld [vmem:[%s22 + $0xb8] sm:$0xff]
        %v2377 = vld [vmem:[%s22 + $0xc0] sm:$0xff]
        %v2378 = vld [vmem:[%s22 + $0xc8] sm:$0xff]
        %v2379 = vld [vmem:[%s22 + $0xd0] sm:$0xff]
        %v2380 = vld [vmem:[%s22 + $0xd8] sm:$0xff]
        %v2381 = vld [vmem:[%s22 + $0xe0] sm:$0xff]
        %v2382 = vld [vmem:[%s22 + $0xe8] sm:$0xff]
        %v2383 = vld [vmem:[%s22 + $0xf0] sm:$0xff]
        %v2384 = vld [vmem:[%s22 + $0xf8] sm:$0xff]
        %v2385 = vld [vmem:[%s23] sm:$0x1]
        %v2387 = vlaneseq
        %v2388 = vshrl.u32 %v2387, 7
        %v2389 = vsub.s32 0, %v2388
        %v2390 = vrot.slane %v2385, %v2389
        %2392 = vmatprep.subr.mxu0 0.0
        %2393 = vmatpush1.msra.mxu0 %v2368
        %2394 = vmatprep.subr.mxu0 0.0
        %2395 = vmatpush1.msra.mxu0 %v2367
        %2396 = vmatprep.subr.mxu0 0.0
        %2397 = vmatpush1.msra.mxu0 %v2366
        %2398 = vmatprep.subr.mxu0 0.0
        %2399 = vmatpush1.msra.mxu0 %v2365
        %2400 = vmatprep.subr.mxu0 0.0
        %2401 = vmatpush1.msra.mxu0 %v2364
        %2402 = vmatprep.subr.mxu0 0.0
        %2403 = vmatpush1.msra.mxu0 %v2363
        %2404 = vmatprep.subr.mxu0 0.0
        %2405 = vmatpush1.msra.mxu0 %v2362
        %2406 = vmatprep.subr.mxu0 0.0
        %2407 = vmatpush1.msra.mxu0 %v2361
        %2408 = vmatprep.subr.mxu0 0.0
        %2409 = vmatpush1.msra.mxu0 %v2360
        %2410 = vmatprep.subr.mxu0 0.0
        %2411 = vmatpush1.msra.mxu0 %v2359
        %2412 = vmatprep.subr.mxu0 0.0
        %2413 = vmatpush1.msra.mxu0 %v2358
        %2414 = vmatprep.subr.mxu0 0.0
        %2415 = vmatpush1.msra.mxu0 %v2357
        %2416 = vmatprep.subr.mxu0 0.0
        %2417 = vmatpush1.msra.mxu0 %v2356
        %2418 = vmatprep.subr.mxu0 0.0
        %2419 = vmatpush1.msra.mxu0 %v2355
        %2420 = vmatprep.subr.mxu0 0.0
        %2421 = vmatpush1.msra.mxu0 %v2354
        %2422 = vmatprep.subr.mxu0 0.0
        %2423 = vmatpush1.msra.mxu0 %v2353
        %2424 = vmatprep.subr.mxu0 0.0
        %2425 = vmatpush2.msra.mxu0 %v2384
        %2426 = vmatprep.subr.mxu0 0.0
        %2427 = vmatpush2.msra.mxu0 %v2383
        %2428 = vmatprep.subr.mxu0 0.0
        %2429 = vmatpush2.msra.mxu0 %v2382
        %2430 = vmatprep.subr.mxu0 0.0
        %2431 = vmatpush2.msra.mxu0 %v2381
        %2432 = vmatprep.subr.mxu0 0.0
        %2433 = vmatpush2.msra.mxu0 %v2380
        %2434 = vmatprep.subr.mxu0 0.0
        %2435 = vmatpush2.msra.mxu0 %v2379
        %2436 = vmatprep.subr.mxu0 0.0
        %2437 = vmatpush2.msra.mxu0 %v2378
        %2438 = vmatprep.subr.mxu0 0.0
        %2439 = vmatpush2.msra.mxu0 %v2377
        %2440 = vmatprep.subr.mxu0 0.0
        %2441 = vmatpush2.msra.mxu0 %v2376
        %2442 = vmatprep.subr.mxu0 0.0
        %2443 = vmatpush2.msra.mxu0 %v2375
        %2444 = vmatprep.subr.mxu0 0.0
        %2445 = vmatpush2.msra.mxu0 %v2374
        %2446 = vmatprep.subr.mxu0 0.0
        %2447 = vmatpush2.msra.mxu0 %v2373
        %2448 = vmatprep.subr.mxu0 0.0
        %2449 = vmatpush2.msra.mxu0 %v2372
        %2450 = vmatprep.subr.mxu0 0.0
        %2451 = vmatpush2.msra.mxu0 %v2371
        %2452 = vmatprep.subr.mxu0 0.0
        %2453 = vmatpush2.msra.mxu0 %v2370
        %2454 = vmatprep.subr.mxu0 0.0
        %2455 = vmatpush2.msra.mxu0 %v2369
        %2456 = vmatprep.mubr.f32.mxu0 %v2343
        %2457 = vmatmul.mubr.f32.gmra.mxu0 %v2075
        %v2458 = vpop.f32.mrf.mxu0
        %v2459 = vadd.f32 %v2390, %v2458
        %v2460 = vpop.f32.mrf.mxu0
        %2461 = vmatprep.mubr.f32.mxu0 %v2350
        %2462 = vmatmul.mubr.f32.gmra.mxu0 %v2076
        %v2463 = vpop.f32.mrf.mxu0
        %v2464 = vadd.f32 %v2390, %v2463
        %v2465 = vpop.f32.mrf.mxu0
        %2466 = vdwg.mxu0
        %v2467 = vld [vmem:[%s24] sm:$0x1]
        %v2468 = vld [vmem:[%s25] sm:$0x1]
        %2469 = vadd.xlane.f32.xlu0 %v2459
        %v2470 = vpop.xlane.xlu0 %2469
        %2471 = vadd.xlane.f32.xlu0 %v2464
        %v2472 = vpop.xlane.xlu0 %2471
        %v2473 = vmul.f32 %v2470, %v2040
        %v2474 = vmul.f32 %v2472, %v2040
        %v2475 = vsub.f32 %v2459, %v2473
        %v2476 = vsub.f32 %v2464, %v2474
        %v2477 = vmul.f32 %v2475, %v2475
        %v2478 = vmul.f32 %v2476, %v2476
        %2479 = vadd.xlane.f32.xlu0 %v2477
        %v2480 = vpop.xlane.xlu0 %2479
        %2481 = vadd.xlane.f32.xlu0 %v2478
        %v2482 = vpop.xlane.xlu0 %2481
        %v2483 = vmul.f32 %v2480, %v2040
        %v2484 = vmul.f32 %v2482, %v2040
        %v2485 = vadd.f32 %v2483, 1e-05
        %v2486 = vadd.f32 %v2484, 1e-05
        %v2487 = vrsqrt.pop %v2485
        %v2488 = vrsqrt.pop %v2486
        %v2489 = vmul.f32 %v2475, %v2487
        %v2490 = vmul.f32 %v2476, %v2488
        %v2492 = vlaneseq
        %v2493 = vshrl.u32 %v2492, 7
        %v2494 = vsub.s32 0, %v2493
        %v2495 = vrot.slane %v2467, %v2494
        %v2497 = vmul.f32 %v2489, %v2495
        %v2498 = vmul.f32 %v2490, %v2495
        %v2500 = vlaneseq
        %v2501 = vshrl.u32 %v2500, 7
        %v2502 = vsub.s32 0, %v2501
        %v2503 = vrot.slane %v2468, %v2502
        %v2505 = vadd.f32 %v2497, %v2503
        %v2506 = vadd.f32 %v2498, %v2503
        %v2507 = vmax.f32 %v2505, 0.0
        %v2508 = vmax.f32 %v2506, 0.0
        %v2509 = vld [vmem:[%s12] sm:$0xff]
        %v2510 = vld [vmem:[%s12 + $0x8] sm:$0xff]
        %v2511 = vld [vmem:[%s12 + $0x10] sm:$0xff]
        %v2512 = vld [vmem:[%s12 + $0x18] sm:$0xff]
        %v2513 = vld [vmem:[%s12 + $0x20] sm:$0xff]
        %v2514 = vld [vmem:[%s12 + $0x28] sm:$0xff]
        %v2515 = vld [vmem:[%s12 + $0x30] sm:$0xff]
        %v2516 = vld [vmem:[%s12 + $0x38] sm:$0xff]
        %v2517 = vld [vmem:[%s12 + $0x40] sm:$0xff]
        %v2518 = vld [vmem:[%s12 + $0x48] sm:$0xff]
        %v2519 = vld [vmem:[%s12 + $0x50] sm:$0xff]
        %v2520 = vld [vmem:[%s12 + $0x58] sm:$0xff]
        %v2521 = vld [vmem:[%s12 + $0x60] sm:$0xff]
        %v2522 = vld [vmem:[%s12 + $0x68] sm:$0xff]
        %v2523 = vld [vmem:[%s12 + $0x70] sm:$0xff]
        %v2524 = vld [vmem:[%s12 + $0x78] sm:$0xff]
        %v2525 = vld [vmem:[%s13] sm:$0x1]
        %v2527 = vlaneseq
        %v2528 = vshrl.u32 %v2527, 7
        %v2529 = vsub.s32 0, %v2528
        %v2530 = vrot.slane %v2525, %v2529
        %2532 = vmatprep.subr.mxu0 0.0
        %2533 = vmatpush1.msra.mxu0 %v2524
        %2534 = vmatprep.subr.mxu0 0.0
        %2535 = vmatpush1.msra.mxu0 %v2523
        %2536 = vmatprep.subr.mxu0 0.0
        %2537 = vmatpush1.msra.mxu0 %v2522
        %2538 = vmatprep.subr.mxu0 0.0
        %2539 = vmatpush1.msra.mxu0 %v2521
        %2540 = vmatprep.subr.mxu0 0.0
        %2541 = vmatpush1.msra.mxu0 %v2520
        %2542 = vmatprep.subr.mxu0 0.0
        %2543 = vmatpush1.msra.mxu0 %v2519
        %2544 = vmatprep.subr.mxu0 0.0
        %2545 = vmatpush1.msra.mxu0 %v2518
        %2546 = vmatprep.subr.mxu0 0.0
        %2547 = vmatpush1.msra.mxu0 %v2517
        %2548 = vmatprep.subr.mxu0 0.0
        %2549 = vmatpush1.msra.mxu0 %v2516
        %2550 = vmatprep.subr.mxu0 0.0
        %2551 = vmatpush1.msra.mxu0 %v2515
        %2552 = vmatprep.subr.mxu0 0.0
        %2553 = vmatpush1.msra.mxu0 %v2514
        %2554 = vmatprep.subr.mxu0 0.0
        %2555 = vmatpush1.msra.mxu0 %v2513
        %2556 = vmatprep.subr.mxu0 0.0
        %2557 = vmatpush1.msra.mxu0 %v2512
        %2558 = vmatprep.subr.mxu0 0.0
        %2559 = vmatpush1.msra.mxu0 %v2511
        %2560 = vmatprep.subr.mxu0 0.0
        %2561 = vmatpush1.msra.mxu0 %v2510
        %2562 = vmatprep.subr.mxu0 0.0
        %2563 = vmatpush1.msra.mxu0 %v2509
        %2564 = vmatprep.subr.mxu0 0.0
        %2565 = vmatpush2.msra.mxu0 0.0
        %2566 = vmatprep.subr.mxu0 0.0
        %2567 = vmatpush2.msra.mxu0 0.0
        %2568 = vmatprep.subr.mxu0 0.0
        %2569 = vmatpush2.msra.mxu0 0.0
        %2570 = vmatprep.subr.mxu0 0.0
        %2571 = vmatpush2.msra.mxu0 0.0
        %2572 = vmatprep.subr.mxu0 0.0
        %2573 = vmatpush2.msra.mxu0 0.0
        %2574 = vmatprep.subr.mxu0 0.0
        %2575 = vmatpush2.msra.mxu0 0.0
        %2576 = vmatprep.subr.mxu0 0.0
        %2577 = vmatpush2.msra.mxu0 0.0
        %2578 = vmatprep.subr.mxu0 0.0
        %2579 = vmatpush2.msra.mxu0 0.0
        %2580 = vmatprep.subr.mxu0 0.0
        %2581 = vmatpush2.msra.mxu0 0.0
        %2582 = vmatprep.subr.mxu0 0.0
        %2583 = vmatpush2.msra.mxu0 0.0
        %2584 = vmatprep.subr.mxu0 0.0
        %2585 = vmatpush2.msra.mxu0 0.0
        %2586 = vmatprep.subr.mxu0 0.0
        %2587 = vmatpush2.msra.mxu0 0.0
        %2588 = vmatprep.subr.mxu0 0.0
        %2589 = vmatpush2.msra.mxu0 0.0
        %2590 = vmatprep.subr.mxu0 0.0
        %2591 = vmatpush2.msra.mxu0 0.0
        %2592 = vmatprep.subr.mxu0 0.0
        %2593 = vmatpush2.msra.mxu0 0.0
        %2594 = vmatprep.subr.mxu0 0.0
        %2595 = vmatpush2.msra.mxu0 0.0
        %2596 = vmatprep.mubr.f32.mxu0 0.0
        %2597 = vmatmul.mubr.f32.gmra.mxu0 %v2507
        %v2598 = vpop.f32.mrf.mxu0
        %v2599 = vadd.f32 %v2530, %v2598
        %v2600 = vpop.f32.mrf.mxu0
        %2601 = vmatprep.mubr.f32.mxu0 0.0
        %2602 = vmatmul.mubr.f32.gmra.mxu0 %v2508
        %v2603 = vpop.f32.mrf.mxu0
        %v2604 = vadd.f32 %v2530, %v2603
        %v2605 = vpop.f32.mrf.mxu0
        %2606 = vdwg.mxu0
        %vm2607 = vcmask 15360
        %2608 = vst.msk [vmem:[%s851] sm:$0xff] %vm2607, %v2599
        %2609 = vst.msk [vmem:[%s851 + $0x8] sm:$0xff] %vm2607, %v2604
        %p2610 = scmp.lt.s32.totalorder %s44, 1
        %s2611 = scalar_select %p2610, %s44, 1
        %s2612 = smul.addr %s2611, 2
        %s2613 = smul.addr %s2612, 8
        %s2614 = scalar_lea.vmem %s26, %s2613
        %s2615 = sand.u32 %s634, 1
        %s2616 = scalar_lea.sflag [#allocation4], %s2615
        %s2617 = sand.u32 %s634, 1
        %s2618 = smul.addr %s2617, 16
        %s2619 = scalar_lea.vmem [#allocation3], %s2618
        // Predicated region
        $region125: #{premodel_forward.1} parent=123 // pred_check
          %p2620 = pneg %p618
        $region126: #{premodel_forward.1} parent=123 // pred_check_branch
          %2622 = sbr.rel (%p2620) target = $region128
        $region127: #{premodel_forward.1} parent=123 // pred_region
          _
        $region128: #{premodel_forward.1} parent=123 // pred_fallthru
          _
        // Predicated region
        $region129: #{premodel_forward.1} parent=123 // pred_check
          %p2623 = pneg %p644
        $region130: #{premodel_forward.1} parent=123 // pred_check_branch
          %2625 = sbr.rel (%p2623) target = $region132
        $region131: #{premodel_forward.1} parent=123 // pred_region
          %s2627 = ssub.s32 256, 256
          %2628 = vsyncadd %s2616, %s2627
          %s2629 = smul.addr %s44, 2
          %s2630 = smul.addr %s2629, 128
          %s2631 = scalar_lea.hbm %s27, %s2630
          %s2632 = sshll.u32 %s2619, 4
          %s2633 = int_to_ptr.vmem [resolvable:$true] %s2632
          %2638 = dma.vmem_to_hbm [thread:$0]  %s2633, 256, %s2631, %s2616, 128, 128, 8
        $region132: #{premodel_forward.1} parent=123 // pred_fallthru
          _
      $region124: #{premodel_forward.1} parent=5 // pred_fallthru
        _
      %p2639 = scmp.le.s32.totalorder 2, %s39
      // Predicated region
      $region133: #{premodel_forward.1} parent=5 // pred_check
        %p2640 = pneg %p2639
      $region134: #{premodel_forward.1} parent=5 // pred_check_branch
        %2642 = sbr.rel (%p2640) target = $region136
      $region135: #{premodel_forward.1} parent=5 // pred_region
        %s2643 = ssub.s32 %s39, 2
        // Predicated region
        $region137: #{premodel_forward.1} parent=135 // pred_check
          %p2644 = pneg %p624
        $region138: #{premodel_forward.1} parent=135 // pred_check_branch
          %2646 = sbr.rel (%p2644) target = $region140
        $region139: #{premodel_forward.1} parent=135 // pred_region
          %p2647 = scmp.lt.s32.totalorder %s45, 1
          %s2648 = scalar_select %p2647, %s45, 1
          %s2649 = smul.addr %s2648, 2
          %s2650 = smul.addr %s2649, 8
          %s2651 = scalar_lea.vmem %s26, %s2650
        $region140: #{premodel_forward.1} parent=135 // pred_fallthru
          _
        // Predicated region
        $region141: #{premodel_forward.1} parent=135 // pred_check
          %p2652 = pneg %p650
        $region142: #{premodel_forward.1} parent=135 // pred_check_branch
          %2654 = sbr.rel (%p2652) target = $region144
        $region143: #{premodel_forward.1} parent=135 // pred_region
          %s2655 = sand.u32 %s635, 1
          %s2656 = scalar_lea.sflag [#allocation4], %s2655
          %s2657 = sand.u32 %s635, 1
          %s2658 = smul.addr %s2657, 16
          %s2659 = scalar_lea.vmem [#allocation3], %s2658
          %2660 = dma.done %s2656, 256
        $region144: #{premodel_forward.1} parent=135 // pred_fallthru
          _
      $region136: #{premodel_forward.1} parent=5 // pred_fallthru
        _
    $region6: #{premodel_forward.1} parent=1 // loop_footer
      %s43 = sadd.s32 1, %s39
    $region7: #{premodel_forward.1} parent=1 // loop_footer_branch
      %38 = sbr.rel target = $region3
    $region8: #{premodel_forward.1} parent=1 // loop_exit
      _
    %2661 = vsyncpa [#allocation4], 1
    %s2662 = scalar_lea.sflag [#allocation4], 1
    %2663 = vsyncpa %s2662, 1

</llo_original>
